<compile_context>
chip_gen: v7x
topology: tpu7x:2x2x1
jax: 0.10.0
libtpu: 0.0.40
codegen_flags: <defaults>
</compile_context>

<pallas_src>
import math
import numpy as np
import jax
import jax.numpy as jnp
from jax.experimental import pallas as pl
from jax.experimental.pallas import tpu as pltpu

# ----------------------------- configuration -------------------------------
B = 2          # batch
S = 8          # sequence length
D = 32         # d_model
H = 4          # number of heads
DK = D // H    # head dim
F = 64         # d_ff
N_LAYERS = 2   # number of encoder blocks
EPS = 1e-6     # LayerNormalization eps
N = B * S      # merged row axis (batch folded into rows)


# ------------------------------ Pallas kernel ------------------------------
def _layernorm(x2d, alpha, bias):
    # Matches the reference LayerNormalization: unbiased std, scalar params.
    mean = jnp.mean(x2d, axis=-1, keepdims=True)
    var = jnp.sum((x2d - mean) ** 2, axis=-1, keepdims=True) / (x2d.shape[-1] - 1)
    inv = pl.reciprocal(jnp.sqrt(var) + EPS, approx=True)
    return alpha * (x2d - mean) * inv + bias


def encoder_kernel(x_ref, amask_ref,
                   wqkv_ref, bqkv_ref, wo_ref, bo_ref,
                   w1_ref, b1_ref, w2_ref, b2_ref,
                   norm_ref, o_ref):
    # Single invocation: whole batch lives in VMEM as a (B*S, D) slab.
    x = x_ref[...]            # (N, D)
    amask = amask_ref[...]    # (N, N) additive mask: 0 keep / -1e9 masked or cross-batch
    scale = 1.0 / math.sqrt(DK)

    for l in range(N_LAYERS):
        # ---- self-attention sublayer (pre-norm residual) ----
        xn = _layernorm(x, norm_ref[4 * l + 0], norm_ref[4 * l + 1])
        # Fused Q/K/V projection: one (N, D) x (D, 3D) matmul per layer.
        qkv = jnp.dot(xn, wqkv_ref[l], preferred_element_type=jnp.float32) + bqkv_ref[l]

        heads = []
        for hh in range(H):                      # static unroll over heads
            q = qkv[:, hh * DK:(hh + 1) * DK]
            k = qkv[:, D + hh * DK:D + (hh + 1) * DK]
            v = qkv[:, 2 * D + hh * DK:2 * D + (hh + 1) * DK]
            s = jnp.dot(q, k.T, preferred_element_type=jnp.float32) * scale + amask
            s = s - jnp.max(s, axis=-1, keepdims=True)
            p = jnp.exp(s)
            p = p * pl.reciprocal(jnp.sum(p, axis=-1, keepdims=True), approx=True)
            heads.append(jnp.dot(p, v, preferred_element_type=jnp.float32))
        attn = jnp.concatenate(heads, axis=-1)                   # (N, D)
        x = x + jnp.dot(attn, wo_ref[l], preferred_element_type=jnp.float32) + bo_ref[l]

        # ---- feed-forward sublayer (pre-norm residual) ----
        xn = _layernorm(x, norm_ref[4 * l + 2], norm_ref[4 * l + 3])
        h1 = jnp.maximum(
            jnp.dot(xn, w1_ref[l], preferred_element_type=jnp.float32) + b1_ref[l], 0.0)
        x = x + jnp.dot(h1, w2_ref[l], preferred_element_type=jnp.float32) + b2_ref[l]

    # final LayerNormalization of the Encoder
    o_ref[...] = _layernorm(x, norm_ref[4 * N_LAYERS + 0], norm_ref[4 * N_LAYERS + 1])


# ------------------------------ host wrapper -------------------------------
def encoder_forward(x, mask, params):
    (wq, bq, wk, bk, wv, bv, wo, bo, w1, b1, w2, b2, norms) = params

    # Fuse Q/K/V weights host-side: (L, D, 3D) and (L, 1, 3D).
    wqkv = jnp.concatenate([wq, wk, wv], axis=-1)
    bqkv = jnp.concatenate([bq, bk, bv], axis=-1)
    # LayerNorm scalar params flattened to 1-D for SMEM (avoids 2-D SMEM padding).
    norm_flat = norms.reshape(-1)                      # [a0, b0, a1, b1, ...]

    # Precompute the additive attention mask over the merged (B*S) row axis:
    # allow (query i, key j) only if they belong to the same batch element and
    # key j is kept by the src mask; otherwise add -1e9 (== masked_fill_).
    keep = mask[:, 0, :].reshape(N)                    # (N,) key keep flags
    batch_of = jnp.repeat(jnp.arange(B), S)            # (N,) row -> batch id
    allowed = (batch_of[:, None] == batch_of[None, :]) & (keep[None, :] > 0.0)
    amask = jnp.where(allowed, 0.0, -1e9).astype(jnp.float32)   # (N, N)

    x2 = x.reshape(N, D)

    vmem = pl.BlockSpec(memory_space=pltpu.MemorySpace.VMEM)
    smem = pl.BlockSpec(memory_space=pltpu.MemorySpace.SMEM)

    out = pl.pallas_call(
        encoder_kernel,
        out_shape=jax.ShapeDtypeStruct((N, D), jnp.float32),
        in_specs=[vmem, vmem,                 # x, additive mask
                  vmem, vmem,                 # wqkv, bqkv
                  vmem, vmem,                 # wo, bo
                  vmem, vmem,                 # w1, b1
                  vmem, vmem,                 # w2, b2
                  smem],                      # flattened LayerNorm params
        out_specs=vmem,
    )(x2, amask, wqkv, bqkv, wo, bo, w1, b1, w2, b2, norm_flat)

    return out.reshape(B, S, D)


# --------------------------- deterministic params --------------------------
def init_params(key):
    def linear(k, fan_in, fan_out):
        bound = 1.0 / math.sqrt(fan_in)
        kw, kb = jax.random.split(k)
        w = jax.random.uniform(kw, (N_LAYERS, fan_in, fan_out), jnp.float32, -bound, bound)
        b = jax.random.uniform(kb, (N_LAYERS, 1, fan_out), jnp.float32, -bound, bound)
        return w, b

    ks = jax.random.split(key, 6)
    wq, bq = linear(ks[0], D, D)
    wk, bk = linear(ks[1], D, D)
    wv, bv = linear(ks[2], D, D)
    wo, bo = linear(ks[3], D, D)
    w1, b1 = linear(ks[4], D, F)
    w2, b2 = linear(ks[5], F, D)
    # LayerNormalization params: alpha = ones(1), bias = zeros(1) per module init.
    norms = jnp.concatenate(
        [jnp.ones((2 * N_LAYERS + 1, 1), jnp.float32),
         jnp.zeros((2 * N_LAYERS + 1, 1), jnp.float32)], axis=1)
    return (wq, bq, wk, bk, wv, bv, wo, bo, w1, b1, w2, b2, norms)


# ------------------------------ JAX reference -------------------------------
def reference(x, mask, params):
    (wq, bq, wk, bk, wv, bv, wo, bo, w1, b1, w2, b2, norms) = params

    def ln(t, a, c):
        mean = t.mean(-1, keepdims=True)
        std = jnp.sqrt(((t - mean) ** 2).sum(-1, keepdims=True) / (t.shape[-1] - 1))
        return a * (t - mean) / (std + EPS) + c

    out = x
    for l in range(N_LAYERS):
        xn = ln(out, norms[2 * l, 0], norms[2 * l, 1])
        q = xn @ wq[l] + bq[l]
        k = xn @ wk[l] + bk[l]
        v = xn @ wv[l] + bv[l]
        qh = q.reshape(B, S, H, DK).transpose(0, 2, 1, 3)
        kh = k.reshape(B, S, H, DK).transpose(0, 2, 1, 3)
        vh = v.reshape(B, S, H, DK).transpose(0, 2, 1, 3)
        sc = jnp.einsum("bhqd,bhkd->bhqk", qh, kh) / math.sqrt(DK)
        sc = jnp.where(mask[:, None, :, :] == 0.0, -1e9, sc)
        p = jax.nn.softmax(sc, axis=-1)
        a = jnp.einsum("bhqk,bhkd->bhqd", p, vh).transpose(0, 2, 1, 3).reshape(B, S, D)
        out = out + (a @ wo[l] + bo[l])
        xn = ln(out, norms[2 * l + 1, 0], norms[2 * l + 1, 1])
        ff = jnp.maximum(xn @ w1[l] + b1[l], 0.0) @ w2[l] + b2[l]
        out = out + ff
    return ln(out, norms[2 * N_LAYERS, 0], norms[2 * N_LAYERS, 1])


# ----------------------------------- main -----------------------------------
if __name__ == "__main__":
    key = jax.random.PRNGKey(0)
    kx, kp = jax.random.split(key)
    x = jax.random.normal(kx, (B, S, D), jnp.float32)
    # keep-mask: batch 0 attends to all 8 positions, batch 1 only to first 6
    lengths = jnp.array([8, 6], jnp.int32)
    mask = (jnp.arange(S)[None, None, :] < lengths[:, None, None]).astype(jnp.float32)

    params = init_params(kp)

    out = jax.block_until_ready(encoder_forward(x, mask, params))
    ref = jax.block_until_ready(reference(x, mask, params))

    np.testing.assert_allclose(np.asarray(out), np.asarray(ref), rtol=1e-2, atol=1e-2)
    print("KERNEL_OK")
</pallas_src>

<mosaic_0001>
module attributes {stable_mosaic.version = 11 : i64} {
  func.func @encoder_kernel(%arg0: memref<16x32xf32, #tpu.memory_space<vmem>>, %arg1: memref<16x16xf32, #tpu.memory_space<vmem>>, %arg2: memref<2x32x96xf32, #tpu.memory_space<vmem>>, %arg3: memref<2x1x96xf32, #tpu.memory_space<vmem>>, %arg4: memref<2x32x32xf32, #tpu.memory_space<vmem>>, %arg5: memref<2x1x32xf32, #tpu.memory_space<vmem>>, %arg6: memref<2x32x64xf32, #tpu.memory_space<vmem>>, %arg7: memref<2x1x64xf32, #tpu.memory_space<vmem>>, %arg8: memref<2x64x32xf32, #tpu.memory_space<vmem>>, %arg9: memref<2x1x32xf32, #tpu.memory_space<vmem>>, %arg10: memref<10xf32, #tpu.memory_space<smem>>, %arg11: memref<16x32xf32, #tpu.memory_space<vmem>>) attributes {dimension_semantics = [], scalar_prefetch = 0 : i64, scratch_operands = 0 : i64, tpu.core_type = #tpu.core_type<tc>} {
    %c0 = arith.constant 0 : index
    %c0_0 = arith.constant 0 : index
    %0 = vector.load %arg0[%c0, %c0_0] : memref<16x32xf32, #tpu.memory_space<vmem>>, vector<16x32xf32>
    %c0_1 = arith.constant 0 : index
    %c0_2 = arith.constant 0 : index
    %1 = vector.load %arg1[%c0_1, %c0_2] : memref<16x16xf32, #tpu.memory_space<vmem>>, vector<16x16xf32>
    %c0_3 = arith.constant 0 : index
    %2 = memref.load %arg10[%c0_3] : memref<10xf32, #tpu.memory_space<smem>>
    %c1 = arith.constant 1 : index
    %3 = memref.load %arg10[%c1] : memref<10xf32, #tpu.memory_space<smem>>
    %cst = arith.constant dense<0.000000e+00> : vector<16xf32>
    %4 = vector.multi_reduction <add>, %0, %cst [1] : vector<16x32xf32> to vector<16xf32>
    %5 = vector.shape_cast %4 : vector<16xf32> to vector<16x1xf32>
    %cst_4 = arith.constant 3.200000e+01 : f32
    %6 = vector.broadcast %cst_4 : f32 to vector<16x1xf32>
    %7 = arith.divf %5, %6 : vector<16x1xf32>
    %8 = vector.broadcast %7 : vector<16x1xf32> to vector<16x32xf32>
    %9 = arith.subf %0, %8 : vector<16x32xf32>
    %10 = arith.mulf %9, %9 : vector<16x32xf32>
    %cst_5 = arith.constant dense<0.000000e+00> : vector<16xf32>
    %11 = vector.multi_reduction <add>, %10, %cst_5 [1] : vector<16x32xf32> to vector<16xf32>
    %12 = vector.shape_cast %11 : vector<16xf32> to vector<16x1xf32>
    %cst_6 = arith.constant 3.100000e+01 : f32
    %13 = vector.broadcast %cst_6 : f32 to vector<16x1xf32>
    %14 = arith.divf %12, %13 : vector<16x1xf32>
    %15 = math.sqrt %14 : vector<16x1xf32>
    %cst_7 = arith.constant 9.99999997E-7 : f32
    %16 = vector.broadcast %cst_7 : f32 to vector<16x1xf32>
    %17 = arith.addf %15, %16 : vector<16x1xf32>
    %18 = tpu.reciprocal %17 {approx = true} : vector<16x1xf32> -> vector<16x1xf32>
    %19 = vector.broadcast %7 : vector<16x1xf32> to vector<16x32xf32>
    %20 = arith.subf %0, %19 : vector<16x32xf32>
    %21 = vector.broadcast %2 : f32 to vector<16x32xf32>
    %22 = arith.mulf %21, %20 : vector<16x32xf32>
    %23 = vector.broadcast %18 : vector<16x1xf32> to vector<16x32xf32>
    %24 = arith.mulf %22, %23 : vector<16x32xf32>
    %25 = vector.broadcast %3 : f32 to vector<16x32xf32>
    %26 = arith.addf %24, %25 : vector<16x32xf32>
    %c0_8 = arith.constant 0 : index
    %c0_9 = arith.constant 0 : index
    %c0_10 = arith.constant 0 : index
    %27 = vector.load %arg2[%c0_8, %c0_9, %c0_10] : memref<2x32x96xf32, #tpu.memory_space<vmem>>, vector<1x32x96xf32>
    %28 = vector.shape_cast %27 : vector<1x32x96xf32> to vector<32x96xf32>
    %cst_11 = arith.constant dense<0.000000e+00> : vector<16x96xf32>
    %29 = tpu.matmul %26, %28, %cst_11 {dimension_numbers = #tpu.dot_dimension_numbers<[1], [0], [0], [1], [0, 0, 1, 1], [], []>} : vector<16x32xf32>, vector<32x96xf32>, vector<16x96xf32> -> vector<16x96xf32>
    %c0_12 = arith.constant 0 : index
    %c0_13 = arith.constant 0 : index
    %c0_14 = arith.constant 0 : index
    %30 = vector.load %arg3[%c0_12, %c0_13, %c0_14] : memref<2x1x96xf32, #tpu.memory_space<vmem>>, vector<1x1x96xf32>
    %31 = vector.shape_cast %30 : vector<1x1x96xf32> to vector<1x96xf32>
    %32 = vector.broadcast %31 : vector<1x96xf32> to vector<16x96xf32>
    %33 = arith.addf %29, %32 : vector<16x96xf32>
    %34 = vector.extract_strided_slice %33 {offsets = [0, 0], sizes = [16, 8], strides = [1, 1]} : vector<16x96xf32> to vector<16x8xf32>
    %35 = vector.extract_strided_slice %33 {offsets = [0, 32], sizes = [16, 8], strides = [1, 1]} : vector<16x96xf32> to vector<16x8xf32>
    %36 = vector.extract_strided_slice %33 {offsets = [0, 64], sizes = [16, 8], strides = [1, 1]} : vector<16x96xf32> to vector<16x8xf32>
    %37 = tpu.transpose %35, [1, 0] : vector<16x8xf32> -> vector<8x16xf32>
    %cst_15 = arith.constant dense<0.000000e+00> : vector<16x16xf32>
    %38 = tpu.matmul %34, %37, %cst_15 {dimension_numbers = #tpu.dot_dimension_numbers<[1], [0], [0], [1], [0, 0, 1, 1], [], []>} : vector<16x8xf32>, vector<8x16xf32>, vector<16x16xf32> -> vector<16x16xf32>
    %cst_16 = arith.constant 0.353553385 : f32
    %39 = vector.broadcast %cst_16 : f32 to vector<16x16xf32>
    %40 = arith.mulf %38, %39 : vector<16x16xf32>
    %41 = arith.addf %40, %1 : vector<16x16xf32>
    %cst_17 = arith.constant dense<0xFF800000> : vector<16xf32>
    %42 = vector.multi_reduction <maximumf>, %41, %cst_17 [1] : vector<16x16xf32> to vector<16xf32>
    %43 = vector.shape_cast %42 : vector<16xf32> to vector<16x1xf32>
    %44 = vector.broadcast %43 : vector<16x1xf32> to vector<16x16xf32>
    %45 = arith.subf %41, %44 : vector<16x16xf32>
    %46 = math.exp %45 : vector<16x16xf32>
    %cst_18 = arith.constant dense<0.000000e+00> : vector<16xf32>
    %47 = vector.multi_reduction <add>, %46, %cst_18 [1] : vector<16x16xf32> to vector<16xf32>
    %48 = vector.shape_cast %47 : vector<16xf32> to vector<16x1xf32>
    %49 = tpu.reciprocal %48 {approx = true} : vector<16x1xf32> -> vector<16x1xf32>
    %50 = vector.broadcast %49 : vector<16x1xf32> to vector<16x16xf32>
    %51 = arith.mulf %46, %50 : vector<16x16xf32>
    %cst_19 = arith.constant dense<0.000000e+00> : vector<16x8xf32>
    %52 = tpu.matmul %51, %36, %cst_19 {dimension_numbers = #tpu.dot_dimension_numbers<[1], [0], [0], [1], [0, 0, 1, 1], [], []>} : vector<16x16xf32>, vector<16x8xf32>, vector<16x8xf32> -> vector<16x8xf32>
    %53 = vector.extract_strided_slice %33 {offsets = [0, 8], sizes = [16, 8], strides = [1, 1]} : vector<16x96xf32> to vector<16x8xf32>
    %54 = vector.extract_strided_slice %33 {offsets = [0, 40], sizes = [16, 8], strides = [1, 1]} : vector<16x96xf32> to vector<16x8xf32>
    %55 = vector.extract_strided_slice %33 {offsets = [0, 72], sizes = [16, 8], strides = [1, 1]} : vector<16x96xf32> to vector<16x8xf32>
    %56 = tpu.transpose %54, [1, 0] : vector<16x8xf32> -> vector<8x16xf32>
    %cst_20 = arith.constant dense<0.000000e+00> : vector<16x16xf32>
    %57 = tpu.matmul %53, %56, %cst_20 {dimension_numbers = #tpu.dot_dimension_numbers<[1], [0], [0], [1], [0, 0, 1, 1], [], []>} : vector<16x8xf32>, vector<8x16xf32>, vector<16x16xf32> -> vector<16x16xf32>
    %cst_21 = arith.constant 0.353553385 : f32
    %58 = vector.broadcast %cst_21 : f32 to vector<16x16xf32>
    %59 = arith.mulf %57, %58 : vector<16x16xf32>
    %60 = arith.addf %59, %1 : vector<16x16xf32>
    %cst_22 = arith.constant dense<0xFF800000> : vector<16xf32>
    %61 = vector.multi_reduction <maximumf>, %60, %cst_22 [1] : vector<16x16xf32> to vector<16xf32>
    %62 = vector.shape_cast %61 : vector<16xf32> to vector<16x1xf32>
    %63 = vector.broadcast %62 : vector<16x1xf32> to vector<16x16xf32>
    %64 = arith.subf %60, %63 : vector<16x16xf32>
    %65 = math.exp %64 : vector<16x16xf32>
    %cst_23 = arith.constant dense<0.000000e+00> : vector<16xf32>
    %66 = vector.multi_reduction <add>, %65, %cst_23 [1] : vector<16x16xf32> to vector<16xf32>
    %67 = vector.shape_cast %66 : vector<16xf32> to vector<16x1xf32>
    %68 = tpu.reciprocal %67 {approx = true} : vector<16x1xf32> -> vector<16x1xf32>
    %69 = vector.broadcast %68 : vector<16x1xf32> to vector<16x16xf32>
    %70 = arith.mulf %65, %69 : vector<16x16xf32>
    %cst_24 = arith.constant dense<0.000000e+00> : vector<16x8xf32>
    %71 = tpu.matmul %70, %55, %cst_24 {dimension_numbers = #tpu.dot_dimension_numbers<[1], [0], [0], [1], [0, 0, 1, 1], [], []>} : vector<16x16xf32>, vector<16x8xf32>, vector<16x8xf32> -> vector<16x8xf32>
    %72 = vector.extract_strided_slice %33 {offsets = [0, 16], sizes = [16, 8], strides = [1, 1]} : vector<16x96xf32> to vector<16x8xf32>
    %73 = vector.extract_strided_slice %33 {offsets = [0, 48], sizes = [16, 8], strides = [1, 1]} : vector<16x96xf32> to vector<16x8xf32>
    %74 = vector.extract_strided_slice %33 {offsets = [0, 80], sizes = [16, 8], strides = [1, 1]} : vector<16x96xf32> to vector<16x8xf32>
    %75 = tpu.transpose %73, [1, 0] : vector<16x8xf32> -> vector<8x16xf32>
    %cst_25 = arith.constant dense<0.000000e+00> : vector<16x16xf32>
    %76 = tpu.matmul %72, %75, %cst_25 {dimension_numbers = #tpu.dot_dimension_numbers<[1], [0], [0], [1], [0, 0, 1, 1], [], []>} : vector<16x8xf32>, vector<8x16xf32>, vector<16x16xf32> -> vector<16x16xf32>
    %cst_26 = arith.constant 0.353553385 : f32
    %77 = vector.broadcast %cst_26 : f32 to vector<16x16xf32>
    %78 = arith.mulf %76, %77 : vector<16x16xf32>
    %79 = arith.addf %78, %1 : vector<16x16xf32>
    %cst_27 = arith.constant dense<0xFF800000> : vector<16xf32>
    %80 = vector.multi_reduction <maximumf>, %79, %cst_27 [1] : vector<16x16xf32> to vector<16xf32>
    %81 = vector.shape_cast %80 : vector<16xf32> to vector<16x1xf32>
    %82 = vector.broadcast %81 : vector<16x1xf32> to vector<16x16xf32>
    %83 = arith.subf %79, %82 : vector<16x16xf32>
    %84 = math.exp %83 : vector<16x16xf32>
    %cst_28 = arith.constant dense<0.000000e+00> : vector<16xf32>
    %85 = vector.multi_reduction <add>, %84, %cst_28 [1] : vector<16x16xf32> to vector<16xf32>
    %86 = vector.shape_cast %85 : vector<16xf32> to vector<16x1xf32>
    %87 = tpu.reciprocal %86 {approx = true} : vector<16x1xf32> -> vector<16x1xf32>
    %88 = vector.broadcast %87 : vector<16x1xf32> to vector<16x16xf32>
    %89 = arith.mulf %84, %88 : vector<16x16xf32>
    %cst_29 = arith.constant dense<0.000000e+00> : vector<16x8xf32>
    %90 = tpu.matmul %89, %74, %cst_29 {dimension_numbers = #tpu.dot_dimension_numbers<[1], [0], [0], [1], [0, 0, 1, 1], [], []>} : vector<16x16xf32>, vector<16x8xf32>, vector<16x8xf32> -> vector<16x8xf32>
    %91 = vector.extract_strided_slice %33 {offsets = [0, 24], sizes = [16, 8], strides = [1, 1]} : vector<16x96xf32> to vector<16x8xf32>
    %92 = vector.extract_strided_slice %33 {offsets = [0, 56], sizes = [16, 8], strides = [1, 1]} : vector<16x96xf32> to vector<16x8xf32>
    %93 = vector.extract_strided_slice %33 {offsets = [0, 88], sizes = [16, 8], strides = [1, 1]} : vector<16x96xf32> to vector<16x8xf32>
    %94 = tpu.transpose %92, [1, 0] : vector<16x8xf32> -> vector<8x16xf32>
    %cst_30 = arith.constant dense<0.000000e+00> : vector<16x16xf32>
    %95 = tpu.matmul %91, %94, %cst_30 {dimension_numbers = #tpu.dot_dimension_numbers<[1], [0], [0], [1], [0, 0, 1, 1], [], []>} : vector<16x8xf32>, vector<8x16xf32>, vector<16x16xf32> -> vector<16x16xf32>
    %cst_31 = arith.constant 0.353553385 : f32
    %96 = vector.broadcast %cst_31 : f32 to vector<16x16xf32>
    %97 = arith.mulf %95, %96 : vector<16x16xf32>
    %98 = arith.addf %97, %1 : vector<16x16xf32>
    %cst_32 = arith.constant dense<0xFF800000> : vector<16xf32>
    %99 = vector.multi_reduction <maximumf>, %98, %cst_32 [1] : vector<16x16xf32> to vector<16xf32>
    %100 = vector.shape_cast %99 : vector<16xf32> to vector<16x1xf32>
    %101 = vector.broadcast %100 : vector<16x1xf32> to vector<16x16xf32>
    %102 = arith.subf %98, %101 : vector<16x16xf32>
    %103 = math.exp %102 : vector<16x16xf32>
    %cst_33 = arith.constant dense<0.000000e+00> : vector<16xf32>
    %104 = vector.multi_reduction <add>, %103, %cst_33 [1] : vector<16x16xf32> to vector<16xf32>
    %105 = vector.shape_cast %104 : vector<16xf32> to vector<16x1xf32>
    %106 = tpu.reciprocal %105 {approx = true} : vector<16x1xf32> -> vector<16x1xf32>
    %107 = vector.broadcast %106 : vector<16x1xf32> to vector<16x16xf32>
    %108 = arith.mulf %103, %107 : vector<16x16xf32>
    %cst_34 = arith.constant dense<0.000000e+00> : vector<16x8xf32>
    %109 = tpu.matmul %108, %93, %cst_34 {dimension_numbers = #tpu.dot_dimension_numbers<[1], [0], [0], [1], [0, 0, 1, 1], [], []>} : vector<16x16xf32>, vector<16x8xf32>, vector<16x8xf32> -> vector<16x8xf32>
    %110 = tpu.concatenate %52, %71, %90, %109 in 1 : vector<16x8xf32>, vector<16x8xf32>, vector<16x8xf32>, vector<16x8xf32> -> vector<16x32xf32>
    %c0_35 = arith.constant 0 : index
    %c0_36 = arith.constant 0 : index
    %c0_37 = arith.constant 0 : index
    %111 = vector.load %arg4[%c0_35, %c0_36, %c0_37] : memref<2x32x32xf32, #tpu.memory_space<vmem>>, vector<1x32x32xf32>
    %112 = vector.shape_cast %111 : vector<1x32x32xf32> to vector<32x32xf32>
    %cst_38 = arith.constant dense<0.000000e+00> : vector<16x32xf32>
    %113 = tpu.matmul %110, %112, %cst_38 {dimension_numbers = #tpu.dot_dimension_numbers<[1], [0], [0], [1], [0, 0, 1, 1], [], []>} : vector<16x32xf32>, vector<32x32xf32>, vector<16x32xf32> -> vector<16x32xf32>
    %114 = arith.addf %0, %113 : vector<16x32xf32>
    %c0_39 = arith.constant 0 : index
    %c0_40 = arith.constant 0 : index
    %c0_41 = arith.constant 0 : index
    %115 = vector.load %arg5[%c0_39, %c0_40, %c0_41] : memref<2x1x32xf32, #tpu.memory_space<vmem>>, vector<1x1x32xf32>
    %116 = vector.shape_cast %115 : vector<1x1x32xf32> to vector<1x32xf32>
    %117 = vector.broadcast %116 : vector<1x32xf32> to vector<16x32xf32>
    %118 = arith.addf %114, %117 : vector<16x32xf32>
    %c2 = arith.constant 2 : index
    %119 = memref.load %arg10[%c2] : memref<10xf32, #tpu.memory_space<smem>>
    %c3 = arith.constant 3 : index
    %120 = memref.load %arg10[%c3] : memref<10xf32, #tpu.memory_space<smem>>
    %cst_42 = arith.constant dense<0.000000e+00> : vector<16xf32>
    %121 = vector.multi_reduction <add>, %118, %cst_42 [1] : vector<16x32xf32> to vector<16xf32>
    %122 = vector.shape_cast %121 : vector<16xf32> to vector<16x1xf32>
    %cst_43 = arith.constant 3.200000e+01 : f32
    %123 = vector.broadcast %cst_43 : f32 to vector<16x1xf32>
    %124 = arith.divf %122, %123 : vector<16x1xf32>
    %125 = vector.broadcast %124 : vector<16x1xf32> to vector<16x32xf32>
    %126 = arith.subf %118, %125 : vector<16x32xf32>
    %127 = arith.mulf %126, %126 : vector<16x32xf32>
    %cst_44 = arith.constant dense<0.000000e+00> : vector<16xf32>
    %128 = vector.multi_reduction <add>, %127, %cst_44 [1] : vector<16x32xf32> to vector<16xf32>
    %129 = vector.shape_cast %128 : vector<16xf32> to vector<16x1xf32>
    %cst_45 = arith.constant 3.100000e+01 : f32
    %130 = vector.broadcast %cst_45 : f32 to vector<16x1xf32>
    %131 = arith.divf %129, %130 : vector<16x1xf32>
    %132 = math.sqrt %131 : vector<16x1xf32>
    %cst_46 = arith.constant 9.99999997E-7 : f32
    %133 = vector.broadcast %cst_46 : f32 to vector<16x1xf32>
    %134 = arith.addf %132, %133 : vector<16x1xf32>
    %135 = tpu.reciprocal %134 {approx = true} : vector<16x1xf32> -> vector<16x1xf32>
    %136 = vector.broadcast %124 : vector<16x1xf32> to vector<16x32xf32>
    %137 = arith.subf %118, %136 : vector<16x32xf32>
    %138 = vector.broadcast %119 : f32 to vector<16x32xf32>
    %139 = arith.mulf %138, %137 : vector<16x32xf32>
    %140 = vector.broadcast %135 : vector<16x1xf32> to vector<16x32xf32>
    %141 = arith.mulf %139, %140 : vector<16x32xf32>
    %142 = vector.broadcast %120 : f32 to vector<16x32xf32>
    %143 = arith.addf %141, %142 : vector<16x32xf32>
    %c0_47 = arith.constant 0 : index
    %c0_48 = arith.constant 0 : index
    %c0_49 = arith.constant 0 : index
    %144 = vector.load %arg6[%c0_47, %c0_48, %c0_49] : memref<2x32x64xf32, #tpu.memory_space<vmem>>, vector<1x32x64xf32>
    %145 = vector.shape_cast %144 : vector<1x32x64xf32> to vector<32x64xf32>
    %cst_50 = arith.constant dense<0.000000e+00> : vector<16x64xf32>
    %146 = tpu.matmul %143, %145, %cst_50 {dimension_numbers = #tpu.dot_dimension_numbers<[1], [0], [0], [1], [0, 0, 1, 1], [], []>} : vector<16x32xf32>, vector<32x64xf32>, vector<16x64xf32> -> vector<16x64xf32>
    %c0_51 = arith.constant 0 : index
    %c0_52 = arith.constant 0 : index
    %c0_53 = arith.constant 0 : index
    %147 = vector.load %arg7[%c0_51, %c0_52, %c0_53] : memref<2x1x64xf32, #tpu.memory_space<vmem>>, vector<1x1x64xf32>
    %148 = vector.shape_cast %147 : vector<1x1x64xf32> to vector<1x64xf32>
    %149 = vector.broadcast %148 : vector<1x64xf32> to vector<16x64xf32>
    %150 = arith.addf %146, %149 : vector<16x64xf32>
    %cst_54 = arith.constant 0.000000e+00 : f32
    %151 = vector.broadcast %cst_54 : f32 to vector<16x64xf32>
    %152 = arith.maximumf %150, %151 : vector<16x64xf32>
    %c0_55 = arith.constant 0 : index
    %c0_56 = arith.constant 0 : index
    %c0_57 = arith.constant 0 : index
    %153 = vector.load %arg8[%c0_55, %c0_56, %c0_57] : memref<2x64x32xf32, #tpu.memory_space<vmem>>, vector<1x64x32xf32>
    %154 = vector.shape_cast %153 : vector<1x64x32xf32> to vector<64x32xf32>
    %cst_58 = arith.constant dense<0.000000e+00> : vector<16x32xf32>
    %155 = tpu.matmul %152, %154, %cst_58 {dimension_numbers = #tpu.dot_dimension_numbers<[1], [0], [0], [1], [0, 0, 1, 1], [], []>} : vector<16x64xf32>, vector<64x32xf32>, vector<16x32xf32> -> vector<16x32xf32>
    %156 = arith.addf %118, %155 : vector<16x32xf32>
    %c0_59 = arith.constant 0 : index
    %c0_60 = arith.constant 0 : index
    %c0_61 = arith.constant 0 : index
    %157 = vector.load %arg9[%c0_59, %c0_60, %c0_61] : memref<2x1x32xf32, #tpu.memory_space<vmem>>, vector<1x1x32xf32>
    %158 = vector.shape_cast %157 : vector<1x1x32xf32> to vector<1x32xf32>
    %159 = vector.broadcast %158 : vector<1x32xf32> to vector<16x32xf32>
    %160 = arith.addf %156, %159 : vector<16x32xf32>
    %c4 = arith.constant 4 : index
    %161 = memref.load %arg10[%c4] : memref<10xf32, #tpu.memory_space<smem>>
    %c5 = arith.constant 5 : index
    %162 = memref.load %arg10[%c5] : memref<10xf32, #tpu.memory_space<smem>>
    %cst_62 = arith.constant dense<0.000000e+00> : vector<16xf32>
    %163 = vector.multi_reduction <add>, %160, %cst_62 [1] : vector<16x32xf32> to vector<16xf32>
    %164 = vector.shape_cast %163 : vector<16xf32> to vector<16x1xf32>
    %cst_63 = arith.constant 3.200000e+01 : f32
    %165 = vector.broadcast %cst_63 : f32 to vector<16x1xf32>
    %166 = arith.divf %164, %165 : vector<16x1xf32>
    %167 = vector.broadcast %166 : vector<16x1xf32> to vector<16x32xf32>
    %168 = arith.subf %160, %167 : vector<16x32xf32>
    %169 = arith.mulf %168, %168 : vector<16x32xf32>
    %cst_64 = arith.constant dense<0.000000e+00> : vector<16xf32>
    %170 = vector.multi_reduction <add>, %169, %cst_64 [1] : vector<16x32xf32> to vector<16xf32>
    %171 = vector.shape_cast %170 : vector<16xf32> to vector<16x1xf32>
    %cst_65 = arith.constant 3.100000e+01 : f32
    %172 = vector.broadcast %cst_65 : f32 to vector<16x1xf32>
    %173 = arith.divf %171, %172 : vector<16x1xf32>
    %174 = math.sqrt %173 : vector<16x1xf32>
    %cst_66 = arith.constant 9.99999997E-7 : f32
    %175 = vector.broadcast %cst_66 : f32 to vector<16x1xf32>
    %176 = arith.addf %174, %175 : vector<16x1xf32>
    %177 = tpu.reciprocal %176 {approx = true} : vector<16x1xf32> -> vector<16x1xf32>
    %178 = vector.broadcast %166 : vector<16x1xf32> to vector<16x32xf32>
    %179 = arith.subf %160, %178 : vector<16x32xf32>
    %180 = vector.broadcast %161 : f32 to vector<16x32xf32>
    %181 = arith.mulf %180, %179 : vector<16x32xf32>
    %182 = vector.broadcast %177 : vector<16x1xf32> to vector<16x32xf32>
    %183 = arith.mulf %181, %182 : vector<16x32xf32>
    %184 = vector.broadcast %162 : f32 to vector<16x32xf32>
    %185 = arith.addf %183, %184 : vector<16x32xf32>
    %c1_67 = arith.constant 1 : index
    %c0_68 = arith.constant 0 : index
    %c0_69 = arith.constant 0 : index
    %186 = vector.load %arg2[%c1_67, %c0_68, %c0_69] : memref<2x32x96xf32, #tpu.memory_space<vmem>>, vector<1x32x96xf32>
    %187 = vector.shape_cast %186 : vector<1x32x96xf32> to vector<32x96xf32>
    %cst_70 = arith.constant dense<0.000000e+00> : vector<16x96xf32>
    %188 = tpu.matmul %185, %187, %cst_70 {dimension_numbers = #tpu.dot_dimension_numbers<[1], [0], [0], [1], [0, 0, 1, 1], [], []>} : vector<16x32xf32>, vector<32x96xf32>, vector<16x96xf32> -> vector<16x96xf32>
    %c1_71 = arith.constant 1 : index
    %c0_72 = arith.constant 0 : index
    %c0_73 = arith.constant 0 : index
    %189 = vector.load %arg3[%c1_71, %c0_72, %c0_73] : memref<2x1x96xf32, #tpu.memory_space<vmem>>, vector<1x1x96xf32>
    %190 = vector.shape_cast %189 : vector<1x1x96xf32> to vector<1x96xf32>
    %191 = vector.broadcast %190 : vector<1x96xf32> to vector<16x96xf32>
    %192 = arith.addf %188, %191 : vector<16x96xf32>
    %193 = vector.extract_strided_slice %192 {offsets = [0, 0], sizes = [16, 8], strides = [1, 1]} : vector<16x96xf32> to vector<16x8xf32>
    %194 = vector.extract_strided_slice %192 {offsets = [0, 32], sizes = [16, 8], strides = [1, 1]} : vector<16x96xf32> to vector<16x8xf32>
    %195 = vector.extract_strided_slice %192 {offsets = [0, 64], sizes = [16, 8], strides = [1, 1]} : vector<16x96xf32> to vector<16x8xf32>
    %196 = tpu.transpose %194, [1, 0] : vector<16x8xf32> -> vector<8x16xf32>
    %cst_74 = arith.constant dense<0.000000e+00> : vector<16x16xf32>
    %197 = tpu.matmul %193, %196, %cst_74 {dimension_numbers = #tpu.dot_dimension_numbers<[1], [0], [0], [1], [0, 0, 1, 1], [], []>} : vector<16x8xf32>, vector<8x16xf32>, vector<16x16xf32> -> vector<16x16xf32>
    %cst_75 = arith.constant 0.353553385 : f32
    %198 = vector.broadcast %cst_75 : f32 to vector<16x16xf32>
    %199 = arith.mulf %197, %198 : vector<16x16xf32>
    %200 = arith.addf %199, %1 : vector<16x16xf32>
    %cst_76 = arith.constant dense<0xFF800000> : vector<16xf32>
    %201 = vector.multi_reduction <maximumf>, %200, %cst_76 [1] : vector<16x16xf32> to vector<16xf32>
    %202 = vector.shape_cast %201 : vector<16xf32> to vector<16x1xf32>
    %203 = vector.broadcast %202 : vector<16x1xf32> to vector<16x16xf32>
    %204 = arith.subf %200, %203 : vector<16x16xf32>
    %205 = math.exp %204 : vector<16x16xf32>
    %cst_77 = arith.constant dense<0.000000e+00> : vector<16xf32>
    %206 = vector.multi_reduction <add>, %205, %cst_77 [1] : vector<16x16xf32> to vector<16xf32>
    %207 = vector.shape_cast %206 : vector<16xf32> to vector<16x1xf32>
    %208 = tpu.reciprocal %207 {approx = true} : vector<16x1xf32> -> vector<16x1xf32>
    %209 = vector.broadcast %208 : vector<16x1xf32> to vector<16x16xf32>
    %210 = arith.mulf %205, %209 : vector<16x16xf32>
    %cst_78 = arith.constant dense<0.000000e+00> : vector<16x8xf32>
    %211 = tpu.matmul %210, %195, %cst_78 {dimension_numbers = #tpu.dot_dimension_numbers<[1], [0], [0], [1], [0, 0, 1, 1], [], []>} : vector<16x16xf32>, vector<16x8xf32>, vector<16x8xf32> -> vector<16x8xf32>
    %212 = vector.extract_strided_slice %192 {offsets = [0, 8], sizes = [16, 8], strides = [1, 1]} : vector<16x96xf32> to vector<16x8xf32>
    %213 = vector.extract_strided_slice %192 {offsets = [0, 40], sizes = [16, 8], strides = [1, 1]} : vector<16x96xf32> to vector<16x8xf32>
    %214 = vector.extract_strided_slice %192 {offsets = [0, 72], sizes = [16, 8], strides = [1, 1]} : vector<16x96xf32> to vector<16x8xf32>
    %215 = tpu.transpose %213, [1, 0] : vector<16x8xf32> -> vector<8x16xf32>
    %cst_79 = arith.constant dense<0.000000e+00> : vector<16x16xf32>
    %216 = tpu.matmul %212, %215, %cst_79 {dimension_numbers = #tpu.dot_dimension_numbers<[1], [0], [0], [1], [0, 0, 1, 1], [], []>} : vector<16x8xf32>, vector<8x16xf32>, vector<16x16xf32> -> vector<16x16xf32>
    %cst_80 = arith.constant 0.353553385 : f32
    %217 = vector.broadcast %cst_80 : f32 to vector<16x16xf32>
    %218 = arith.mulf %216, %217 : vector<16x16xf32>
    %219 = arith.addf %218, %1 : vector<16x16xf32>
    %cst_81 = arith.constant dense<0xFF800000> : vector<16xf32>
    %220 = vector.multi_reduction <maximumf>, %219, %cst_81 [1] : vector<16x16xf32> to vector<16xf32>
    %221 = vector.shape_cast %220 : vector<16xf32> to vector<16x1xf32>
    %222 = vector.broadcast %221 : vector<16x1xf32> to vector<16x16xf32>
    %223 = arith.subf %219, %222 : vector<16x16xf32>
    %224 = math.exp %223 : vector<16x16xf32>
    %cst_82 = arith.constant dense<0.000000e+00> : vector<16xf32>
    %225 = vector.multi_reduction <add>, %224, %cst_82 [1] : vector<16x16xf32> to vector<16xf32>
    %226 = vector.shape_cast %225 : vector<16xf32> to vector<16x1xf32>
    %227 = tpu.reciprocal %226 {approx = true} : vector<16x1xf32> -> vector<16x1xf32>
    %228 = vector.broadcast %227 : vector<16x1xf32> to vector<16x16xf32>
    %229 = arith.mulf %224, %228 : vector<16x16xf32>
    %cst_83 = arith.constant dense<0.000000e+00> : vector<16x8xf32>
    %230 = tpu.matmul %229, %214, %cst_83 {dimension_numbers = #tpu.dot_dimension_numbers<[1], [0], [0], [1], [0, 0, 1, 1], [], []>} : vector<16x16xf32>, vector<16x8xf32>, vector<16x8xf32> -> vector<16x8xf32>
    %231 = vector.extract_strided_slice %192 {offsets = [0, 16], sizes = [16, 8], strides = [1, 1]} : vector<16x96xf32> to vector<16x8xf32>
    %232 = vector.extract_strided_slice %192 {offsets = [0, 48], sizes = [16, 8], strides = [1, 1]} : vector<16x96xf32> to vector<16x8xf32>
    %233 = vector.extract_strided_slice %192 {offsets = [0, 80], sizes = [16, 8], strides = [1, 1]} : vector<16x96xf32> to vector<16x8xf32>
    %234 = tpu.transpose %232, [1, 0] : vector<16x8xf32> -> vector<8x16xf32>
    %cst_84 = arith.constant dense<0.000000e+00> : vector<16x16xf32>
    %235 = tpu.matmul %231, %234, %cst_84 {dimension_numbers = #tpu.dot_dimension_numbers<[1], [0], [0], [1], [0, 0, 1, 1], [], []>} : vector<16x8xf32>, vector<8x16xf32>, vector<16x16xf32> -> vector<16x16xf32>
    %cst_85 = arith.constant 0.353553385 : f32
    %236 = vector.broadcast %cst_85 : f32 to vector<16x16xf32>
    %237 = arith.mulf %235, %236 : vector<16x16xf32>
    %238 = arith.addf %237, %1 : vector<16x16xf32>
    %cst_86 = arith.constant dense<0xFF800000> : vector<16xf32>
    %239 = vector.multi_reduction <maximumf>, %238, %cst_86 [1] : vector<16x16xf32> to vector<16xf32>
    %240 = vector.shape_cast %239 : vector<16xf32> to vector<16x1xf32>
    %241 = vector.broadcast %240 : vector<16x1xf32> to vector<16x16xf32>
    %242 = arith.subf %238, %241 : vector<16x16xf32>
    %243 = math.exp %242 : vector<16x16xf32>
    %cst_87 = arith.constant dense<0.000000e+00> : vector<16xf32>
    %244 = vector.multi_reduction <add>, %243, %cst_87 [1] : vector<16x16xf32> to vector<16xf32>
    %245 = vector.shape_cast %244 : vector<16xf32> to vector<16x1xf32>
    %246 = tpu.reciprocal %245 {approx = true} : vector<16x1xf32> -> vector<16x1xf32>
    %247 = vector.broadcast %246 : vector<16x1xf32> to vector<16x16xf32>
    %248 = arith.mulf %243, %247 : vector<16x16xf32>
    %cst_88 = arith.constant dense<0.000000e+00> : vector<16x8xf32>
    %249 = tpu.matmul %248, %233, %cst_88 {dimension_numbers = #tpu.dot_dimension_numbers<[1], [0], [0], [1], [0, 0, 1, 1], [], []>} : vector<16x16xf32>, vector<16x8xf32>, vector<16x8xf32> -> vector<16x8xf32>
    %250 = vector.extract_strided_slice %192 {offsets = [0, 24], sizes = [16, 8], strides = [1, 1]} : vector<16x96xf32> to vector<16x8xf32>
    %251 = vector.extract_strided_slice %192 {offsets = [0, 56], sizes = [16, 8], strides = [1, 1]} : vector<16x96xf32> to vector<16x8xf32>
    %252 = vector.extract_strided_slice %192 {offsets = [0, 88], sizes = [16, 8], strides = [1, 1]} : vector<16x96xf32> to vector<16x8xf32>
    %253 = tpu.transpose %251, [1, 0] : vector<16x8xf32> -> vector<8x16xf32>
    %cst_89 = arith.constant dense<0.000000e+00> : vector<16x16xf32>
    %254 = tpu.matmul %250, %253, %cst_89 {dimension_numbers = #tpu.dot_dimension_numbers<[1], [0], [0], [1], [0, 0, 1, 1], [], []>} : vector<16x8xf32>, vector<8x16xf32>, vector<16x16xf32> -> vector<16x16xf32>
    %cst_90 = arith.constant 0.353553385 : f32
    %255 = vector.broadcast %cst_90 : f32 to vector<16x16xf32>
    %256 = arith.mulf %254, %255 : vector<16x16xf32>
    %257 = arith.addf %256, %1 : vector<16x16xf32>
    %cst_91 = arith.constant dense<0xFF800000> : vector<16xf32>
    %258 = vector.multi_reduction <maximumf>, %257, %cst_91 [1] : vector<16x16xf32> to vector<16xf32>
    %259 = vector.shape_cast %258 : vector<16xf32> to vector<16x1xf32>
    %260 = vector.broadcast %259 : vector<16x1xf32> to vector<16x16xf32>
    %261 = arith.subf %257, %260 : vector<16x16xf32>
    %262 = math.exp %261 : vector<16x16xf32>
    %cst_92 = arith.constant dense<0.000000e+00> : vector<16xf32>
    %263 = vector.multi_reduction <add>, %262, %cst_92 [1] : vector<16x16xf32> to vector<16xf32>
    %264 = vector.shape_cast %263 : vector<16xf32> to vector<16x1xf32>
    %265 = tpu.reciprocal %264 {approx = true} : vector<16x1xf32> -> vector<16x1xf32>
    %266 = vector.broadcast %265 : vector<16x1xf32> to vector<16x16xf32>
    %267 = arith.mulf %262, %266 : vector<16x16xf32>
    %cst_93 = arith.constant dense<0.000000e+00> : vector<16x8xf32>
    %268 = tpu.matmul %267, %252, %cst_93 {dimension_numbers = #tpu.dot_dimension_numbers<[1], [0], [0], [1], [0, 0, 1, 1], [], []>} : vector<16x16xf32>, vector<16x8xf32>, vector<16x8xf32> -> vector<16x8xf32>
    %269 = tpu.concatenate %211, %230, %249, %268 in 1 : vector<16x8xf32>, vector<16x8xf32>, vector<16x8xf32>, vector<16x8xf32> -> vector<16x32xf32>
    %c1_94 = arith.constant 1 : index
    %c0_95 = arith.constant 0 : index
    %c0_96 = arith.constant 0 : index
    %270 = vector.load %arg4[%c1_94, %c0_95, %c0_96] : memref<2x32x32xf32, #tpu.memory_space<vmem>>, vector<1x32x32xf32>
    %271 = vector.shape_cast %270 : vector<1x32x32xf32> to vector<32x32xf32>
    %cst_97 = arith.constant dense<0.000000e+00> : vector<16x32xf32>
    %272 = tpu.matmul %269, %271, %cst_97 {dimension_numbers = #tpu.dot_dimension_numbers<[1], [0], [0], [1], [0, 0, 1, 1], [], []>} : vector<16x32xf32>, vector<32x32xf32>, vector<16x32xf32> -> vector<16x32xf32>
    %273 = arith.addf %160, %272 : vector<16x32xf32>
    %c1_98 = arith.constant 1 : index
    %c0_99 = arith.constant 0 : index
    %c0_100 = arith.constant 0 : index
    %274 = vector.load %arg5[%c1_98, %c0_99, %c0_100] : memref<2x1x32xf32, #tpu.memory_space<vmem>>, vector<1x1x32xf32>
    %275 = vector.shape_cast %274 : vector<1x1x32xf32> to vector<1x32xf32>
    %276 = vector.broadcast %275 : vector<1x32xf32> to vector<16x32xf32>
    %277 = arith.addf %273, %276 : vector<16x32xf32>
    %c6 = arith.constant 6 : index
    %278 = memref.load %arg10[%c6] : memref<10xf32, #tpu.memory_space<smem>>
    %c7 = arith.constant 7 : index
    %279 = memref.load %arg10[%c7] : memref<10xf32, #tpu.memory_space<smem>>
    %cst_101 = arith.constant dense<0.000000e+00> : vector<16xf32>
    %280 = vector.multi_reduction <add>, %277, %cst_101 [1] : vector<16x32xf32> to vector<16xf32>
    %281 = vector.shape_cast %280 : vector<16xf32> to vector<16x1xf32>
    %cst_102 = arith.constant 3.200000e+01 : f32
    %282 = vector.broadcast %cst_102 : f32 to vector<16x1xf32>
    %283 = arith.divf %281, %282 : vector<16x1xf32>
    %284 = vector.broadcast %283 : vector<16x1xf32> to vector<16x32xf32>
    %285 = arith.subf %277, %284 : vector<16x32xf32>
    %286 = arith.mulf %285, %285 : vector<16x32xf32>
    %cst_103 = arith.constant dense<0.000000e+00> : vector<16xf32>
    %287 = vector.multi_reduction <add>, %286, %cst_103 [1] : vector<16x32xf32> to vector<16xf32>
    %288 = vector.shape_cast %287 : vector<16xf32> to vector<16x1xf32>
    %cst_104 = arith.constant 3.100000e+01 : f32
    %289 = vector.broadcast %cst_104 : f32 to vector<16x1xf32>
    %290 = arith.divf %288, %289 : vector<16x1xf32>
    %291 = math.sqrt %290 : vector<16x1xf32>
    %cst_105 = arith.constant 9.99999997E-7 : f32
    %292 = vector.broadcast %cst_105 : f32 to vector<16x1xf32>
    %293 = arith.addf %291, %292 : vector<16x1xf32>
    %294 = tpu.reciprocal %293 {approx = true} : vector<16x1xf32> -> vector<16x1xf32>
    %295 = vector.broadcast %283 : vector<16x1xf32> to vector<16x32xf32>
    %296 = arith.subf %277, %295 : vector<16x32xf32>
    %297 = vector.broadcast %278 : f32 to vector<16x32xf32>
    %298 = arith.mulf %297, %296 : vector<16x32xf32>
    %299 = vector.broadcast %294 : vector<16x1xf32> to vector<16x32xf32>
    %300 = arith.mulf %298, %299 : vector<16x32xf32>
    %301 = vector.broadcast %279 : f32 to vector<16x32xf32>
    %302 = arith.addf %300, %301 : vector<16x32xf32>
    %c1_106 = arith.constant 1 : index
    %c0_107 = arith.constant 0 : index
    %c0_108 = arith.constant 0 : index
    %303 = vector.load %arg6[%c1_106, %c0_107, %c0_108] : memref<2x32x64xf32, #tpu.memory_space<vmem>>, vector<1x32x64xf32>
    %304 = vector.shape_cast %303 : vector<1x32x64xf32> to vector<32x64xf32>
    %cst_109 = arith.constant dense<0.000000e+00> : vector<16x64xf32>
    %305 = tpu.matmul %302, %304, %cst_109 {dimension_numbers = #tpu.dot_dimension_numbers<[1], [0], [0], [1], [0, 0, 1, 1], [], []>} : vector<16x32xf32>, vector<32x64xf32>, vector<16x64xf32> -> vector<16x64xf32>
    %c1_110 = arith.constant 1 : index
    %c0_111 = arith.constant 0 : index
    %c0_112 = arith.constant 0 : index
    %306 = vector.load %arg7[%c1_110, %c0_111, %c0_112] : memref<2x1x64xf32, #tpu.memory_space<vmem>>, vector<1x1x64xf32>
    %307 = vector.shape_cast %306 : vector<1x1x64xf32> to vector<1x64xf32>
    %308 = vector.broadcast %307 : vector<1x64xf32> to vector<16x64xf32>
    %309 = arith.addf %305, %308 : vector<16x64xf32>
    %cst_113 = arith.constant 0.000000e+00 : f32
    %310 = vector.broadcast %cst_113 : f32 to vector<16x64xf32>
    %311 = arith.maximumf %309, %310 : vector<16x64xf32>
    %c1_114 = arith.constant 1 : index
    %c0_115 = arith.constant 0 : index
    %c0_116 = arith.constant 0 : index
    %312 = vector.load %arg8[%c1_114, %c0_115, %c0_116] : memref<2x64x32xf32, #tpu.memory_space<vmem>>, vector<1x64x32xf32>
    %313 = vector.shape_cast %312 : vector<1x64x32xf32> to vector<64x32xf32>
    %cst_117 = arith.constant dense<0.000000e+00> : vector<16x32xf32>
    %314 = tpu.matmul %311, %313, %cst_117 {dimension_numbers = #tpu.dot_dimension_numbers<[1], [0], [0], [1], [0, 0, 1, 1], [], []>} : vector<16x64xf32>, vector<64x32xf32>, vector<16x32xf32> -> vector<16x32xf32>
    %315 = arith.addf %277, %314 : vector<16x32xf32>
    %c1_118 = arith.constant 1 : index
    %c0_119 = arith.constant 0 : index
    %c0_120 = arith.constant 0 : index
    %316 = vector.load %arg9[%c1_118, %c0_119, %c0_120] : memref<2x1x32xf32, #tpu.memory_space<vmem>>, vector<1x1x32xf32>
    %317 = vector.shape_cast %316 : vector<1x1x32xf32> to vector<1x32xf32>
    %318 = vector.broadcast %317 : vector<1x32xf32> to vector<16x32xf32>
    %319 = arith.addf %315, %318 : vector<16x32xf32>
    %c8 = arith.constant 8 : index
    %320 = memref.load %arg10[%c8] : memref<10xf32, #tpu.memory_space<smem>>
    %c9 = arith.constant 9 : index
    %321 = memref.load %arg10[%c9] : memref<10xf32, #tpu.memory_space<smem>>
    %cst_121 = arith.constant dense<0.000000e+00> : vector<16xf32>
    %322 = vector.multi_reduction <add>, %319, %cst_121 [1] : vector<16x32xf32> to vector<16xf32>
    %323 = vector.shape_cast %322 : vector<16xf32> to vector<16x1xf32>
    %cst_122 = arith.constant 3.200000e+01 : f32
    %324 = vector.broadcast %cst_122 : f32 to vector<16x1xf32>
    %325 = arith.divf %323, %324 : vector<16x1xf32>
    %326 = vector.broadcast %325 : vector<16x1xf32> to vector<16x32xf32>
    %327 = arith.subf %319, %326 : vector<16x32xf32>
    %328 = arith.mulf %327, %327 : vector<16x32xf32>
    %cst_123 = arith.constant dense<0.000000e+00> : vector<16xf32>
    %329 = vector.multi_reduction <add>, %328, %cst_123 [1] : vector<16x32xf32> to vector<16xf32>
    %330 = vector.shape_cast %329 : vector<16xf32> to vector<16x1xf32>
    %cst_124 = arith.constant 3.100000e+01 : f32
    %331 = vector.broadcast %cst_124 : f32 to vector<16x1xf32>
    %332 = arith.divf %330, %331 : vector<16x1xf32>
    %333 = math.sqrt %332 : vector<16x1xf32>
    %cst_125 = arith.constant 9.99999997E-7 : f32
    %334 = vector.broadcast %cst_125 : f32 to vector<16x1xf32>
    %335 = arith.addf %333, %334 : vector<16x1xf32>
    %336 = tpu.reciprocal %335 {approx = true} : vector<16x1xf32> -> vector<16x1xf32>
    %337 = vector.broadcast %325 : vector<16x1xf32> to vector<16x32xf32>
    %338 = arith.subf %319, %337 : vector<16x32xf32>
    %339 = vector.broadcast %320 : f32 to vector<16x32xf32>
    %340 = arith.mulf %339, %338 : vector<16x32xf32>
    %341 = vector.broadcast %336 : vector<16x1xf32> to vector<16x32xf32>
    %342 = arith.mulf %340, %341 : vector<16x32xf32>
    %343 = vector.broadcast %321 : f32 to vector<16x32xf32>
    %344 = arith.addf %342, %343 : vector<16x32xf32>
    %c0_126 = arith.constant 0 : index
    %c0_127 = arith.constant 0 : index
    %345 = vector.load %arg11[%c0_126, %c0_127] : memref<16x32xf32, #tpu.memory_space<vmem>>, vector<16x32xf32>
    tpu.vector_store %arg11[%c0_126, %c0_127], %344 {strides = array<i32>} : memref<16x32xf32, #tpu.memory_space<vmem>>, vector<16x32xf32>,
    return
  }
}

</mosaic_0001>

<llo_original>
// kernel: tpu_custom_call.1
$region0: #{tpu_custom_call.1}
  #allocation0 [shape = 'u32[]', space=smem, size = 0x4, offset = 0x4, fixed_abs, tag = 'smem constant byte address 0x4 - core index']
  #allocation1 [shape = 'u32[144,128]{1,0:T(1,128)}', space=vmem, size = 0x12000, scoped, tag = 'internal scratch']
  %s0 = inlined_call_operand.hbm [shape: f32[16,32], index: 0, kind: input, shape index: {}]
  %s1 = inlined_call_operand.hbm [shape: f32[16,16], index: 1, kind: input, shape index: {}]
  %s2 = inlined_call_operand.vmem [shape: f32[2,32,96], index: 2, kind: input, shape index: {}]
  %s3 = inlined_call_operand.vmem [shape: f32[2,1,96], index: 3, kind: input, shape index: {}]
  %s4 = inlined_call_operand.vmem [shape: f32[2,32,32], index: 4, kind: input, shape index: {}]
  %s5 = inlined_call_operand.vmem [shape: f32[2,1,32], index: 5, kind: input, shape index: {}]
  %s6 = inlined_call_operand.vmem [shape: f32[2,32,64], index: 6, kind: input, shape index: {}]
  %s7 = inlined_call_operand.vmem [shape: f32[2,1,64], index: 7, kind: input, shape index: {}]
  %s8 = inlined_call_operand.vmem [shape: f32[2,64,32], index: 8, kind: input, shape index: {}]
  %s9 = inlined_call_operand.vmem [shape: f32[2,1,32], index: 9, kind: input, shape index: {}]
  %s10 = inlined_call_operand.vmem [shape: f32[10], index: 10, kind: input, shape index: {}]
  %s11 = inlined_call_operand.hbm [shape: f32[16,32], index: 11, kind: output, shape index: {}]
  %s12 = sld [smem:[#allocation0]]
  $region66: #{tpu_custom_call.1} parent=0
    _
  %s14 = ssub.s32 1, %s12
  %s15 = scalar_select 0, %s14, %s12
  $region1: #{tpu_custom_call.1} parent=0
    #allocation2 [shape = 'u8[8192]{0}', space=vmem, size = 0x2000, scoped, tag = 'input window, operand 0, single buffered']
    #allocation3 [shape = 's32[1]{0}', space=sflag, size = 0x4, scoped, tag = 'scoped memory for tpu_custom_call.1']
    #allocation4 [shape = 's32[1]{0}', space=sflag, size = 0x4, scoped, tag = 'scoped memory for tpu_custom_call.1']
    #allocation5 [shape = 's32[1]{0}', space=sflag, size = 0x4, scoped, tag = 'scoped memory for tpu_custom_call.1']
    #allocation6 [shape = 'u8[8192]{0}', space=vmem, size = 0x2000, scoped, tag = 'input window, operand 1, single buffered']
    #allocation7 [shape = 's32[1]{0}', space=sflag, size = 0x4, scoped, tag = 'scoped memory for tpu_custom_call.1']
    #allocation8 [shape = 'u8[512]{0}', space=smem, size = 0x200, scoped, tag = 'input window, operand 10, single buffered']
    #allocation9 [shape = 'u8[8192]{0}', space=vmem, size = 0x2000, scoped, tag = 'output window, operand 0, single buffered']
    %16 = vsyncpa [#allocation3], 0
    %17 = vsyncpa [#allocation7], 0
    %18 = vsyncpa [#allocation5], 0
    %19 = vsyncpa [#allocation4], 0
    // Predicated region
    $region2: #{tpu_custom_call.1} parent=1 // pred_check
      _
    $region3: #{tpu_custom_call.1} parent=1 // pred_check_branch
      %21 = sbr.rel (0) target = $region5
    $region4: #{tpu_custom_call.1} parent=1 // pred_region
      %s23 = ssub.s32 256, 256
      %24 = vsyncadd [#allocation3], %s23
      %s25 = sshll.u32 [#allocation2], 4
      %s26 = int_to_ptr.vmem [resolvable:$true] %s25
      %31 = dma.hbm_to_vmem [thread:$0]  %s0, 256, %s26, [#allocation3], 128, 128, 8
    $region5: #{tpu_custom_call.1} parent=1 // pred_fallthru
      _
    // Predicated region
    $region6: #{tpu_custom_call.1} parent=1 // pred_check
      _
    $region7: #{tpu_custom_call.1} parent=1 // pred_check_branch
      %33 = sbr.rel (0) target = $region9
    $region8: #{tpu_custom_call.1} parent=1 // pred_region
      %s35 = ssub.s32 256, 256
      %36 = vsyncadd [#allocation7], %s35
      %s37 = sshll.u32 [#allocation6], 4
      %s38 = int_to_ptr.vmem [resolvable:$true] %s37
      %43 = dma.hbm_to_vmem [thread:$0]  %s1, 256, %s38, [#allocation7], 128, 128, 8
    $region9: #{tpu_custom_call.1} parent=1 // pred_fallthru
      _
    // Predicated region
    $region10: #{tpu_custom_call.1} parent=1 // pred_check
      _
    $region11: #{tpu_custom_call.1} parent=1 // pred_check_branch
      %45 = sbr.rel (0) target = $region13
    $region12: #{tpu_custom_call.1} parent=1 // pred_region
      _
    $region13: #{tpu_custom_call.1} parent=1 // pred_fallthru
      _
    // Predicated region
    $region14: #{tpu_custom_call.1} parent=1 // pred_check
      _
    $region15: #{tpu_custom_call.1} parent=1 // pred_check_branch
      %47 = sbr.rel (0) target = $region17
    $region16: #{tpu_custom_call.1} parent=1 // pred_region
      _
    $region17: #{tpu_custom_call.1} parent=1 // pred_fallthru
      _
    // Predicated region
    $region18: #{tpu_custom_call.1} parent=1 // pred_check
      _
    $region19: #{tpu_custom_call.1} parent=1 // pred_check_branch
      %49 = sbr.rel (0) target = $region21
    $region20: #{tpu_custom_call.1} parent=1 // pred_region
      _
    $region21: #{tpu_custom_call.1} parent=1 // pred_fallthru
      _
    // Predicated region
    $region22: #{tpu_custom_call.1} parent=1 // pred_check
      _
    $region23: #{tpu_custom_call.1} parent=1 // pred_check_branch
      %51 = sbr.rel (0) target = $region25
    $region24: #{tpu_custom_call.1} parent=1 // pred_region
      _
    $region25: #{tpu_custom_call.1} parent=1 // pred_fallthru
      _
    // Predicated region
    $region26: #{tpu_custom_call.1} parent=1 // pred_check
      _
    $region27: #{tpu_custom_call.1} parent=1 // pred_check_branch
      %53 = sbr.rel (0) target = $region29
    $region28: #{tpu_custom_call.1} parent=1 // pred_region
      _
    $region29: #{tpu_custom_call.1} parent=1 // pred_fallthru
      _
    // Predicated region
    $region30: #{tpu_custom_call.1} parent=1 // pred_check
      _
    $region31: #{tpu_custom_call.1} parent=1 // pred_check_branch
      %55 = sbr.rel (0) target = $region33
    $region32: #{tpu_custom_call.1} parent=1 // pred_region
      _
    $region33: #{tpu_custom_call.1} parent=1 // pred_fallthru
      _
    // Predicated region
    $region34: #{tpu_custom_call.1} parent=1 // pred_check
      _
    $region35: #{tpu_custom_call.1} parent=1 // pred_check_branch
      %57 = sbr.rel (0) target = $region37
    $region36: #{tpu_custom_call.1} parent=1 // pred_region
      _
    $region37: #{tpu_custom_call.1} parent=1 // pred_fallthru
      _
    // Predicated region
    $region38: #{tpu_custom_call.1} parent=1 // pred_check
      _
    $region39: #{tpu_custom_call.1} parent=1 // pred_check_branch
      %59 = sbr.rel (0) target = $region41
    $region40: #{tpu_custom_call.1} parent=1 // pred_region
      _
    $region41: #{tpu_custom_call.1} parent=1 // pred_fallthru
      _
    // Predicated region
    $region42: #{tpu_custom_call.1} parent=1 // pred_check
      _
    $region43: #{tpu_custom_call.1} parent=1 // pred_check_branch
      %61 = sbr.rel (0) target = $region45
    $region44: #{tpu_custom_call.1} parent=1 // pred_region
      %s63 = ssub.s32 16, 16
      %64 = vsyncadd [#allocation5], %s63
      %s66 = sshll.u32 %s10, 4
      %s67 = int_to_ptr.vmem [resolvable:$true] %s66
      %69 = dma.vmem_to_smem %s67, 16, [#allocation8], [#allocation5]
    $region45: #{tpu_custom_call.1} parent=1 // pred_fallthru
      _
    // Predicated region
    $region46: #{tpu_custom_call.1} parent=1 // pred_check
      _
    $region47: #{tpu_custom_call.1} parent=1 // pred_check_branch
      %71 = sbr.rel (0) target = $region49
    $region48: #{tpu_custom_call.1} parent=1 // pred_region
      %72 = dma.done [#allocation3], 256
    $region49: #{tpu_custom_call.1} parent=1 // pred_fallthru
      _
    // Predicated region
    $region50: #{tpu_custom_call.1} parent=1 // pred_check
      _
    $region51: #{tpu_custom_call.1} parent=1 // pred_check_branch
      %74 = sbr.rel (0) target = $region53
    $region52: #{tpu_custom_call.1} parent=1 // pred_region
      %75 = dma.done [#allocation7], 256
    $region53: #{tpu_custom_call.1} parent=1 // pred_fallthru
      _
    // Predicated region
    $region54: #{tpu_custom_call.1} parent=1 // pred_check
      _
    $region55: #{tpu_custom_call.1} parent=1 // pred_check_branch
      %77 = sbr.rel (0) target = $region57
    $region56: #{tpu_custom_call.1} parent=1 // pred_region
      %78 = dma.done [#allocation5], 16
    $region57: #{tpu_custom_call.1} parent=1 // pred_fallthru
      _
    %79 = sfence
    %v80 = vld [vmem:[#allocation2] sm:$0xff]
    %v81 = vld [vmem:[#allocation2 + $0x8] sm:$0xff]
    %v82 = vld [vmem:[#allocation6] sm:$0xff]
    %v83 = vld [vmem:[#allocation6 + $0x8] sm:$0xff]
    %s84 = sld [smem:[#allocation8]]
    %s85 = sld [smem:[#allocation8 + $0x1]]
    %vm86 = vcmask 261120
    %v87 = vsel %vm86, %v80, 0.0
    %88 = vadd.xlane.f32.xlu0 %v87
    %v89 = vpop.xlane.xlu0 %88
    %v90 = vsel %vm86, %v81, 0.0
    %91 = vadd.xlane.f32.xlu0 %v90
    %v92 = vpop.xlane.xlu0 %91
    %v93 = vrcp.pop 32.0
    %v94 = vmul.f32 %v89, %v93
    %v95 = vmul.f32 %v92, %v93
    %v96 = vsub.f32 %v80, %v94
    %v97 = vsub.f32 %v81, %v95
    %v98 = vmul.f32 %v96, %v96
    %v99 = vmul.f32 %v97, %v97
    %v100 = vsel %vm86, %v98, 0.0
    %101 = vadd.xlane.f32.xlu0 %v100
    %v102 = vpop.xlane.xlu0 %101
    %v103 = vsel %vm86, %v99, 0.0
    %104 = vadd.xlane.f32.xlu0 %v103
    %v105 = vpop.xlane.xlu0 %104
    %v106 = vrcp.pop 31.0
    %v107 = vmul.f32 %v102, %v106
    %v108 = vmul.f32 %v105, %v106
    %v109 = vrsqrt.pop %v107
    %v110 = vmul.f32 %v107, %v109
    %vm111 = vcmp.eq.f32.partialorder %v107, inf
    %v112 = vsel %vm111, %v107, %v110
    %vm113 = vcmp.eq.f32.partialorder %v107, 0.0
    %v114 = vand.u32 %v107, 2147483648
    %v115 = vsel %vm113, %v114, %v112
    %v116 = vrsqrt.pop %v108
    %v117 = vmul.f32 %v108, %v116
    %vm118 = vcmp.eq.f32.partialorder %v108, inf
    %v119 = vsel %vm118, %v108, %v117
    %vm120 = vcmp.eq.f32.partialorder %v108, 0.0
    %v121 = vand.u32 %v108, 2147483648
    %v122 = vsel %vm120, %v121, %v119
    %v123 = vadd.f32 %v115, 1e-06
    %v124 = vadd.f32 %v122, 1e-06
    %v125 = vrcp.pop %v123
    %v126 = vrcp.pop %v124
    %v127 = vstv %s84
    %v128 = vmul.f32 %v127, %v96
    %v129 = vmul.f32 %v127, %v97
    %v130 = vmul.f32 %v128, %v125
    %v131 = vmul.f32 %v129, %v126
    %v132 = vstv %s85
    %v133 = vadd.f32 %v130, %v132
    %v134 = vadd.f32 %v131, %v132
    %v135 = vld [vmem:[%s2] sm:$0xff]
    %v136 = vld [vmem:[%s2 + $0x8] sm:$0xff]
    %v137 = vld [vmem:[%s2 + $0x10] sm:$0xff]
    %v138 = vld [vmem:[%s2 + $0x18] sm:$0xff]
    %v139 = vld [vmem:[%s3] sm:$0x1]
    %v141 = vlaneseq
    %v142 = vshrl.u32 %v141, 7
    %v143 = vsub.s32 0, %v142
    %v144 = vrot.slane %v139, %v143
    %v147 = vsel %vm86, %v133, 0
    %v150 = vsel %vm86, %v134, 0
    %152 = vmatprep.subr.mxu0 0.0
    %153 = vmatpush1.msra.mxu0 %v135
    %154 = vmatprep.subr.mxu0 0.0
    %155 = vmatpush1.msra.mxu0 %v136
    %156 = vmatprep.subr.mxu0 0.0
    %157 = vmatpush1.msra.mxu0 %v137
    %158 = vmatprep.subr.mxu0 0.0
    %159 = vmatpush1.msra.mxu0 %v138
    %160 = vmatprep.subr.mxu0 0.0
    %161 = vmatpush1.msra.mxu0 0.0
    %162 = vmatprep.subr.mxu0 0.0
    %163 = vmatpush1.msra.mxu0 0.0
    %164 = vmatprep.subr.mxu0 0.0
    %165 = vmatpush1.msra.mxu0 0.0
    %166 = vmatprep.subr.mxu0 0.0
    %167 = vmatpush1.msra.mxu0 0.0
    %168 = vmatprep.subr.mxu0 0.0
    %169 = vmatpush1.msra.mxu0 0.0
    %170 = vmatprep.subr.mxu0 0.0
    %171 = vmatpush1.msra.mxu0 0.0
    %172 = vmatprep.subr.mxu0 0.0
    %173 = vmatpush1.msra.mxu0 0.0
    %174 = vmatprep.subr.mxu0 0.0
    %175 = vmatpush1.msra.mxu0 0.0
    %176 = vmatprep.subr.mxu0 0.0
    %177 = vmatpush1.msra.mxu0 0.0
    %178 = vmatprep.subr.mxu0 0.0
    %179 = vmatpush1.msra.mxu0 0.0
    %180 = vmatprep.subr.mxu0 0.0
    %181 = vmatpush1.msra.mxu0 0.0
    %182 = vmatprep.subr.mxu0 0.0
    %183 = vmatpush1.msra.mxu0 0.0
    %184 = vmatprep.subr.mxu0 0.0
    %185 = vmatpush1.msra.mxu0 0.0
    %186 = vmatprep.subr.mxu0 0.0
    %187 = vmatpush1.msra.mxu0 0.0
    %188 = vmatprep.subr.mxu0 0.0
    %189 = vmatpush1.msra.mxu0 0.0
    %190 = vmatprep.subr.mxu0 0.0
    %191 = vmatpush1.msra.mxu0 0.0
    %192 = vmatprep.subr.mxu0 0.0
    %193 = vmatpush1.msra.mxu0 0.0
    %194 = vmatprep.subr.mxu0 0.0
    %195 = vmatpush1.msra.mxu0 0.0
    %196 = vmatprep.subr.mxu0 0.0
    %197 = vmatpush1.msra.mxu0 0.0
    %198 = vmatprep.subr.mxu0 0.0
    %199 = vmatpush1.msra.mxu0 0.0
    %200 = vmatprep.subr.mxu0 0.0
    %201 = vmatpush1.msra.mxu0 0.0
    %202 = vmatprep.subr.mxu0 0.0
    %203 = vmatpush1.msra.mxu0 0.0
    %204 = vmatprep.subr.mxu0 0.0
    %205 = vmatpush1.msra.mxu0 0.0
    %206 = vmatprep.subr.mxu0 0.0
    %207 = vmatpush1.msra.mxu0 0.0
    %208 = vmatprep.subr.mxu0 0.0
    %209 = vmatpush1.msra.mxu0 0.0
    %210 = vmatprep.subr.mxu0 0.0
    %211 = vmatpush1.msra.mxu0 0.0
    %212 = vmatprep.subr.mxu0 0.0
    %213 = vmatpush1.msra.mxu0 0.0
    %214 = vmatprep.subr.mxu0 0.0
    %215 = vmatpush1.msra.mxu0 0.0
    %216 = vmatprep.mubr.f32.mxu0 0.0
    %217 = vmatmul.mubr.f32.gmra.mrb[0].mxu0 %v147
    %v218 = vpop.f32.mrb[0].mxu0
    %v219 = vadd.f32 %v144, %v218
    %v220 = vpop.f32.mrb[0].mxu0
    %221 = vmatprep.mubr.f32.mxu0 0.0
    %222 = vmatmul.mubr.f32.gmra.mrb[0].mxu0 %v150
    %v223 = vpop.f32.mrb[0].mxu0
    %v224 = vadd.f32 %v144, %v223
    %v225 = vpop.f32.mrb[0].mxu0
    %226 = vdwg.mxu0
    %229 = vrot.lane.b32.xlu0 %v219, 96
    %v230 = vpop.permute.xlu0 %229
    %231 = vrot.lane.b32.xlu0 %v224, 96
    %v232 = vpop.permute.xlu0 %231
    %vm233 = vcmask 64512
    %v234 = vsel %vm233, %v219, 0
    %v236 = vsel %vm233, %v224, 0
    %v238 = vsel %vm233, %v230, 0
    %v240 = vsel %vm233, %v232, 0
    %242 = vmatprep.subr.mxu0 0.0
    %243 = vmatpush1.xpose.msra.mxu0 %v238
    %244 = vmatprep.subr.mxu0 0.0
    %245 = vmatpush1.xpose.msra.mxu0 %v240
    %246 = vmatprep.subr.mxu0 0.0
    %247 = vmatpush1.xpose.msra.mxu0 0.0
    %248 = vmatprep.subr.mxu0 0.0
    %249 = vmatpush1.xpose.msra.mxu0 0.0
    %250 = vmatprep.subr.mxu0 0.0
    %251 = vmatpush1.xpose.msra.mxu0 0.0
    %252 = vmatprep.subr.mxu0 0.0
    %253 = vmatpush1.xpose.msra.mxu0 0.0
    %254 = vmatprep.subr.mxu0 0.0
    %255 = vmatpush1.xpose.msra.mxu0 0.0
    %256 = vmatprep.subr.mxu0 0.0
    %257 = vmatpush1.xpose.msra.mxu0 0.0
    %258 = vmatprep.subr.mxu0 0.0
    %259 = vmatpush1.xpose.msra.mxu0 0.0
    %260 = vmatprep.subr.mxu0 0.0
    %261 = vmatpush1.xpose.msra.mxu0 0.0
    %262 = vmatprep.subr.mxu0 0.0
    %263 = vmatpush1.xpose.msra.mxu0 0.0
    %264 = vmatprep.subr.mxu0 0.0
    %265 = vmatpush1.xpose.msra.mxu0 0.0
    %266 = vmatprep.subr.mxu0 0.0
    %267 = vmatpush1.xpose.msra.mxu0 0.0
    %268 = vmatprep.subr.mxu0 0.0
    %269 = vmatpush1.xpose.msra.mxu0 0.0
    %270 = vmatprep.subr.mxu0 0.0
    %271 = vmatpush1.xpose.msra.mxu0 0.0
    %272 = vmatprep.subr.mxu0 0.0
    %273 = vmatpush1.xpose.msra.mxu0 0.0
    %274 = vmatprep.subr.mxu0 0.0
    %275 = vmatpush1.xpose.msra.mxu0 0.0
    %276 = vmatprep.subr.mxu0 0.0
    %277 = vmatpush1.xpose.msra.mxu0 0.0
    %278 = vmatprep.subr.mxu0 0.0
    %279 = vmatpush1.xpose.msra.mxu0 0.0
    %280 = vmatprep.subr.mxu0 0.0
    %281 = vmatpush1.xpose.msra.mxu0 0.0
    %282 = vmatprep.subr.mxu0 0.0
    %283 = vmatpush1.xpose.msra.mxu0 0.0
    %284 = vmatprep.subr.mxu0 0.0
    %285 = vmatpush1.xpose.msra.mxu0 0.0
    %286 = vmatprep.subr.mxu0 0.0
    %287 = vmatpush1.xpose.msra.mxu0 0.0
    %288 = vmatprep.subr.mxu0 0.0
    %289 = vmatpush1.xpose.msra.mxu0 0.0
    %290 = vmatprep.subr.mxu0 0.0
    %291 = vmatpush1.xpose.msra.mxu0 0.0
    %292 = vmatprep.subr.mxu0 0.0
    %293 = vmatpush1.xpose.msra.mxu0 0.0
    %294 = vmatprep.subr.mxu0 0.0
    %295 = vmatpush1.xpose.msra.mxu0 0.0
    %296 = vmatprep.subr.mxu0 0.0
    %297 = vmatpush1.xpose.msra.mxu0 0.0
    %298 = vmatprep.subr.mxu0 0.0
    %299 = vmatpush1.xpose.msra.mxu0 0.0
    %300 = vmatprep.subr.mxu0 0.0
    %301 = vmatpush1.xpose.msra.mxu0 0.0
    %302 = vmatprep.subr.mxu0 0.0
    %303 = vmatpush1.xpose.msra.mxu0 0.0
    %304 = vmatprep.subr.mxu0 0.0
    %305 = vmatpush1.xpose.msra.mxu0 0.0
    %306 = vmatprep.mubr.f32.mxu0 0.0
    %307 = vmatmul.mubr.f32.gmra.mrb[0].mxu0 %v234
    %v308 = vpop.f32.mrb[0].mxu0
    %v309 = vadd.f32 0.0, %v308
    %v310 = vpop.f32.mrb[0].mxu0
    %311 = vmatprep.mubr.f32.mxu0 0.0
    %312 = vmatmul.mubr.f32.gmra.mrb[0].mxu0 %v236
    %v313 = vpop.f32.mrb[0].mxu0
    %v314 = vadd.f32 0.0, %v313
    %v315 = vpop.f32.mrb[0].mxu0
    %316 = vdwg.mxu0
    %v317 = vmul.f32 %v309, 0.35355338
    %v318 = vmul.f32 %v314, 0.35355338
    %v319 = vadd.f32 %v317, %v82
    %v320 = vadd.f32 %v318, %v83
    %vm321 = vcmask 130048
    %v322 = vsel %vm321, %v319, -inf
    %323 = vmax.xlane.f32.xlu0 %v322
    %v324 = vpop.xlane.xlu0 %323
    %v325 = vsel %vm321, %v320, -inf
    %326 = vmax.xlane.f32.xlu0 %v325
    %v327 = vpop.xlane.xlu0 %326
    %v328 = vsub.f32 %v319, %v324
    %v329 = vsub.f32 %v320, %v327
    %v330 = vmul.f32 %v328, 1.442695
    %v331 = vpow.pop %v330
    %v332 = vmul.f32 %v329, 1.442695
    %v333 = vpow.pop %v332
    %v334 = vsel %vm321, %v331, 0.0
    %335 = vadd.xlane.f32.xlu0 %v334
    %v336 = vpop.xlane.xlu0 %335
    %v337 = vsel %vm321, %v333, 0.0
    %338 = vadd.xlane.f32.xlu0 %v337
    %v339 = vpop.xlane.xlu0 %338
    %v340 = vrcp.pop %v336
    %v341 = vrcp.pop %v339
    %v342 = vmul.f32 %v331, %v340
    %v343 = vmul.f32 %v333, %v341
    %344 = vrot.lane.b32.xlu0 %v219, 64
    %v345 = vpop.permute.xlu0 %344
    %346 = vrot.lane.b32.xlu0 %v224, 64
    %v347 = vpop.permute.xlu0 %346
    %v351 = vsel %vm321, %v342, 0
    %v354 = vsel %vm321, %v343, 0
    %356 = vmatprep.subr.mxu0 0.0
    %357 = vmatpush1.msra.mxu0 %v345
    %358 = vmatprep.subr.mxu0 0.0
    %359 = vmatpush1.msra.mxu0 %v347
    %360 = vmatprep.subr.mxu0 0.0
    %361 = vmatpush1.msra.mxu0 0.0
    %362 = vmatprep.subr.mxu0 0.0
    %363 = vmatpush1.msra.mxu0 0.0
    %364 = vmatprep.subr.mxu0 0.0
    %365 = vmatpush1.msra.mxu0 0.0
    %366 = vmatprep.subr.mxu0 0.0
    %367 = vmatpush1.msra.mxu0 0.0
    %368 = vmatprep.subr.mxu0 0.0
    %369 = vmatpush1.msra.mxu0 0.0
    %370 = vmatprep.subr.mxu0 0.0
    %371 = vmatpush1.msra.mxu0 0.0
    %372 = vmatprep.subr.mxu0 0.0
    %373 = vmatpush1.msra.mxu0 0.0
    %374 = vmatprep.subr.mxu0 0.0
    %375 = vmatpush1.msra.mxu0 0.0
    %376 = vmatprep.subr.mxu0 0.0
    %377 = vmatpush1.msra.mxu0 0.0
    %378 = vmatprep.subr.mxu0 0.0
    %379 = vmatpush1.msra.mxu0 0.0
    %380 = vmatprep.subr.mxu0 0.0
    %381 = vmatpush1.msra.mxu0 0.0
    %382 = vmatprep.subr.mxu0 0.0
    %383 = vmatpush1.msra.mxu0 0.0
    %384 = vmatprep.subr.mxu0 0.0
    %385 = vmatpush1.msra.mxu0 0.0
    %386 = vmatprep.subr.mxu0 0.0
    %387 = vmatpush1.msra.mxu0 0.0
    %388 = vmatprep.subr.mxu0 0.0
    %389 = vmatpush1.msra.mxu0 0.0
    %390 = vmatprep.subr.mxu0 0.0
    %391 = vmatpush1.msra.mxu0 0.0
    %392 = vmatprep.subr.mxu0 0.0
    %393 = vmatpush1.msra.mxu0 0.0
    %394 = vmatprep.subr.mxu0 0.0
    %395 = vmatpush1.msra.mxu0 0.0
    %396 = vmatprep.subr.mxu0 0.0
    %397 = vmatpush1.msra.mxu0 0.0
    %398 = vmatprep.subr.mxu0 0.0
    %399 = vmatpush1.msra.mxu0 0.0
    %400 = vmatprep.subr.mxu0 0.0
    %401 = vmatpush1.msra.mxu0 0.0
    %402 = vmatprep.subr.mxu0 0.0
    %403 = vmatpush1.msra.mxu0 0.0
    %404 = vmatprep.subr.mxu0 0.0
    %405 = vmatpush1.msra.mxu0 0.0
    %406 = vmatprep.subr.mxu0 0.0
    %407 = vmatpush1.msra.mxu0 0.0
    %408 = vmatprep.subr.mxu0 0.0
    %409 = vmatpush1.msra.mxu0 0.0
    %410 = vmatprep.subr.mxu0 0.0
    %411 = vmatpush1.msra.mxu0 0.0
    %412 = vmatprep.subr.mxu0 0.0
    %413 = vmatpush1.msra.mxu0 0.0
    %414 = vmatprep.subr.mxu0 0.0
    %415 = vmatpush1.msra.mxu0 0.0
    %416 = vmatprep.subr.mxu0 0.0
    %417 = vmatpush1.msra.mxu0 0.0
    %418 = vmatprep.subr.mxu0 0.0
    %419 = vmatpush1.msra.mxu0 0.0
    %420 = vmatprep.mubr.f32.mxu0 0.0
    %421 = vmatmul.mubr.f32.gmra.mrb[0].mxu0 %v351
    %v422 = vpop.f32.mrb[0].mxu0
    %v423 = vadd.f32 0.0, %v422
    %v424 = vpop.f32.mrb[0].mxu0
    %425 = vmatprep.mubr.f32.mxu0 0.0
    %426 = vmatmul.mubr.f32.gmra.mrb[0].mxu0 %v354
    %v427 = vpop.f32.mrb[0].mxu0
    %v428 = vadd.f32 0.0, %v427
    %v429 = vpop.f32.mrb[0].mxu0
    %430 = vdwg.mxu0
    %431 = vrot.lane.b32.xlu0 %v219, 120
    %v432 = vpop.permute.xlu0 %431
    %433 = vrot.lane.b32.xlu0 %v224, 120
    %v434 = vpop.permute.xlu0 %433
    %435 = vrot.lane.b32.xlu0 %v219, 88
    %v436 = vpop.permute.xlu0 %435
    %437 = vrot.lane.b32.xlu0 %v224, 88
    %v438 = vpop.permute.xlu0 %437
    %v439 = vsel %vm233, %v432, 0
    %v441 = vsel %vm233, %v434, 0
    %v443 = vsel %vm233, %v436, 0
    %v445 = vsel %vm233, %v438, 0
    %447 = vmatprep.subr.mxu0 0.0
    %448 = vmatpush1.xpose.msra.mxu0 %v443
    %449 = vmatprep.subr.mxu0 0.0
    %450 = vmatpush1.xpose.msra.mxu0 %v445
    %451 = vmatprep.subr.mxu0 0.0
    %452 = vmatpush1.xpose.msra.mxu0 0.0
    %453 = vmatprep.subr.mxu0 0.0
    %454 = vmatpush1.xpose.msra.mxu0 0.0
    %455 = vmatprep.subr.mxu0 0.0
    %456 = vmatpush1.xpose.msra.mxu0 0.0
    %457 = vmatprep.subr.mxu0 0.0
    %458 = vmatpush1.xpose.msra.mxu0 0.0
    %459 = vmatprep.subr.mxu0 0.0
    %460 = vmatpush1.xpose.msra.mxu0 0.0
    %461 = vmatprep.subr.mxu0 0.0
    %462 = vmatpush1.xpose.msra.mxu0 0.0
    %463 = vmatprep.subr.mxu0 0.0
    %464 = vmatpush1.xpose.msra.mxu0 0.0
    %465 = vmatprep.subr.mxu0 0.0
    %466 = vmatpush1.xpose.msra.mxu0 0.0
    %467 = vmatprep.subr.mxu0 0.0
    %468 = vmatpush1.xpose.msra.mxu0 0.0
    %469 = vmatprep.subr.mxu0 0.0
    %470 = vmatpush1.xpose.msra.mxu0 0.0
    %471 = vmatprep.subr.mxu0 0.0
    %472 = vmatpush1.xpose.msra.mxu0 0.0
    %473 = vmatprep.subr.mxu0 0.0
    %474 = vmatpush1.xpose.msra.mxu0 0.0
    %475 = vmatprep.subr.mxu0 0.0
    %476 = vmatpush1.xpose.msra.mxu0 0.0
    %477 = vmatprep.subr.mxu0 0.0
    %478 = vmatpush1.xpose.msra.mxu0 0.0
    %479 = vmatprep.subr.mxu0 0.0
    %480 = vmatpush1.xpose.msra.mxu0 0.0
    %481 = vmatprep.subr.mxu0 0.0
    %482 = vmatpush1.xpose.msra.mxu0 0.0
    %483 = vmatprep.subr.mxu0 0.0
    %484 = vmatpush1.xpose.msra.mxu0 0.0
    %485 = vmatprep.subr.mxu0 0.0
    %486 = vmatpush1.xpose.msra.mxu0 0.0
    %487 = vmatprep.subr.mxu0 0.0
    %488 = vmatpush1.xpose.msra.mxu0 0.0
    %489 = vmatprep.subr.mxu0 0.0
    %490 = vmatpush1.xpose.msra.mxu0 0.0
    %491 = vmatprep.subr.mxu0 0.0
    %492 = vmatpush1.xpose.msra.mxu0 0.0
    %493 = vmatprep.subr.mxu0 0.0
    %494 = vmatpush1.xpose.msra.mxu0 0.0
    %495 = vmatprep.subr.mxu0 0.0
    %496 = vmatpush1.xpose.msra.mxu0 0.0
    %497 = vmatprep.subr.mxu0 0.0
    %498 = vmatpush1.xpose.msra.mxu0 0.0
    %499 = vmatprep.subr.mxu0 0.0
    %500 = vmatpush1.xpose.msra.mxu0 0.0
    %501 = vmatprep.subr.mxu0 0.0
    %502 = vmatpush1.xpose.msra.mxu0 0.0
    %503 = vmatprep.subr.mxu0 0.0
    %504 = vmatpush1.xpose.msra.mxu0 0.0
    %505 = vmatprep.subr.mxu0 0.0
    %506 = vmatpush1.xpose.msra.mxu0 0.0
    %507 = vmatprep.subr.mxu0 0.0
    %508 = vmatpush1.xpose.msra.mxu0 0.0
    %509 = vmatprep.subr.mxu0 0.0
    %510 = vmatpush1.xpose.msra.mxu0 0.0
    %511 = vmatprep.mubr.f32.mxu0 0.0
    %512 = vmatmul.mubr.f32.gmra.mrb[0].mxu0 %v439
    %v513 = vpop.f32.mrb[0].mxu0
    %v514 = vadd.f32 0.0, %v513
    %v515 = vpop.f32.mrb[0].mxu0
    %516 = vmatprep.mubr.f32.mxu0 0.0
    %517 = vmatmul.mubr.f32.gmra.mrb[0].mxu0 %v441
    %v518 = vpop.f32.mrb[0].mxu0
    %v519 = vadd.f32 0.0, %v518
    %v520 = vpop.f32.mrb[0].mxu0
    %521 = vdwg.mxu0
    %v522 = vmul.f32 %v514, 0.35355338
    %v523 = vmul.f32 %v519, 0.35355338
    %v524 = vadd.f32 %v522, %v82
    %v525 = vadd.f32 %v523, %v83
    %v526 = vsel %vm321, %v524, -inf
    %527 = vmax.xlane.f32.xlu0 %v526
    %v528 = vpop.xlane.xlu0 %527
    %v529 = vsel %vm321, %v525, -inf
    %530 = vmax.xlane.f32.xlu0 %v529
    %v531 = vpop.xlane.xlu0 %530
    %v532 = vsub.f32 %v524, %v528
    %v533 = vsub.f32 %v525, %v531
    %v534 = vmul.f32 %v532, 1.442695
    %v535 = vpow.pop %v534
    %v536 = vmul.f32 %v533, 1.442695
    %v537 = vpow.pop %v536
    %v538 = vsel %vm321, %v535, 0.0
    %539 = vadd.xlane.f32.xlu0 %v538
    %v540 = vpop.xlane.xlu0 %539
    %v541 = vsel %vm321, %v537, 0.0
    %542 = vadd.xlane.f32.xlu0 %v541
    %v543 = vpop.xlane.xlu0 %542
    %v544 = vrcp.pop %v540
    %v545 = vrcp.pop %v543
    %v546 = vmul.f32 %v535, %v544
    %v547 = vmul.f32 %v537, %v545
    %548 = vrot.lane.b32.xlu0 %v219, 56
    %v549 = vpop.permute.xlu0 %548
    %550 = vrot.lane.b32.xlu0 %v224, 56
    %v551 = vpop.permute.xlu0 %550
    %v555 = vsel %vm321, %v546, 0
    %v558 = vsel %vm321, %v547, 0
    %560 = vmatprep.subr.mxu0 0.0
    %561 = vmatpush1.msra.mxu0 %v549
    %562 = vmatprep.subr.mxu0 0.0
    %563 = vmatpush1.msra.mxu0 %v551
    %564 = vmatprep.subr.mxu0 0.0
    %565 = vmatpush1.msra.mxu0 0.0
    %566 = vmatprep.subr.mxu0 0.0
    %567 = vmatpush1.msra.mxu0 0.0
    %568 = vmatprep.subr.mxu0 0.0
    %569 = vmatpush1.msra.mxu0 0.0
    %570 = vmatprep.subr.mxu0 0.0
    %571 = vmatpush1.msra.mxu0 0.0
    %572 = vmatprep.subr.mxu0 0.0
    %573 = vmatpush1.msra.mxu0 0.0
    %574 = vmatprep.subr.mxu0 0.0
    %575 = vmatpush1.msra.mxu0 0.0
    %576 = vmatprep.subr.mxu0 0.0
    %577 = vmatpush1.msra.mxu0 0.0
    %578 = vmatprep.subr.mxu0 0.0
    %579 = vmatpush1.msra.mxu0 0.0
    %580 = vmatprep.subr.mxu0 0.0
    %581 = vmatpush1.msra.mxu0 0.0
    %582 = vmatprep.subr.mxu0 0.0
    %583 = vmatpush1.msra.mxu0 0.0
    %584 = vmatprep.subr.mxu0 0.0
    %585 = vmatpush1.msra.mxu0 0.0
    %586 = vmatprep.subr.mxu0 0.0
    %587 = vmatpush1.msra.mxu0 0.0
    %588 = vmatprep.subr.mxu0 0.0
    %589 = vmatpush1.msra.mxu0 0.0
    %590 = vmatprep.subr.mxu0 0.0
    %591 = vmatpush1.msra.mxu0 0.0
    %592 = vmatprep.subr.mxu0 0.0
    %593 = vmatpush1.msra.mxu0 0.0
    %594 = vmatprep.subr.mxu0 0.0
    %595 = vmatpush1.msra.mxu0 0.0
    %596 = vmatprep.subr.mxu0 0.0
    %597 = vmatpush1.msra.mxu0 0.0
    %598 = vmatprep.subr.mxu0 0.0
    %599 = vmatpush1.msra.mxu0 0.0
    %600 = vmatprep.subr.mxu0 0.0
    %601 = vmatpush1.msra.mxu0 0.0
    %602 = vmatprep.subr.mxu0 0.0
    %603 = vmatpush1.msra.mxu0 0.0
    %604 = vmatprep.subr.mxu0 0.0
    %605 = vmatpush1.msra.mxu0 0.0
    %606 = vmatprep.subr.mxu0 0.0
    %607 = vmatpush1.msra.mxu0 0.0
    %608 = vmatprep.subr.mxu0 0.0
    %609 = vmatpush1.msra.mxu0 0.0
    %610 = vmatprep.subr.mxu0 0.0
    %611 = vmatpush1.msra.mxu0 0.0
    %612 = vmatprep.subr.mxu0 0.0
    %613 = vmatpush1.msra.mxu0 0.0
    %614 = vmatprep.subr.mxu0 0.0
    %615 = vmatpush1.msra.mxu0 0.0
    %616 = vmatprep.subr.mxu0 0.0
    %617 = vmatpush1.msra.mxu0 0.0
    %618 = vmatprep.subr.mxu0 0.0
    %619 = vmatpush1.msra.mxu0 0.0
    %620 = vmatprep.subr.mxu0 0.0
    %621 = vmatpush1.msra.mxu0 0.0
    %622 = vmatprep.subr.mxu0 0.0
    %623 = vmatpush1.msra.mxu0 0.0
    %624 = vmatprep.mubr.f32.mxu0 0.0
    %625 = vmatmul.mubr.f32.gmra.mrb[0].mxu0 %v555
    %v626 = vpop.f32.mrb[0].mxu0
    %v627 = vadd.f32 0.0, %v626
    %v628 = vpop.f32.mrb[0].mxu0
    %629 = vmatprep.mubr.f32.mxu0 0.0
    %630 = vmatmul.mubr.f32.gmra.mrb[0].mxu0 %v558
    %v631 = vpop.f32.mrb[0].mxu0
    %v632 = vadd.f32 0.0, %v631
    %v633 = vpop.f32.mrb[0].mxu0
    %634 = vdwg.mxu0
    %635 = vrot.lane.b32.xlu0 %v219, 112
    %v636 = vpop.permute.xlu0 %635
    %637 = vrot.lane.b32.xlu0 %v224, 112
    %v638 = vpop.permute.xlu0 %637
    %639 = vrot.lane.b32.xlu0 %v219, 80
    %v640 = vpop.permute.xlu0 %639
    %641 = vrot.lane.b32.xlu0 %v224, 80
    %v642 = vpop.permute.xlu0 %641
    %v643 = vsel %vm233, %v636, 0
    %v645 = vsel %vm233, %v638, 0
    %v647 = vsel %vm233, %v640, 0
    %v649 = vsel %vm233, %v642, 0
    %651 = vmatprep.subr.mxu0 0.0
    %652 = vmatpush1.xpose.msra.mxu0 %v647
    %653 = vmatprep.subr.mxu0 0.0
    %654 = vmatpush1.xpose.msra.mxu0 %v649
    %655 = vmatprep.subr.mxu0 0.0
    %656 = vmatpush1.xpose.msra.mxu0 0.0
    %657 = vmatprep.subr.mxu0 0.0
    %658 = vmatpush1.xpose.msra.mxu0 0.0
    %659 = vmatprep.subr.mxu0 0.0
    %660 = vmatpush1.xpose.msra.mxu0 0.0
    %661 = vmatprep.subr.mxu0 0.0
    %662 = vmatpush1.xpose.msra.mxu0 0.0
    %663 = vmatprep.subr.mxu0 0.0
    %664 = vmatpush1.xpose.msra.mxu0 0.0
    %665 = vmatprep.subr.mxu0 0.0
    %666 = vmatpush1.xpose.msra.mxu0 0.0
    %667 = vmatprep.subr.mxu0 0.0
    %668 = vmatpush1.xpose.msra.mxu0 0.0
    %669 = vmatprep.subr.mxu0 0.0
    %670 = vmatpush1.xpose.msra.mxu0 0.0
    %671 = vmatprep.subr.mxu0 0.0
    %672 = vmatpush1.xpose.msra.mxu0 0.0
    %673 = vmatprep.subr.mxu0 0.0
    %674 = vmatpush1.xpose.msra.mxu0 0.0
    %675 = vmatprep.subr.mxu0 0.0
    %676 = vmatpush1.xpose.msra.mxu0 0.0
    %677 = vmatprep.subr.mxu0 0.0
    %678 = vmatpush1.xpose.msra.mxu0 0.0
    %679 = vmatprep.subr.mxu0 0.0
    %680 = vmatpush1.xpose.msra.mxu0 0.0
    %681 = vmatprep.subr.mxu0 0.0
    %682 = vmatpush1.xpose.msra.mxu0 0.0
    %683 = vmatprep.subr.mxu0 0.0
    %684 = vmatpush1.xpose.msra.mxu0 0.0
    %685 = vmatprep.subr.mxu0 0.0
    %686 = vmatpush1.xpose.msra.mxu0 0.0
    %687 = vmatprep.subr.mxu0 0.0
    %688 = vmatpush1.xpose.msra.mxu0 0.0
    %689 = vmatprep.subr.mxu0 0.0
    %690 = vmatpush1.xpose.msra.mxu0 0.0
    %691 = vmatprep.subr.mxu0 0.0
    %692 = vmatpush1.xpose.msra.mxu0 0.0
    %693 = vmatprep.subr.mxu0 0.0
    %694 = vmatpush1.xpose.msra.mxu0 0.0
    %695 = vmatprep.subr.mxu0 0.0
    %696 = vmatpush1.xpose.msra.mxu0 0.0
    %697 = vmatprep.subr.mxu0 0.0
    %698 = vmatpush1.xpose.msra.mxu0 0.0
    %699 = vmatprep.subr.mxu0 0.0
    %700 = vmatpush1.xpose.msra.mxu0 0.0
    %701 = vmatprep.subr.mxu0 0.0
    %702 = vmatpush1.xpose.msra.mxu0 0.0
    %703 = vmatprep.subr.mxu0 0.0
    %704 = vmatpush1.xpose.msra.mxu0 0.0
    %705 = vmatprep.subr.mxu0 0.0
    %706 = vmatpush1.xpose.msra.mxu0 0.0
    %707 = vmatprep.subr.mxu0 0.0
    %708 = vmatpush1.xpose.msra.mxu0 0.0
    %709 = vmatprep.subr.mxu0 0.0
    %710 = vmatpush1.xpose.msra.mxu0 0.0
    %711 = vmatprep.subr.mxu0 0.0
    %712 = vmatpush1.xpose.msra.mxu0 0.0
    %713 = vmatprep.subr.mxu0 0.0
    %714 = vmatpush1.xpose.msra.mxu0 0.0
    %715 = vmatprep.mubr.f32.mxu0 0.0
    %716 = vmatmul.mubr.f32.gmra.mrb[0].mxu0 %v643
    %v717 = vpop.f32.mrb[0].mxu0
    %v718 = vadd.f32 0.0, %v717
    %v719 = vpop.f32.mrb[0].mxu0
    %720 = vmatprep.mubr.f32.mxu0 0.0
    %721 = vmatmul.mubr.f32.gmra.mrb[0].mxu0 %v645
    %v722 = vpop.f32.mrb[0].mxu0
    %v723 = vadd.f32 0.0, %v722
    %v724 = vpop.f32.mrb[0].mxu0
    %725 = vdwg.mxu0
    %v726 = vmul.f32 %v718, 0.35355338
    %v727 = vmul.f32 %v723, 0.35355338
    %v728 = vadd.f32 %v726, %v82
    %v729 = vadd.f32 %v727, %v83
    %v730 = vsel %vm321, %v728, -inf
    %731 = vmax.xlane.f32.xlu0 %v730
    %v732 = vpop.xlane.xlu0 %731
    %v733 = vsel %vm321, %v729, -inf
    %734 = vmax.xlane.f32.xlu0 %v733
    %v735 = vpop.xlane.xlu0 %734
    %v736 = vsub.f32 %v728, %v732
    %v737 = vsub.f32 %v729, %v735
    %v738 = vmul.f32 %v736, 1.442695
    %v739 = vpow.pop %v738
    %v740 = vmul.f32 %v737, 1.442695
    %v741 = vpow.pop %v740
    %v742 = vsel %vm321, %v739, 0.0
    %743 = vadd.xlane.f32.xlu0 %v742
    %v744 = vpop.xlane.xlu0 %743
    %v745 = vsel %vm321, %v741, 0.0
    %746 = vadd.xlane.f32.xlu0 %v745
    %v747 = vpop.xlane.xlu0 %746
    %v748 = vrcp.pop %v744
    %v749 = vrcp.pop %v747
    %v750 = vmul.f32 %v739, %v748
    %v751 = vmul.f32 %v741, %v749
    %752 = vrot.lane.b32.xlu0 %v219, 48
    %v753 = vpop.permute.xlu0 %752
    %754 = vrot.lane.b32.xlu0 %v224, 48
    %v755 = vpop.permute.xlu0 %754
    %v759 = vsel %vm321, %v750, 0
    %v762 = vsel %vm321, %v751, 0
    %764 = vmatprep.subr.mxu0 0.0
    %765 = vmatpush1.msra.mxu0 %v753
    %766 = vmatprep.subr.mxu0 0.0
    %767 = vmatpush1.msra.mxu0 %v755
    %768 = vmatprep.subr.mxu0 0.0
    %769 = vmatpush1.msra.mxu0 0.0
    %770 = vmatprep.subr.mxu0 0.0
    %771 = vmatpush1.msra.mxu0 0.0
    %772 = vmatprep.subr.mxu0 0.0
    %773 = vmatpush1.msra.mxu0 0.0
    %774 = vmatprep.subr.mxu0 0.0
    %775 = vmatpush1.msra.mxu0 0.0
    %776 = vmatprep.subr.mxu0 0.0
    %777 = vmatpush1.msra.mxu0 0.0
    %778 = vmatprep.subr.mxu0 0.0
    %779 = vmatpush1.msra.mxu0 0.0
    %780 = vmatprep.subr.mxu0 0.0
    %781 = vmatpush1.msra.mxu0 0.0
    %782 = vmatprep.subr.mxu0 0.0
    %783 = vmatpush1.msra.mxu0 0.0
    %784 = vmatprep.subr.mxu0 0.0
    %785 = vmatpush1.msra.mxu0 0.0
    %786 = vmatprep.subr.mxu0 0.0
    %787 = vmatpush1.msra.mxu0 0.0
    %788 = vmatprep.subr.mxu0 0.0
    %789 = vmatpush1.msra.mxu0 0.0
    %790 = vmatprep.subr.mxu0 0.0
    %791 = vmatpush1.msra.mxu0 0.0
    %792 = vmatprep.subr.mxu0 0.0
    %793 = vmatpush1.msra.mxu0 0.0
    %794 = vmatprep.subr.mxu0 0.0
    %795 = vmatpush1.msra.mxu0 0.0
    %796 = vmatprep.subr.mxu0 0.0
    %797 = vmatpush1.msra.mxu0 0.0
    %798 = vmatprep.subr.mxu0 0.0
    %799 = vmatpush1.msra.mxu0 0.0
    %800 = vmatprep.subr.mxu0 0.0
    %801 = vmatpush1.msra.mxu0 0.0
    %802 = vmatprep.subr.mxu0 0.0
    %803 = vmatpush1.msra.mxu0 0.0
    %804 = vmatprep.subr.mxu0 0.0
    %805 = vmatpush1.msra.mxu0 0.0
    %806 = vmatprep.subr.mxu0 0.0
    %807 = vmatpush1.msra.mxu0 0.0
    %808 = vmatprep.subr.mxu0 0.0
    %809 = vmatpush1.msra.mxu0 0.0
    %810 = vmatprep.subr.mxu0 0.0
    %811 = vmatpush1.msra.mxu0 0.0
    %812 = vmatprep.subr.mxu0 0.0
    %813 = vmatpush1.msra.mxu0 0.0
    %814 = vmatprep.subr.mxu0 0.0
    %815 = vmatpush1.msra.mxu0 0.0
    %816 = vmatprep.subr.mxu0 0.0
    %817 = vmatpush1.msra.mxu0 0.0
    %818 = vmatprep.subr.mxu0 0.0
    %819 = vmatpush1.msra.mxu0 0.0
    %820 = vmatprep.subr.mxu0 0.0
    %821 = vmatpush1.msra.mxu0 0.0
    %822 = vmatprep.subr.mxu0 0.0
    %823 = vmatpush1.msra.mxu0 0.0
    %824 = vmatprep.subr.mxu0 0.0
    %825 = vmatpush1.msra.mxu0 0.0
    %826 = vmatprep.subr.mxu0 0.0
    %827 = vmatpush1.msra.mxu0 0.0
    %828 = vmatprep.mubr.f32.mxu0 0.0
    %829 = vmatmul.mubr.f32.gmra.mrb[0].mxu0 %v759
    %v830 = vpop.f32.mrb[0].mxu0
    %v831 = vadd.f32 0.0, %v830
    %v832 = vpop.f32.mrb[0].mxu0
    %833 = vmatprep.mubr.f32.mxu0 0.0
    %834 = vmatmul.mubr.f32.gmra.mrb[0].mxu0 %v762
    %v835 = vpop.f32.mrb[0].mxu0
    %v836 = vadd.f32 0.0, %v835
    %v837 = vpop.f32.mrb[0].mxu0
    %838 = vdwg.mxu0
    %839 = vrot.lane.b32.xlu0 %v219, 104
    %v840 = vpop.permute.xlu0 %839
    %841 = vrot.lane.b32.xlu0 %v224, 104
    %v842 = vpop.permute.xlu0 %841
    %843 = vrot.lane.b32.xlu0 %v219, 72
    %v844 = vpop.permute.xlu0 %843
    %845 = vrot.lane.b32.xlu0 %v224, 72
    %v846 = vpop.permute.xlu0 %845
    %v847 = vsel %vm233, %v840, 0
    %v849 = vsel %vm233, %v842, 0
    %v851 = vsel %vm233, %v844, 0
    %v853 = vsel %vm233, %v846, 0
    %855 = vmatprep.subr.mxu0 0.0
    %856 = vmatpush1.xpose.msra.mxu0 %v851
    %857 = vmatprep.subr.mxu0 0.0
    %858 = vmatpush1.xpose.msra.mxu0 %v853
    %859 = vmatprep.subr.mxu0 0.0
    %860 = vmatpush1.xpose.msra.mxu0 0.0
    %861 = vmatprep.subr.mxu0 0.0
    %862 = vmatpush1.xpose.msra.mxu0 0.0
    %863 = vmatprep.subr.mxu0 0.0
    %864 = vmatpush1.xpose.msra.mxu0 0.0
    %865 = vmatprep.subr.mxu0 0.0
    %866 = vmatpush1.xpose.msra.mxu0 0.0
    %867 = vmatprep.subr.mxu0 0.0
    %868 = vmatpush1.xpose.msra.mxu0 0.0
    %869 = vmatprep.subr.mxu0 0.0
    %870 = vmatpush1.xpose.msra.mxu0 0.0
    %871 = vmatprep.subr.mxu0 0.0
    %872 = vmatpush1.xpose.msra.mxu0 0.0
    %873 = vmatprep.subr.mxu0 0.0
    %874 = vmatpush1.xpose.msra.mxu0 0.0
    %875 = vmatprep.subr.mxu0 0.0
    %876 = vmatpush1.xpose.msra.mxu0 0.0
    %877 = vmatprep.subr.mxu0 0.0
    %878 = vmatpush1.xpose.msra.mxu0 0.0
    %879 = vmatprep.subr.mxu0 0.0
    %880 = vmatpush1.xpose.msra.mxu0 0.0
    %881 = vmatprep.subr.mxu0 0.0
    %882 = vmatpush1.xpose.msra.mxu0 0.0
    %883 = vmatprep.subr.mxu0 0.0
    %884 = vmatpush1.xpose.msra.mxu0 0.0
    %885 = vmatprep.subr.mxu0 0.0
    %886 = vmatpush1.xpose.msra.mxu0 0.0
    %887 = vmatprep.subr.mxu0 0.0
    %888 = vmatpush1.xpose.msra.mxu0 0.0
    %889 = vmatprep.subr.mxu0 0.0
    %890 = vmatpush1.xpose.msra.mxu0 0.0
    %891 = vmatprep.subr.mxu0 0.0
    %892 = vmatpush1.xpose.msra.mxu0 0.0
    %893 = vmatprep.subr.mxu0 0.0
    %894 = vmatpush1.xpose.msra.mxu0 0.0
    %895 = vmatprep.subr.mxu0 0.0
    %896 = vmatpush1.xpose.msra.mxu0 0.0
    %897 = vmatprep.subr.mxu0 0.0
    %898 = vmatpush1.xpose.msra.mxu0 0.0
    %899 = vmatprep.subr.mxu0 0.0
    %900 = vmatpush1.xpose.msra.mxu0 0.0
    %901 = vmatprep.subr.mxu0 0.0
    %902 = vmatpush1.xpose.msra.mxu0 0.0
    %903 = vmatprep.subr.mxu0 0.0
    %904 = vmatpush1.xpose.msra.mxu0 0.0
    %905 = vmatprep.subr.mxu0 0.0
    %906 = vmatpush1.xpose.msra.mxu0 0.0
    %907 = vmatprep.subr.mxu0 0.0
    %908 = vmatpush1.xpose.msra.mxu0 0.0
    %909 = vmatprep.subr.mxu0 0.0
    %910 = vmatpush1.xpose.msra.mxu0 0.0
    %911 = vmatprep.subr.mxu0 0.0
    %912 = vmatpush1.xpose.msra.mxu0 0.0
    %913 = vmatprep.subr.mxu0 0.0
    %914 = vmatpush1.xpose.msra.mxu0 0.0
    %915 = vmatprep.subr.mxu0 0.0
    %916 = vmatpush1.xpose.msra.mxu0 0.0
    %917 = vmatprep.subr.mxu0 0.0
    %918 = vmatpush1.xpose.msra.mxu0 0.0
    %919 = vmatprep.mubr.f32.mxu0 0.0
    %920 = vmatmul.mubr.f32.gmra.mrb[0].mxu0 %v847
    %v921 = vpop.f32.mrb[0].mxu0
    %v922 = vadd.f32 0.0, %v921
    %v923 = vpop.f32.mrb[0].mxu0
    %924 = vmatprep.mubr.f32.mxu0 0.0
    %925 = vmatmul.mubr.f32.gmra.mrb[0].mxu0 %v849
    %v926 = vpop.f32.mrb[0].mxu0
    %v927 = vadd.f32 0.0, %v926
    %v928 = vpop.f32.mrb[0].mxu0
    %929 = vdwg.mxu0
    %v930 = vmul.f32 %v922, 0.35355338
    %v931 = vmul.f32 %v927, 0.35355338
    %v932 = vadd.f32 %v930, %v82
    %v933 = vadd.f32 %v931, %v83
    %v934 = vsel %vm321, %v932, -inf
    %935 = vmax.xlane.f32.xlu0 %v934
    %v936 = vpop.xlane.xlu0 %935
    %v937 = vsel %vm321, %v933, -inf
    %938 = vmax.xlane.f32.xlu0 %v937
    %v939 = vpop.xlane.xlu0 %938
    %v940 = vsub.f32 %v932, %v936
    %v941 = vsub.f32 %v933, %v939
    %v942 = vmul.f32 %v940, 1.442695
    %v943 = vpow.pop %v942
    %v944 = vmul.f32 %v941, 1.442695
    %v945 = vpow.pop %v944
    %v946 = vsel %vm321, %v943, 0.0
    %947 = vadd.xlane.f32.xlu0 %v946
    %v948 = vpop.xlane.xlu0 %947
    %v949 = vsel %vm321, %v945, 0.0
    %950 = vadd.xlane.f32.xlu0 %v949
    %v951 = vpop.xlane.xlu0 %950
    %v952 = vrcp.pop %v948
    %v953 = vrcp.pop %v951
    %v954 = vmul.f32 %v943, %v952
    %v955 = vmul.f32 %v945, %v953
    %956 = vrot.lane.b32.xlu0 %v219, 40
    %v957 = vpop.permute.xlu0 %956
    %958 = vrot.lane.b32.xlu0 %v224, 40
    %v959 = vpop.permute.xlu0 %958
    %v963 = vsel %vm321, %v954, 0
    %v966 = vsel %vm321, %v955, 0
    %968 = vmatprep.subr.mxu0 0.0
    %969 = vmatpush1.msra.mxu0 %v957
    %970 = vmatprep.subr.mxu0 0.0
    %971 = vmatpush1.msra.mxu0 %v959
    %972 = vmatprep.subr.mxu0 0.0
    %973 = vmatpush1.msra.mxu0 0.0
    %974 = vmatprep.subr.mxu0 0.0
    %975 = vmatpush1.msra.mxu0 0.0
    %976 = vmatprep.subr.mxu0 0.0
    %977 = vmatpush1.msra.mxu0 0.0
    %978 = vmatprep.subr.mxu0 0.0
    %979 = vmatpush1.msra.mxu0 0.0
    %980 = vmatprep.subr.mxu0 0.0
    %981 = vmatpush1.msra.mxu0 0.0
    %982 = vmatprep.subr.mxu0 0.0
    %983 = vmatpush1.msra.mxu0 0.0
    %984 = vmatprep.subr.mxu0 0.0
    %985 = vmatpush1.msra.mxu0 0.0
    %986 = vmatprep.subr.mxu0 0.0
    %987 = vmatpush1.msra.mxu0 0.0
    %988 = vmatprep.subr.mxu0 0.0
    %989 = vmatpush1.msra.mxu0 0.0
    %990 = vmatprep.subr.mxu0 0.0
    %991 = vmatpush1.msra.mxu0 0.0
    %992 = vmatprep.subr.mxu0 0.0
    %993 = vmatpush1.msra.mxu0 0.0
    %994 = vmatprep.subr.mxu0 0.0
    %995 = vmatpush1.msra.mxu0 0.0
    %996 = vmatprep.subr.mxu0 0.0
    %997 = vmatpush1.msra.mxu0 0.0
    %998 = vmatprep.subr.mxu0 0.0
    %999 = vmatpush1.msra.mxu0 0.0
    %1000 = vmatprep.subr.mxu0 0.0
    %1001 = vmatpush1.msra.mxu0 0.0
    %1002 = vmatprep.subr.mxu0 0.0
    %1003 = vmatpush1.msra.mxu0 0.0
    %1004 = vmatprep.subr.mxu0 0.0
    %1005 = vmatpush1.msra.mxu0 0.0
    %1006 = vmatprep.subr.mxu0 0.0
    %1007 = vmatpush1.msra.mxu0 0.0
    %1008 = vmatprep.subr.mxu0 0.0
    %1009 = vmatpush1.msra.mxu0 0.0
    %1010 = vmatprep.subr.mxu0 0.0
    %1011 = vmatpush1.msra.mxu0 0.0
    %1012 = vmatprep.subr.mxu0 0.0
    %1013 = vmatpush1.msra.mxu0 0.0
    %1014 = vmatprep.subr.mxu0 0.0
    %1015 = vmatpush1.msra.mxu0 0.0
    %1016 = vmatprep.subr.mxu0 0.0
    %1017 = vmatpush1.msra.mxu0 0.0
    %1018 = vmatprep.subr.mxu0 0.0
    %1019 = vmatpush1.msra.mxu0 0.0
    %1020 = vmatprep.subr.mxu0 0.0
    %1021 = vmatpush1.msra.mxu0 0.0
    %1022 = vmatprep.subr.mxu0 0.0
    %1023 = vmatpush1.msra.mxu0 0.0
    %1024 = vmatprep.subr.mxu0 0.0
    %1025 = vmatpush1.msra.mxu0 0.0
    %1026 = vmatprep.subr.mxu0 0.0
    %1027 = vmatpush1.msra.mxu0 0.0
    %1028 = vmatprep.subr.mxu0 0.0
    %1029 = vmatpush1.msra.mxu0 0.0
    %1030 = vmatprep.subr.mxu0 0.0
    %1031 = vmatpush1.msra.mxu0 0.0
    %1032 = vmatprep.mubr.f32.mxu0 0.0
    %1033 = vmatmul.mubr.f32.gmra.mrb[0].mxu0 %v963
    %v1034 = vpop.f32.mrb[0].mxu0
    %v1035 = vadd.f32 0.0, %v1034
    %v1036 = vpop.f32.mrb[0].mxu0
    %1037 = vmatprep.mubr.f32.mxu0 0.0
    %1038 = vmatmul.mubr.f32.gmra.mrb[0].mxu0 %v966
    %v1039 = vpop.f32.mrb[0].mxu0
    %v1040 = vadd.f32 0.0, %v1039
    %v1041 = vpop.f32.mrb[0].mxu0
    %1042 = vdwg.mxu0
    %1045 = vrot.lane.b32.xlu0 %v627, 8
    %v1046 = vpop.permute.xlu0 %1045
    %1047 = vrot.lane.b32.xlu0 %v632, 8
    %v1048 = vpop.permute.xlu0 %1047
    %1053 = vrot.lane.b32.xlu0 %v831, 16
    %v1054 = vpop.permute.xlu0 %1053
    %1055 = vrot.lane.b32.xlu0 %v836, 16
    %v1056 = vpop.permute.xlu0 %1055
    %1061 = vrot.lane.b32.xlu0 %v1035, 24
    %v1062 = vpop.permute.xlu0 %1061
    %1063 = vrot.lane.b32.xlu0 %v1040, 24
    %v1064 = vpop.permute.xlu0 %1063
    %v1067 = vsel %vm233, %v423, %v1046
    %v1068 = vsel %vm233, %v428, %v1048
    %v1069 = vsel %vm321, %v1067, %v1054
    %v1070 = vsel %vm321, %v1068, %v1056
    %vm1071 = vcmask 195584
    %v1072 = vsel %vm1071, %v1069, %v1062
    %v1073 = vsel %vm1071, %v1070, %v1064
    %v1074 = vld [vmem:[%s4] sm:$0xff]
    %v1075 = vld [vmem:[%s4 + $0x8] sm:$0xff]
    %v1076 = vld [vmem:[%s4 + $0x10] sm:$0xff]
    %v1077 = vld [vmem:[%s4 + $0x18] sm:$0xff]
    %v1079 = vsel %vm86, %v1072, 0
    %v1082 = vsel %vm86, %v1073, 0
    %1084 = vmatprep.subr.mxu0 0.0
    %1085 = vmatpush1.msra.mxu0 %v1074
    %1086 = vmatprep.subr.mxu0 0.0
    %1087 = vmatpush1.msra.mxu0 %v1075
    %1088 = vmatprep.subr.mxu0 0.0
    %1089 = vmatpush1.msra.mxu0 %v1076
    %1090 = vmatprep.subr.mxu0 0.0
    %1091 = vmatpush1.msra.mxu0 %v1077
    %1092 = vmatprep.subr.mxu0 0.0
    %1093 = vmatpush1.msra.mxu0 0.0
    %1094 = vmatprep.subr.mxu0 0.0
    %1095 = vmatpush1.msra.mxu0 0.0
    %1096 = vmatprep.subr.mxu0 0.0
    %1097 = vmatpush1.msra.mxu0 0.0
    %1098 = vmatprep.subr.mxu0 0.0
    %1099 = vmatpush1.msra.mxu0 0.0
    %1100 = vmatprep.subr.mxu0 0.0
    %1101 = vmatpush1.msra.mxu0 0.0
    %1102 = vmatprep.subr.mxu0 0.0
    %1103 = vmatpush1.msra.mxu0 0.0
    %1104 = vmatprep.subr.mxu0 0.0
    %1105 = vmatpush1.msra.mxu0 0.0
    %1106 = vmatprep.subr.mxu0 0.0
    %1107 = vmatpush1.msra.mxu0 0.0
    %1108 = vmatprep.subr.mxu0 0.0
    %1109 = vmatpush1.msra.mxu0 0.0
    %1110 = vmatprep.subr.mxu0 0.0
    %1111 = vmatpush1.msra.mxu0 0.0
    %1112 = vmatprep.subr.mxu0 0.0
    %1113 = vmatpush1.msra.mxu0 0.0
    %1114 = vmatprep.subr.mxu0 0.0
    %1115 = vmatpush1.msra.mxu0 0.0
    %1116 = vmatprep.subr.mxu0 0.0
    %1117 = vmatpush1.msra.mxu0 0.0
    %1118 = vmatprep.subr.mxu0 0.0
    %1119 = vmatpush1.msra.mxu0 0.0
    %1120 = vmatprep.subr.mxu0 0.0
    %1121 = vmatpush1.msra.mxu0 0.0
    %1122 = vmatprep.subr.mxu0 0.0
    %1123 = vmatpush1.msra.mxu0 0.0
    %1124 = vmatprep.subr.mxu0 0.0
    %1125 = vmatpush1.msra.mxu0 0.0
    %1126 = vmatprep.subr.mxu0 0.0
    %1127 = vmatpush1.msra.mxu0 0.0
    %1128 = vmatprep.subr.mxu0 0.0
    %1129 = vmatpush1.msra.mxu0 0.0
    %1130 = vmatprep.subr.mxu0 0.0
    %1131 = vmatpush1.msra.mxu0 0.0
    %1132 = vmatprep.subr.mxu0 0.0
    %1133 = vmatpush1.msra.mxu0 0.0
    %1134 = vmatprep.subr.mxu0 0.0
    %1135 = vmatpush1.msra.mxu0 0.0
    %1136 = vmatprep.subr.mxu0 0.0
    %1137 = vmatpush1.msra.mxu0 0.0
    %1138 = vmatprep.subr.mxu0 0.0
    %1139 = vmatpush1.msra.mxu0 0.0
    %1140 = vmatprep.subr.mxu0 0.0
    %1141 = vmatpush1.msra.mxu0 0.0
    %1142 = vmatprep.subr.mxu0 0.0
    %1143 = vmatpush1.msra.mxu0 0.0
    %1144 = vmatprep.subr.mxu0 0.0
    %1145 = vmatpush1.msra.mxu0 0.0
    %1146 = vmatprep.subr.mxu0 0.0
    %1147 = vmatpush1.msra.mxu0 0.0
    %1148 = vmatprep.mubr.f32.mxu0 0.0
    %1149 = vmatmul.mubr.f32.gmra.mrb[0].mxu0 %v1079
    %v1150 = vpop.f32.mrb[0].mxu0
    %v1151 = vadd.f32 0.0, %v1150
    %v1152 = vpop.f32.mrb[0].mxu0
    %1153 = vmatprep.mubr.f32.mxu0 0.0
    %1154 = vmatmul.mubr.f32.gmra.mrb[0].mxu0 %v1082
    %v1155 = vpop.f32.mrb[0].mxu0
    %v1156 = vadd.f32 0.0, %v1155
    %v1157 = vpop.f32.mrb[0].mxu0
    %1158 = vdwg.mxu0
    %v1159 = vadd.f32 %v80, %v1151
    %v1160 = vadd.f32 %v81, %v1156
    %v1161 = vld [vmem:[%s5] sm:$0x1]
    %v1163 = vlaneseq
    %v1164 = vshrl.u32 %v1163, 7
    %v1165 = vsub.s32 0, %v1164
    %v1166 = vrot.slane %v1161, %v1165
    %v1168 = vadd.f32 %v1159, %v1166
    %v1169 = vadd.f32 %v1160, %v1166
    %s1170 = sld [smem:[#allocation8 + $0x2]]
    %s1171 = sld [smem:[#allocation8 + $0x3]]
    %v1172 = vsel %vm86, %v1168, 0.0
    %1173 = vadd.xlane.f32.xlu0 %v1172
    %v1174 = vpop.xlane.xlu0 %1173
    %v1175 = vsel %vm86, %v1169, 0.0
    %1176 = vadd.xlane.f32.xlu0 %v1175
    %v1177 = vpop.xlane.xlu0 %1176
    %v1178 = vmul.f32 %v1174, %v93
    %v1179 = vmul.f32 %v1177, %v93
    %v1180 = vsub.f32 %v1168, %v1178
    %v1181 = vsub.f32 %v1169, %v1179
    %v1182 = vmul.f32 %v1180, %v1180
    %v1183 = vmul.f32 %v1181, %v1181
    %v1184 = vsel %vm86, %v1182, 0.0
    %1185 = vadd.xlane.f32.xlu0 %v1184
    %v1186 = vpop.xlane.xlu0 %1185
    %v1187 = vsel %vm86, %v1183, 0.0
    %1188 = vadd.xlane.f32.xlu0 %v1187
    %v1189 = vpop.xlane.xlu0 %1188
    %v1190 = vmul.f32 %v1186, %v106
    %v1191 = vmul.f32 %v1189, %v106
    %v1192 = vrsqrt.pop %v1190
    %v1193 = vmul.f32 %v1190, %v1192
    %vm1194 = vcmp.eq.f32.partialorder %v1190, inf
    %v1195 = vsel %vm1194, %v1190, %v1193
    %vm1196 = vcmp.eq.f32.partialorder %v1190, 0.0
    %v1197 = vand.u32 %v1190, 2147483648
    %v1198 = vsel %vm1196, %v1197, %v1195
    %v1199 = vrsqrt.pop %v1191
    %v1200 = vmul.f32 %v1191, %v1199
    %vm1201 = vcmp.eq.f32.partialorder %v1191, inf
    %v1202 = vsel %vm1201, %v1191, %v1200
    %vm1203 = vcmp.eq.f32.partialorder %v1191, 0.0
    %v1204 = vand.u32 %v1191, 2147483648
    %v1205 = vsel %vm1203, %v1204, %v1202
    %v1206 = vadd.f32 %v1198, 1e-06
    %v1207 = vadd.f32 %v1205, 1e-06
    %v1208 = vrcp.pop %v1206
    %v1209 = vrcp.pop %v1207
    %v1210 = vstv %s1170
    %v1211 = vmul.f32 %v1210, %v1180
    %v1212 = vmul.f32 %v1210, %v1181
    %v1213 = vmul.f32 %v1211, %v1208
    %v1214 = vmul.f32 %v1212, %v1209
    %v1215 = vstv %s1171
    %v1216 = vadd.f32 %v1213, %v1215
    %v1217 = vadd.f32 %v1214, %v1215
    %v1218 = vld [vmem:[%s6] sm:$0xff]
    %v1219 = vld [vmem:[%s6 + $0x8] sm:$0xff]
    %v1220 = vld [vmem:[%s6 + $0x10] sm:$0xff]
    %v1221 = vld [vmem:[%s6 + $0x18] sm:$0xff]
    %v1222 = vld [vmem:[%s7] sm:$0x1]
    %v1224 = vlaneseq
    %v1225 = vshrl.u32 %v1224, 7
    %v1226 = vsub.s32 0, %v1225
    %v1227 = vrot.slane %v1222, %v1226
    %v1230 = vsel %vm86, %v1216, 0
    %v1233 = vsel %vm86, %v1217, 0
    %1235 = vmatprep.subr.mxu0 0.0
    %1236 = vmatpush1.msra.mxu0 %v1218
    %1237 = vmatprep.subr.mxu0 0.0
    %1238 = vmatpush1.msra.mxu0 %v1219
    %1239 = vmatprep.subr.mxu0 0.0
    %1240 = vmatpush1.msra.mxu0 %v1220
    %1241 = vmatprep.subr.mxu0 0.0
    %1242 = vmatpush1.msra.mxu0 %v1221
    %1243 = vmatprep.subr.mxu0 0.0
    %1244 = vmatpush1.msra.mxu0 0.0
    %1245 = vmatprep.subr.mxu0 0.0
    %1246 = vmatpush1.msra.mxu0 0.0
    %1247 = vmatprep.subr.mxu0 0.0
    %1248 = vmatpush1.msra.mxu0 0.0
    %1249 = vmatprep.subr.mxu0 0.0
    %1250 = vmatpush1.msra.mxu0 0.0
    %1251 = vmatprep.subr.mxu0 0.0
    %1252 = vmatpush1.msra.mxu0 0.0
    %1253 = vmatprep.subr.mxu0 0.0
    %1254 = vmatpush1.msra.mxu0 0.0
    %1255 = vmatprep.subr.mxu0 0.0
    %1256 = vmatpush1.msra.mxu0 0.0
    %1257 = vmatprep.subr.mxu0 0.0
    %1258 = vmatpush1.msra.mxu0 0.0
    %1259 = vmatprep.subr.mxu0 0.0
    %1260 = vmatpush1.msra.mxu0 0.0
    %1261 = vmatprep.subr.mxu0 0.0
    %1262 = vmatpush1.msra.mxu0 0.0
    %1263 = vmatprep.subr.mxu0 0.0
    %1264 = vmatpush1.msra.mxu0 0.0
    %1265 = vmatprep.subr.mxu0 0.0
    %1266 = vmatpush1.msra.mxu0 0.0
    %1267 = vmatprep.subr.mxu0 0.0
    %1268 = vmatpush1.msra.mxu0 0.0
    %1269 = vmatprep.subr.mxu0 0.0
    %1270 = vmatpush1.msra.mxu0 0.0
    %1271 = vmatprep.subr.mxu0 0.0
    %1272 = vmatpush1.msra.mxu0 0.0
    %1273 = vmatprep.subr.mxu0 0.0
    %1274 = vmatpush1.msra.mxu0 0.0
    %1275 = vmatprep.subr.mxu0 0.0
    %1276 = vmatpush1.msra.mxu0 0.0
    %1277 = vmatprep.subr.mxu0 0.0
    %1278 = vmatpush1.msra.mxu0 0.0
    %1279 = vmatprep.subr.mxu0 0.0
    %1280 = vmatpush1.msra.mxu0 0.0
    %1281 = vmatprep.subr.mxu0 0.0
    %1282 = vmatpush1.msra.mxu0 0.0
    %1283 = vmatprep.subr.mxu0 0.0
    %1284 = vmatpush1.msra.mxu0 0.0
    %1285 = vmatprep.subr.mxu0 0.0
    %1286 = vmatpush1.msra.mxu0 0.0
    %1287 = vmatprep.subr.mxu0 0.0
    %1288 = vmatpush1.msra.mxu0 0.0
    %1289 = vmatprep.subr.mxu0 0.0
    %1290 = vmatpush1.msra.mxu0 0.0
    %1291 = vmatprep.subr.mxu0 0.0
    %1292 = vmatpush1.msra.mxu0 0.0
    %1293 = vmatprep.subr.mxu0 0.0
    %1294 = vmatpush1.msra.mxu0 0.0
    %1295 = vmatprep.subr.mxu0 0.0
    %1296 = vmatpush1.msra.mxu0 0.0
    %1297 = vmatprep.subr.mxu0 0.0
    %1298 = vmatpush1.msra.mxu0 0.0
    %1299 = vmatprep.mubr.f32.mxu0 0.0
    %1300 = vmatmul.mubr.f32.gmra.mrb[0].mxu0 %v1230
    %v1301 = vpop.f32.mrb[0].mxu0
    %v1302 = vadd.f32 %v1227, %v1301
    %v1303 = vpop.f32.mrb[0].mxu0
    %1304 = vmatprep.mubr.f32.mxu0 0.0
    %1305 = vmatmul.mubr.f32.gmra.mrb[0].mxu0 %v1233
    %v1306 = vpop.f32.mrb[0].mxu0
    %v1307 = vadd.f32 %v1227, %v1306
    %v1308 = vpop.f32.mrb[0].mxu0
    %1309 = vdwg.mxu0
    %v1310 = vmax.f32 %v1302, 0.0
    %v1311 = vmax.f32 %v1307, 0.0
    %v1312 = vld [vmem:[%s8] sm:$0xff]
    %v1313 = vld [vmem:[%s8 + $0x8] sm:$0xff]
    %v1314 = vld [vmem:[%s8 + $0x10] sm:$0xff]
    %v1315 = vld [vmem:[%s8 + $0x18] sm:$0xff]
    %v1316 = vld [vmem:[%s8 + $0x20] sm:$0xff]
    %v1317 = vld [vmem:[%s8 + $0x28] sm:$0xff]
    %v1318 = vld [vmem:[%s8 + $0x30] sm:$0xff]
    %v1319 = vld [vmem:[%s8 + $0x38] sm:$0xff]
    %vm1320 = vcmask 523264
    %v1322 = vsel %vm1320, %v1310, 0
    %v1325 = vsel %vm1320, %v1311, 0
    %1327 = vmatprep.subr.mxu0 0.0
    %1328 = vmatpush1.msra.mxu0 %v1312
    %1329 = vmatprep.subr.mxu0 0.0
    %1330 = vmatpush1.msra.mxu0 %v1313
    %1331 = vmatprep.subr.mxu0 0.0
    %1332 = vmatpush1.msra.mxu0 %v1314
    %1333 = vmatprep.subr.mxu0 0.0
    %1334 = vmatpush1.msra.mxu0 %v1315
    %1335 = vmatprep.subr.mxu0 0.0
    %1336 = vmatpush1.msra.mxu0 %v1316
    %1337 = vmatprep.subr.mxu0 0.0
    %1338 = vmatpush1.msra.mxu0 %v1317
    %1339 = vmatprep.subr.mxu0 0.0
    %1340 = vmatpush1.msra.mxu0 %v1318
    %1341 = vmatprep.subr.mxu0 0.0
    %1342 = vmatpush1.msra.mxu0 %v1319
    %1343 = vmatprep.subr.mxu0 0.0
    %1344 = vmatpush1.msra.mxu0 0.0
    %1345 = vmatprep.subr.mxu0 0.0
    %1346 = vmatpush1.msra.mxu0 0.0
    %1347 = vmatprep.subr.mxu0 0.0
    %1348 = vmatpush1.msra.mxu0 0.0
    %1349 = vmatprep.subr.mxu0 0.0
    %1350 = vmatpush1.msra.mxu0 0.0
    %1351 = vmatprep.subr.mxu0 0.0
    %1352 = vmatpush1.msra.mxu0 0.0
    %1353 = vmatprep.subr.mxu0 0.0
    %1354 = vmatpush1.msra.mxu0 0.0
    %1355 = vmatprep.subr.mxu0 0.0
    %1356 = vmatpush1.msra.mxu0 0.0
    %1357 = vmatprep.subr.mxu0 0.0
    %1358 = vmatpush1.msra.mxu0 0.0
    %1359 = vmatprep.subr.mxu0 0.0
    %1360 = vmatpush1.msra.mxu0 0.0
    %1361 = vmatprep.subr.mxu0 0.0
    %1362 = vmatpush1.msra.mxu0 0.0
    %1363 = vmatprep.subr.mxu0 0.0
    %1364 = vmatpush1.msra.mxu0 0.0
    %1365 = vmatprep.subr.mxu0 0.0
    %1366 = vmatpush1.msra.mxu0 0.0
    %1367 = vmatprep.subr.mxu0 0.0
    %1368 = vmatpush1.msra.mxu0 0.0
    %1369 = vmatprep.subr.mxu0 0.0
    %1370 = vmatpush1.msra.mxu0 0.0
    %1371 = vmatprep.subr.mxu0 0.0
    %1372 = vmatpush1.msra.mxu0 0.0
    %1373 = vmatprep.subr.mxu0 0.0
    %1374 = vmatpush1.msra.mxu0 0.0
    %1375 = vmatprep.subr.mxu0 0.0
    %1376 = vmatpush1.msra.mxu0 0.0
    %1377 = vmatprep.subr.mxu0 0.0
    %1378 = vmatpush1.msra.mxu0 0.0
    %1379 = vmatprep.subr.mxu0 0.0
    %1380 = vmatpush1.msra.mxu0 0.0
    %1381 = vmatprep.subr.mxu0 0.0
    %1382 = vmatpush1.msra.mxu0 0.0
    %1383 = vmatprep.subr.mxu0 0.0
    %1384 = vmatpush1.msra.mxu0 0.0
    %1385 = vmatprep.subr.mxu0 0.0
    %1386 = vmatpush1.msra.mxu0 0.0
    %1387 = vmatprep.subr.mxu0 0.0
    %1388 = vmatpush1.msra.mxu0 0.0
    %1389 = vmatprep.subr.mxu0 0.0
    %1390 = vmatpush1.msra.mxu0 0.0
    %1391 = vmatprep.mubr.f32.mxu0 0.0
    %1392 = vmatmul.mubr.f32.gmra.mrb[0].mxu0 %v1322
    %v1393 = vpop.f32.mrb[0].mxu0
    %v1394 = vadd.f32 0.0, %v1393
    %v1395 = vpop.f32.mrb[0].mxu0
    %1396 = vmatprep.mubr.f32.mxu0 0.0
    %1397 = vmatmul.mubr.f32.gmra.mrb[0].mxu0 %v1325
    %v1398 = vpop.f32.mrb[0].mxu0
    %v1399 = vadd.f32 0.0, %v1398
    %v1400 = vpop.f32.mrb[0].mxu0
    %1401 = vdwg.mxu0
    %v1402 = vadd.f32 %v1168, %v1394
    %v1403 = vadd.f32 %v1169, %v1399
    %v1404 = vld [vmem:[%s9] sm:$0x1]
    %v1406 = vlaneseq
    %v1407 = vshrl.u32 %v1406, 7
    %v1408 = vsub.s32 0, %v1407
    %v1409 = vrot.slane %v1404, %v1408
    %v1411 = vadd.f32 %v1402, %v1409
    %v1412 = vadd.f32 %v1403, %v1409
    %s1413 = sld [smem:[#allocation8 + $0x4]]
    %s1414 = sld [smem:[#allocation8 + $0x5]]
    %v1415 = vsel %vm86, %v1411, 0.0
    %1416 = vadd.xlane.f32.xlu0 %v1415
    %v1417 = vpop.xlane.xlu0 %1416
    %v1418 = vsel %vm86, %v1412, 0.0
    %1419 = vadd.xlane.f32.xlu0 %v1418
    %v1420 = vpop.xlane.xlu0 %1419
    %v1421 = vmul.f32 %v1417, %v93
    %v1422 = vmul.f32 %v1420, %v93
    %v1423 = vsub.f32 %v1411, %v1421
    %v1424 = vsub.f32 %v1412, %v1422
    %v1425 = vmul.f32 %v1423, %v1423
    %v1426 = vmul.f32 %v1424, %v1424
    %v1427 = vsel %vm86, %v1425, 0.0
    %1428 = vadd.xlane.f32.xlu0 %v1427
    %v1429 = vpop.xlane.xlu0 %1428
    %v1430 = vsel %vm86, %v1426, 0.0
    %1431 = vadd.xlane.f32.xlu0 %v1430
    %v1432 = vpop.xlane.xlu0 %1431
    %v1433 = vmul.f32 %v1429, %v106
    %v1434 = vmul.f32 %v1432, %v106
    %v1435 = vrsqrt.pop %v1433
    %v1436 = vmul.f32 %v1433, %v1435
    %vm1437 = vcmp.eq.f32.partialorder %v1433, inf
    %v1438 = vsel %vm1437, %v1433, %v1436
    %vm1439 = vcmp.eq.f32.partialorder %v1433, 0.0
    %v1440 = vand.u32 %v1433, 2147483648
    %v1441 = vsel %vm1439, %v1440, %v1438
    %v1442 = vrsqrt.pop %v1434
    %v1443 = vmul.f32 %v1434, %v1442
    %vm1444 = vcmp.eq.f32.partialorder %v1434, inf
    %v1445 = vsel %vm1444, %v1434, %v1443
    %vm1446 = vcmp.eq.f32.partialorder %v1434, 0.0
    %v1447 = vand.u32 %v1434, 2147483648
    %v1448 = vsel %vm1446, %v1447, %v1445
    %v1449 = vadd.f32 %v1441, 1e-06
    %v1450 = vadd.f32 %v1448, 1e-06
    %v1451 = vrcp.pop %v1449
    %v1452 = vrcp.pop %v1450
    %v1453 = vstv %s1413
    %v1454 = vmul.f32 %v1453, %v1423
    %v1455 = vmul.f32 %v1453, %v1424
    %v1456 = vmul.f32 %v1454, %v1451
    %v1457 = vmul.f32 %v1455, %v1452
    %v1458 = vstv %s1414
    %v1459 = vadd.f32 %v1456, %v1458
    %v1460 = vadd.f32 %v1457, %v1458
    %s1461 = scalar_lea.vmem %s2, 32
    %v1462 = vld [vmem:[%s1461] sm:$0xff]
    %v1463 = vld [vmem:[%s1461 + $0x8] sm:$0xff]
    %v1464 = vld [vmem:[%s1461 + $0x10] sm:$0xff]
    %v1465 = vld [vmem:[%s1461 + $0x18] sm:$0xff]
    %s1466 = scalar_lea.vmem %s3, 1
    %v1467 = vld [vmem:[%s1466] sm:$0x1]
    %v1469 = vlaneseq
    %v1470 = vshrl.u32 %v1469, 7
    %v1471 = vsub.s32 0, %v1470
    %v1472 = vrot.slane %v1467, %v1471
    %v1475 = vsel %vm86, %v1459, 0
    %v1478 = vsel %vm86, %v1460, 0
    %1480 = vmatprep.subr.mxu0 0.0
    %1481 = vmatpush1.msra.mxu0 %v1462
    %1482 = vmatprep.subr.mxu0 0.0
    %1483 = vmatpush1.msra.mxu0 %v1463
    %1484 = vmatprep.subr.mxu0 0.0
    %1485 = vmatpush1.msra.mxu0 %v1464
    %1486 = vmatprep.subr.mxu0 0.0
    %1487 = vmatpush1.msra.mxu0 %v1465
    %1488 = vmatprep.subr.mxu0 0.0
    %1489 = vmatpush1.msra.mxu0 0.0
    %1490 = vmatprep.subr.mxu0 0.0
    %1491 = vmatpush1.msra.mxu0 0.0
    %1492 = vmatprep.subr.mxu0 0.0
    %1493 = vmatpush1.msra.mxu0 0.0
    %1494 = vmatprep.subr.mxu0 0.0
    %1495 = vmatpush1.msra.mxu0 0.0
    %1496 = vmatprep.subr.mxu0 0.0
    %1497 = vmatpush1.msra.mxu0 0.0
    %1498 = vmatprep.subr.mxu0 0.0
    %1499 = vmatpush1.msra.mxu0 0.0
    %1500 = vmatprep.subr.mxu0 0.0
    %1501 = vmatpush1.msra.mxu0 0.0
    %1502 = vmatprep.subr.mxu0 0.0
    %1503 = vmatpush1.msra.mxu0 0.0
    %1504 = vmatprep.subr.mxu0 0.0
    %1505 = vmatpush1.msra.mxu0 0.0
    %1506 = vmatprep.subr.mxu0 0.0
    %1507 = vmatpush1.msra.mxu0 0.0
    %1508 = vmatprep.subr.mxu0 0.0
    %1509 = vmatpush1.msra.mxu0 0.0
    %1510 = vmatprep.subr.mxu0 0.0
    %1511 = vmatpush1.msra.mxu0 0.0
    %1512 = vmatprep.subr.mxu0 0.0
    %1513 = vmatpush1.msra.mxu0 0.0
    %1514 = vmatprep.subr.mxu0 0.0
    %1515 = vmatpush1.msra.mxu0 0.0
    %1516 = vmatprep.subr.mxu0 0.0
    %1517 = vmatpush1.msra.mxu0 0.0
    %1518 = vmatprep.subr.mxu0 0.0
    %1519 = vmatpush1.msra.mxu0 0.0
    %1520 = vmatprep.subr.mxu0 0.0
    %1521 = vmatpush1.msra.mxu0 0.0
    %1522 = vmatprep.subr.mxu0 0.0
    %1523 = vmatpush1.msra.mxu0 0.0
    %1524 = vmatprep.subr.mxu0 0.0
    %1525 = vmatpush1.msra.mxu0 0.0
    %1526 = vmatprep.subr.mxu0 0.0
    %1527 = vmatpush1.msra.mxu0 0.0
    %1528 = vmatprep.subr.mxu0 0.0
    %1529 = vmatpush1.msra.mxu0 0.0
    %1530 = vmatprep.subr.mxu0 0.0
    %1531 = vmatpush1.msra.mxu0 0.0
    %1532 = vmatprep.subr.mxu0 0.0
    %1533 = vmatpush1.msra.mxu0 0.0
    %1534 = vmatprep.subr.mxu0 0.0
    %1535 = vmatpush1.msra.mxu0 0.0
    %1536 = vmatprep.subr.mxu0 0.0
    %1537 = vmatpush1.msra.mxu0 0.0
    %1538 = vmatprep.subr.mxu0 0.0
    %1539 = vmatpush1.msra.mxu0 0.0
    %1540 = vmatprep.subr.mxu0 0.0
    %1541 = vmatpush1.msra.mxu0 0.0
    %1542 = vmatprep.subr.mxu0 0.0
    %1543 = vmatpush1.msra.mxu0 0.0
    %1544 = vmatprep.mubr.f32.mxu0 0.0
    %1545 = vmatmul.mubr.f32.gmra.mrb[0].mxu0 %v1475
    %v1546 = vpop.f32.mrb[0].mxu0
    %v1547 = vadd.f32 %v1472, %v1546
    %v1548 = vpop.f32.mrb[0].mxu0
    %1549 = vmatprep.mubr.f32.mxu0 0.0
    %1550 = vmatmul.mubr.f32.gmra.mrb[0].mxu0 %v1478
    %v1551 = vpop.f32.mrb[0].mxu0
    %v1552 = vadd.f32 %v1472, %v1551
    %v1553 = vpop.f32.mrb[0].mxu0
    %1554 = vdwg.mxu0
    %1557 = vrot.lane.b32.xlu0 %v1547, 96
    %v1558 = vpop.permute.xlu0 %1557
    %1559 = vrot.lane.b32.xlu0 %v1552, 96
    %v1560 = vpop.permute.xlu0 %1559
    %v1561 = vsel %vm233, %v1547, 0
    %v1563 = vsel %vm233, %v1552, 0
    %v1565 = vsel %vm233, %v1558, 0
    %v1567 = vsel %vm233, %v1560, 0
    %1569 = vmatprep.subr.mxu0 0.0
    %1570 = vmatpush1.xpose.msra.mxu0 %v1565
    %1571 = vmatprep.subr.mxu0 0.0
    %1572 = vmatpush1.xpose.msra.mxu0 %v1567
    %1573 = vmatprep.subr.mxu0 0.0
    %1574 = vmatpush1.xpose.msra.mxu0 0.0
    %1575 = vmatprep.subr.mxu0 0.0
    %1576 = vmatpush1.xpose.msra.mxu0 0.0
    %1577 = vmatprep.subr.mxu0 0.0
    %1578 = vmatpush1.xpose.msra.mxu0 0.0
    %1579 = vmatprep.subr.mxu0 0.0
    %1580 = vmatpush1.xpose.msra.mxu0 0.0
    %1581 = vmatprep.subr.mxu0 0.0
    %1582 = vmatpush1.xpose.msra.mxu0 0.0
    %1583 = vmatprep.subr.mxu0 0.0
    %1584 = vmatpush1.xpose.msra.mxu0 0.0
    %1585 = vmatprep.subr.mxu0 0.0
    %1586 = vmatpush1.xpose.msra.mxu0 0.0
    %1587 = vmatprep.subr.mxu0 0.0
    %1588 = vmatpush1.xpose.msra.mxu0 0.0
    %1589 = vmatprep.subr.mxu0 0.0
    %1590 = vmatpush1.xpose.msra.mxu0 0.0
    %1591 = vmatprep.subr.mxu0 0.0
    %1592 = vmatpush1.xpose.msra.mxu0 0.0
    %1593 = vmatprep.subr.mxu0 0.0
    %1594 = vmatpush1.xpose.msra.mxu0 0.0
    %1595 = vmatprep.subr.mxu0 0.0
    %1596 = vmatpush1.xpose.msra.mxu0 0.0
    %1597 = vmatprep.subr.mxu0 0.0
    %1598 = vmatpush1.xpose.msra.mxu0 0.0
    %1599 = vmatprep.subr.mxu0 0.0
    %1600 = vmatpush1.xpose.msra.mxu0 0.0
    %1601 = vmatprep.subr.mxu0 0.0
    %1602 = vmatpush1.xpose.msra.mxu0 0.0
    %1603 = vmatprep.subr.mxu0 0.0
    %1604 = vmatpush1.xpose.msra.mxu0 0.0
    %1605 = vmatprep.subr.mxu0 0.0
    %1606 = vmatpush1.xpose.msra.mxu0 0.0
    %1607 = vmatprep.subr.mxu0 0.0
    %1608 = vmatpush1.xpose.msra.mxu0 0.0
    %1609 = vmatprep.subr.mxu0 0.0
    %1610 = vmatpush1.xpose.msra.mxu0 0.0
    %1611 = vmatprep.subr.mxu0 0.0
    %1612 = vmatpush1.xpose.msra.mxu0 0.0
    %1613 = vmatprep.subr.mxu0 0.0
    %1614 = vmatpush1.xpose.msra.mxu0 0.0
    %1615 = vmatprep.subr.mxu0 0.0
    %1616 = vmatpush1.xpose.msra.mxu0 0.0
    %1617 = vmatprep.subr.mxu0 0.0
    %1618 = vmatpush1.xpose.msra.mxu0 0.0
    %1619 = vmatprep.subr.mxu0 0.0
    %1620 = vmatpush1.xpose.msra.mxu0 0.0
    %1621 = vmatprep.subr.mxu0 0.0
    %1622 = vmatpush1.xpose.msra.mxu0 0.0
    %1623 = vmatprep.subr.mxu0 0.0
    %1624 = vmatpush1.xpose.msra.mxu0 0.0
    %1625 = vmatprep.subr.mxu0 0.0
    %1626 = vmatpush1.xpose.msra.mxu0 0.0
    %1627 = vmatprep.subr.mxu0 0.0
    %1628 = vmatpush1.xpose.msra.mxu0 0.0
    %1629 = vmatprep.subr.mxu0 0.0
    %1630 = vmatpush1.xpose.msra.mxu0 0.0
    %1631 = vmatprep.subr.mxu0 0.0
    %1632 = vmatpush1.xpose.msra.mxu0 0.0
    %1633 = vmatprep.mubr.f32.mxu0 0.0
    %1634 = vmatmul.mubr.f32.gmra.mrb[0].mxu0 %v1561
    %v1635 = vpop.f32.mrb[0].mxu0
    %v1636 = vadd.f32 0.0, %v1635
    %v1637 = vpop.f32.mrb[0].mxu0
    %1638 = vmatprep.mubr.f32.mxu0 0.0
    %1639 = vmatmul.mubr.f32.gmra.mrb[0].mxu0 %v1563
    %v1640 = vpop.f32.mrb[0].mxu0
    %v1641 = vadd.f32 0.0, %v1640
    %v1642 = vpop.f32.mrb[0].mxu0
    %1643 = vdwg.mxu0
    %v1644 = vmul.f32 %v1636, 0.35355338
    %v1645 = vmul.f32 %v1641, 0.35355338
    %v1646 = vadd.f32 %v1644, %v82
    %v1647 = vadd.f32 %v1645, %v83
    %v1648 = vsel %vm321, %v1646, -inf
    %1649 = vmax.xlane.f32.xlu0 %v1648
    %v1650 = vpop.xlane.xlu0 %1649
    %v1651 = vsel %vm321, %v1647, -inf
    %1652 = vmax.xlane.f32.xlu0 %v1651
    %v1653 = vpop.xlane.xlu0 %1652
    %v1654 = vsub.f32 %v1646, %v1650
    %v1655 = vsub.f32 %v1647, %v1653
    %v1656 = vmul.f32 %v1654, 1.442695
    %v1657 = vpow.pop %v1656
    %v1658 = vmul.f32 %v1655, 1.442695
    %v1659 = vpow.pop %v1658
    %v1660 = vsel %vm321, %v1657, 0.0
    %1661 = vadd.xlane.f32.xlu0 %v1660
    %v1662 = vpop.xlane.xlu0 %1661
    %v1663 = vsel %vm321, %v1659, 0.0
    %1664 = vadd.xlane.f32.xlu0 %v1663
    %v1665 = vpop.xlane.xlu0 %1664
    %v1666 = vrcp.pop %v1662
    %v1667 = vrcp.pop %v1665
    %v1668 = vmul.f32 %v1657, %v1666
    %v1669 = vmul.f32 %v1659, %v1667
    %1670 = vrot.lane.b32.xlu0 %v1547, 64
    %v1671 = vpop.permute.xlu0 %1670
    %1672 = vrot.lane.b32.xlu0 %v1552, 64
    %v1673 = vpop.permute.xlu0 %1672
    %v1677 = vsel %vm321, %v1668, 0
    %v1680 = vsel %vm321, %v1669, 0
    %1682 = vmatprep.subr.mxu0 0.0
    %1683 = vmatpush1.msra.mxu0 %v1671
    %1684 = vmatprep.subr.mxu0 0.0
    %1685 = vmatpush1.msra.mxu0 %v1673
    %1686 = vmatprep.subr.mxu0 0.0
    %1687 = vmatpush1.msra.mxu0 0.0
    %1688 = vmatprep.subr.mxu0 0.0
    %1689 = vmatpush1.msra.mxu0 0.0
    %1690 = vmatprep.subr.mxu0 0.0
    %1691 = vmatpush1.msra.mxu0 0.0
    %1692 = vmatprep.subr.mxu0 0.0
    %1693 = vmatpush1.msra.mxu0 0.0
    %1694 = vmatprep.subr.mxu0 0.0
    %1695 = vmatpush1.msra.mxu0 0.0
    %1696 = vmatprep.subr.mxu0 0.0
    %1697 = vmatpush1.msra.mxu0 0.0
    %1698 = vmatprep.subr.mxu0 0.0
    %1699 = vmatpush1.msra.mxu0 0.0
    %1700 = vmatprep.subr.mxu0 0.0
    %1701 = vmatpush1.msra.mxu0 0.0
    %1702 = vmatprep.subr.mxu0 0.0
    %1703 = vmatpush1.msra.mxu0 0.0
    %1704 = vmatprep.subr.mxu0 0.0
    %1705 = vmatpush1.msra.mxu0 0.0
    %1706 = vmatprep.subr.mxu0 0.0
    %1707 = vmatpush1.msra.mxu0 0.0
    %1708 = vmatprep.subr.mxu0 0.0
    %1709 = vmatpush1.msra.mxu0 0.0
    %1710 = vmatprep.subr.mxu0 0.0
    %1711 = vmatpush1.msra.mxu0 0.0
    %1712 = vmatprep.subr.mxu0 0.0
    %1713 = vmatpush1.msra.mxu0 0.0
    %1714 = vmatprep.subr.mxu0 0.0
    %1715 = vmatpush1.msra.mxu0 0.0
    %1716 = vmatprep.subr.mxu0 0.0
    %1717 = vmatpush1.msra.mxu0 0.0
    %1718 = vmatprep.subr.mxu0 0.0
    %1719 = vmatpush1.msra.mxu0 0.0
    %1720 = vmatprep.subr.mxu0 0.0
    %1721 = vmatpush1.msra.mxu0 0.0
    %1722 = vmatprep.subr.mxu0 0.0
    %1723 = vmatpush1.msra.mxu0 0.0
    %1724 = vmatprep.subr.mxu0 0.0
    %1725 = vmatpush1.msra.mxu0 0.0
    %1726 = vmatprep.subr.mxu0 0.0
    %1727 = vmatpush1.msra.mxu0 0.0
    %1728 = vmatprep.subr.mxu0 0.0
    %1729 = vmatpush1.msra.mxu0 0.0
    %1730 = vmatprep.subr.mxu0 0.0
    %1731 = vmatpush1.msra.mxu0 0.0
    %1732 = vmatprep.subr.mxu0 0.0
    %1733 = vmatpush1.msra.mxu0 0.0
    %1734 = vmatprep.subr.mxu0 0.0
    %1735 = vmatpush1.msra.mxu0 0.0
    %1736 = vmatprep.subr.mxu0 0.0
    %1737 = vmatpush1.msra.mxu0 0.0
    %1738 = vmatprep.subr.mxu0 0.0
    %1739 = vmatpush1.msra.mxu0 0.0
    %1740 = vmatprep.subr.mxu0 0.0
    %1741 = vmatpush1.msra.mxu0 0.0
    %1742 = vmatprep.subr.mxu0 0.0
    %1743 = vmatpush1.msra.mxu0 0.0
    %1744 = vmatprep.subr.mxu0 0.0
    %1745 = vmatpush1.msra.mxu0 0.0
    %1746 = vmatprep.mubr.f32.mxu0 0.0
    %1747 = vmatmul.mubr.f32.gmra.mrb[0].mxu0 %v1677
    %v1748 = vpop.f32.mrb[0].mxu0
    %v1749 = vadd.f32 0.0, %v1748
    %v1750 = vpop.f32.mrb[0].mxu0
    %1751 = vmatprep.mubr.f32.mxu0 0.0
    %1752 = vmatmul.mubr.f32.gmra.mrb[0].mxu0 %v1680
    %v1753 = vpop.f32.mrb[0].mxu0
    %v1754 = vadd.f32 0.0, %v1753
    %v1755 = vpop.f32.mrb[0].mxu0
    %1756 = vdwg.mxu0
    %1757 = vrot.lane.b32.xlu0 %v1547, 120
    %v1758 = vpop.permute.xlu0 %1757
    %1759 = vrot.lane.b32.xlu0 %v1552, 120
    %v1760 = vpop.permute.xlu0 %1759
    %1761 = vrot.lane.b32.xlu0 %v1547, 88
    %v1762 = vpop.permute.xlu0 %1761
    %1763 = vrot.lane.b32.xlu0 %v1552, 88
    %v1764 = vpop.permute.xlu0 %1763
    %v1765 = vsel %vm233, %v1758, 0
    %v1767 = vsel %vm233, %v1760, 0
    %v1769 = vsel %vm233, %v1762, 0
    %v1771 = vsel %vm233, %v1764, 0
    %1773 = vmatprep.subr.mxu0 0.0
    %1774 = vmatpush1.xpose.msra.mxu0 %v1769
    %1775 = vmatprep.subr.mxu0 0.0
    %1776 = vmatpush1.xpose.msra.mxu0 %v1771
    %1777 = vmatprep.subr.mxu0 0.0
    %1778 = vmatpush1.xpose.msra.mxu0 0.0
    %1779 = vmatprep.subr.mxu0 0.0
    %1780 = vmatpush1.xpose.msra.mxu0 0.0
    %1781 = vmatprep.subr.mxu0 0.0
    %1782 = vmatpush1.xpose.msra.mxu0 0.0
    %1783 = vmatprep.subr.mxu0 0.0
    %1784 = vmatpush1.xpose.msra.mxu0 0.0
    %1785 = vmatprep.subr.mxu0 0.0
    %1786 = vmatpush1.xpose.msra.mxu0 0.0
    %1787 = vmatprep.subr.mxu0 0.0
    %1788 = vmatpush1.xpose.msra.mxu0 0.0
    %1789 = vmatprep.subr.mxu0 0.0
    %1790 = vmatpush1.xpose.msra.mxu0 0.0
    %1791 = vmatprep.subr.mxu0 0.0
    %1792 = vmatpush1.xpose.msra.mxu0 0.0
    %1793 = vmatprep.subr.mxu0 0.0
    %1794 = vmatpush1.xpose.msra.mxu0 0.0
    %1795 = vmatprep.subr.mxu0 0.0
    %1796 = vmatpush1.xpose.msra.mxu0 0.0
    %1797 = vmatprep.subr.mxu0 0.0
    %1798 = vmatpush1.xpose.msra.mxu0 0.0
    %1799 = vmatprep.subr.mxu0 0.0
    %1800 = vmatpush1.xpose.msra.mxu0 0.0
    %1801 = vmatprep.subr.mxu0 0.0
    %1802 = vmatpush1.xpose.msra.mxu0 0.0
    %1803 = vmatprep.subr.mxu0 0.0
    %1804 = vmatpush1.xpose.msra.mxu0 0.0
    %1805 = vmatprep.subr.mxu0 0.0
    %1806 = vmatpush1.xpose.msra.mxu0 0.0
    %1807 = vmatprep.subr.mxu0 0.0
    %1808 = vmatpush1.xpose.msra.mxu0 0.0
    %1809 = vmatprep.subr.mxu0 0.0
    %1810 = vmatpush1.xpose.msra.mxu0 0.0
    %1811 = vmatprep.subr.mxu0 0.0
    %1812 = vmatpush1.xpose.msra.mxu0 0.0
    %1813 = vmatprep.subr.mxu0 0.0
    %1814 = vmatpush1.xpose.msra.mxu0 0.0
    %1815 = vmatprep.subr.mxu0 0.0
    %1816 = vmatpush1.xpose.msra.mxu0 0.0
    %1817 = vmatprep.subr.mxu0 0.0
    %1818 = vmatpush1.xpose.msra.mxu0 0.0
    %1819 = vmatprep.subr.mxu0 0.0
    %1820 = vmatpush1.xpose.msra.mxu0 0.0
    %1821 = vmatprep.subr.mxu0 0.0
    %1822 = vmatpush1.xpose.msra.mxu0 0.0
    %1823 = vmatprep.subr.mxu0 0.0
    %1824 = vmatpush1.xpose.msra.mxu0 0.0
    %1825 = vmatprep.subr.mxu0 0.0
    %1826 = vmatpush1.xpose.msra.mxu0 0.0
    %1827 = vmatprep.subr.mxu0 0.0
    %1828 = vmatpush1.xpose.msra.mxu0 0.0
    %1829 = vmatprep.subr.mxu0 0.0
    %1830 = vmatpush1.xpose.msra.mxu0 0.0
    %1831 = vmatprep.subr.mxu0 0.0
    %1832 = vmatpush1.xpose.msra.mxu0 0.0
    %1833 = vmatprep.subr.mxu0 0.0
    %1834 = vmatpush1.xpose.msra.mxu0 0.0
    %1835 = vmatprep.subr.mxu0 0.0
    %1836 = vmatpush1.xpose.msra.mxu0 0.0
    %1837 = vmatprep.mubr.f32.mxu0 0.0
    %1838 = vmatmul.mubr.f32.gmra.mrb[0].mxu0 %v1765
    %v1839 = vpop.f32.mrb[0].mxu0
    %v1840 = vadd.f32 0.0, %v1839
    %v1841 = vpop.f32.mrb[0].mxu0
    %1842 = vmatprep.mubr.f32.mxu0 0.0
    %1843 = vmatmul.mubr.f32.gmra.mrb[0].mxu0 %v1767
    %v1844 = vpop.f32.mrb[0].mxu0
    %v1845 = vadd.f32 0.0, %v1844
    %v1846 = vpop.f32.mrb[0].mxu0
    %1847 = vdwg.mxu0
    %v1848 = vmul.f32 %v1840, 0.35355338
    %v1849 = vmul.f32 %v1845, 0.35355338
    %v1850 = vadd.f32 %v1848, %v82
    %v1851 = vadd.f32 %v1849, %v83
    %v1852 = vsel %vm321, %v1850, -inf
    %1853 = vmax.xlane.f32.xlu0 %v1852
    %v1854 = vpop.xlane.xlu0 %1853
    %v1855 = vsel %vm321, %v1851, -inf
    %1856 = vmax.xlane.f32.xlu0 %v1855
    %v1857 = vpop.xlane.xlu0 %1856
    %v1858 = vsub.f32 %v1850, %v1854
    %v1859 = vsub.f32 %v1851, %v1857
    %v1860 = vmul.f32 %v1858, 1.442695
    %v1861 = vpow.pop %v1860
    %v1862 = vmul.f32 %v1859, 1.442695
    %v1863 = vpow.pop %v1862
    %v1864 = vsel %vm321, %v1861, 0.0
    %1865 = vadd.xlane.f32.xlu0 %v1864
    %v1866 = vpop.xlane.xlu0 %1865
    %v1867 = vsel %vm321, %v1863, 0.0
    %1868 = vadd.xlane.f32.xlu0 %v1867
    %v1869 = vpop.xlane.xlu0 %1868
    %v1870 = vrcp.pop %v1866
    %v1871 = vrcp.pop %v1869
    %v1872 = vmul.f32 %v1861, %v1870
    %v1873 = vmul.f32 %v1863, %v1871
    %1874 = vrot.lane.b32.xlu0 %v1547, 56
    %v1875 = vpop.permute.xlu0 %1874
    %1876 = vrot.lane.b32.xlu0 %v1552, 56
    %v1877 = vpop.permute.xlu0 %1876
    %v1881 = vsel %vm321, %v1872, 0
    %v1884 = vsel %vm321, %v1873, 0
    %1886 = vmatprep.subr.mxu0 0.0
    %1887 = vmatpush1.msra.mxu0 %v1875
    %1888 = vmatprep.subr.mxu0 0.0
    %1889 = vmatpush1.msra.mxu0 %v1877
    %1890 = vmatprep.subr.mxu0 0.0
    %1891 = vmatpush1.msra.mxu0 0.0
    %1892 = vmatprep.subr.mxu0 0.0
    %1893 = vmatpush1.msra.mxu0 0.0
    %1894 = vmatprep.subr.mxu0 0.0
    %1895 = vmatpush1.msra.mxu0 0.0
    %1896 = vmatprep.subr.mxu0 0.0
    %1897 = vmatpush1.msra.mxu0 0.0
    %1898 = vmatprep.subr.mxu0 0.0
    %1899 = vmatpush1.msra.mxu0 0.0
    %1900 = vmatprep.subr.mxu0 0.0
    %1901 = vmatpush1.msra.mxu0 0.0
    %1902 = vmatprep.subr.mxu0 0.0
    %1903 = vmatpush1.msra.mxu0 0.0
    %1904 = vmatprep.subr.mxu0 0.0
    %1905 = vmatpush1.msra.mxu0 0.0
    %1906 = vmatprep.subr.mxu0 0.0
    %1907 = vmatpush1.msra.mxu0 0.0
    %1908 = vmatprep.subr.mxu0 0.0
    %1909 = vmatpush1.msra.mxu0 0.0
    %1910 = vmatprep.subr.mxu0 0.0
    %1911 = vmatpush1.msra.mxu0 0.0
    %1912 = vmatprep.subr.mxu0 0.0
    %1913 = vmatpush1.msra.mxu0 0.0
    %1914 = vmatprep.subr.mxu0 0.0
    %1915 = vmatpush1.msra.mxu0 0.0
    %1916 = vmatprep.subr.mxu0 0.0
    %1917 = vmatpush1.msra.mxu0 0.0
    %1918 = vmatprep.subr.mxu0 0.0
    %1919 = vmatpush1.msra.mxu0 0.0
    %1920 = vmatprep.subr.mxu0 0.0
    %1921 = vmatpush1.msra.mxu0 0.0
    %1922 = vmatprep.subr.mxu0 0.0
    %1923 = vmatpush1.msra.mxu0 0.0
    %1924 = vmatprep.subr.mxu0 0.0
    %1925 = vmatpush1.msra.mxu0 0.0
    %1926 = vmatprep.subr.mxu0 0.0
    %1927 = vmatpush1.msra.mxu0 0.0
    %1928 = vmatprep.subr.mxu0 0.0
    %1929 = vmatpush1.msra.mxu0 0.0
    %1930 = vmatprep.subr.mxu0 0.0
    %1931 = vmatpush1.msra.mxu0 0.0
    %1932 = vmatprep.subr.mxu0 0.0
    %1933 = vmatpush1.msra.mxu0 0.0
    %1934 = vmatprep.subr.mxu0 0.0
    %1935 = vmatpush1.msra.mxu0 0.0
    %1936 = vmatprep.subr.mxu0 0.0
    %1937 = vmatpush1.msra.mxu0 0.0
    %1938 = vmatprep.subr.mxu0 0.0
    %1939 = vmatpush1.msra.mxu0 0.0
    %1940 = vmatprep.subr.mxu0 0.0
    %1941 = vmatpush1.msra.mxu0 0.0
    %1942 = vmatprep.subr.mxu0 0.0
    %1943 = vmatpush1.msra.mxu0 0.0
    %1944 = vmatprep.subr.mxu0 0.0
    %1945 = vmatpush1.msra.mxu0 0.0
    %1946 = vmatprep.subr.mxu0 0.0
    %1947 = vmatpush1.msra.mxu0 0.0
    %1948 = vmatprep.subr.mxu0 0.0
    %1949 = vmatpush1.msra.mxu0 0.0
    %1950 = vmatprep.mubr.f32.mxu0 0.0
    %1951 = vmatmul.mubr.f32.gmra.mrb[0].mxu0 %v1881
    %v1952 = vpop.f32.mrb[0].mxu0
    %v1953 = vadd.f32 0.0, %v1952
    %v1954 = vpop.f32.mrb[0].mxu0
    %1955 = vmatprep.mubr.f32.mxu0 0.0
    %1956 = vmatmul.mubr.f32.gmra.mrb[0].mxu0 %v1884
    %v1957 = vpop.f32.mrb[0].mxu0
    %v1958 = vadd.f32 0.0, %v1957
    %v1959 = vpop.f32.mrb[0].mxu0
    %1960 = vdwg.mxu0
    %1961 = vrot.lane.b32.xlu0 %v1547, 112
    %v1962 = vpop.permute.xlu0 %1961
    %1963 = vrot.lane.b32.xlu0 %v1552, 112
    %v1964 = vpop.permute.xlu0 %1963
    %1965 = vrot.lane.b32.xlu0 %v1547, 80
    %v1966 = vpop.permute.xlu0 %1965
    %1967 = vrot.lane.b32.xlu0 %v1552, 80
    %v1968 = vpop.permute.xlu0 %1967
    %v1969 = vsel %vm233, %v1962, 0
    %v1971 = vsel %vm233, %v1964, 0
    %v1973 = vsel %vm233, %v1966, 0
    %v1975 = vsel %vm233, %v1968, 0
    %1977 = vmatprep.subr.mxu0 0.0
    %1978 = vmatpush1.xpose.msra.mxu0 %v1973
    %1979 = vmatprep.subr.mxu0 0.0
    %1980 = vmatpush1.xpose.msra.mxu0 %v1975
    %1981 = vmatprep.subr.mxu0 0.0
    %1982 = vmatpush1.xpose.msra.mxu0 0.0
    %1983 = vmatprep.subr.mxu0 0.0
    %1984 = vmatpush1.xpose.msra.mxu0 0.0
    %1985 = vmatprep.subr.mxu0 0.0
    %1986 = vmatpush1.xpose.msra.mxu0 0.0
    %1987 = vmatprep.subr.mxu0 0.0
    %1988 = vmatpush1.xpose.msra.mxu0 0.0
    %1989 = vmatprep.subr.mxu0 0.0
    %1990 = vmatpush1.xpose.msra.mxu0 0.0
    %1991 = vmatprep.subr.mxu0 0.0
    %1992 = vmatpush1.xpose.msra.mxu0 0.0
    %1993 = vmatprep.subr.mxu0 0.0
    %1994 = vmatpush1.xpose.msra.mxu0 0.0
    %1995 = vmatprep.subr.mxu0 0.0
    %1996 = vmatpush1.xpose.msra.mxu0 0.0
    %1997 = vmatprep.subr.mxu0 0.0
    %1998 = vmatpush1.xpose.msra.mxu0 0.0
    %1999 = vmatprep.subr.mxu0 0.0
    %2000 = vmatpush1.xpose.msra.mxu0 0.0
    %2001 = vmatprep.subr.mxu0 0.0
    %2002 = vmatpush1.xpose.msra.mxu0 0.0
    %2003 = vmatprep.subr.mxu0 0.0
    %2004 = vmatpush1.xpose.msra.mxu0 0.0
    %2005 = vmatprep.subr.mxu0 0.0
    %2006 = vmatpush1.xpose.msra.mxu0 0.0
    %2007 = vmatprep.subr.mxu0 0.0
    %2008 = vmatpush1.xpose.msra.mxu0 0.0
    %2009 = vmatprep.subr.mxu0 0.0
    %2010 = vmatpush1.xpose.msra.mxu0 0.0
    %2011 = vmatprep.subr.mxu0 0.0
    %2012 = vmatpush1.xpose.msra.mxu0 0.0
    %2013 = vmatprep.subr.mxu0 0.0
    %2014 = vmatpush1.xpose.msra.mxu0 0.0
    %2015 = vmatprep.subr.mxu0 0.0
    %2016 = vmatpush1.xpose.msra.mxu0 0.0
    %2017 = vmatprep.subr.mxu0 0.0
    %2018 = vmatpush1.xpose.msra.mxu0 0.0
    %2019 = vmatprep.subr.mxu0 0.0
    %2020 = vmatpush1.xpose.msra.mxu0 0.0
    %2021 = vmatprep.subr.mxu0 0.0
    %2022 = vmatpush1.xpose.msra.mxu0 0.0
    %2023 = vmatprep.subr.mxu0 0.0
    %2024 = vmatpush1.xpose.msra.mxu0 0.0
    %2025 = vmatprep.subr.mxu0 0.0
    %2026 = vmatpush1.xpose.msra.mxu0 0.0
    %2027 = vmatprep.subr.mxu0 0.0
    %2028 = vmatpush1.xpose.msra.mxu0 0.0
    %2029 = vmatprep.subr.mxu0 0.0
    %2030 = vmatpush1.xpose.msra.mxu0 0.0
    %2031 = vmatprep.subr.mxu0 0.0
    %2032 = vmatpush1.xpose.msra.mxu0 0.0
    %2033 = vmatprep.subr.mxu0 0.0
    %2034 = vmatpush1.xpose.msra.mxu0 0.0
    %2035 = vmatprep.subr.mxu0 0.0
    %2036 = vmatpush1.xpose.msra.mxu0 0.0
    %2037 = vmatprep.subr.mxu0 0.0
    %2038 = vmatpush1.xpose.msra.mxu0 0.0
    %2039 = vmatprep.subr.mxu0 0.0
    %2040 = vmatpush1.xpose.msra.mxu0 0.0
    %2041 = vmatprep.mubr.f32.mxu0 0.0
    %2042 = vmatmul.mubr.f32.gmra.mrb[0].mxu0 %v1969
    %v2043 = vpop.f32.mrb[0].mxu0
    %v2044 = vadd.f32 0.0, %v2043
    %v2045 = vpop.f32.mrb[0].mxu0
    %2046 = vmatprep.mubr.f32.mxu0 0.0
    %2047 = vmatmul.mubr.f32.gmra.mrb[0].mxu0 %v1971
    %v2048 = vpop.f32.mrb[0].mxu0
    %v2049 = vadd.f32 0.0, %v2048
    %v2050 = vpop.f32.mrb[0].mxu0
    %2051 = vdwg.mxu0
    %v2052 = vmul.f32 %v2044, 0.35355338
    %v2053 = vmul.f32 %v2049, 0.35355338
    %v2054 = vadd.f32 %v2052, %v82
    %v2055 = vadd.f32 %v2053, %v83
    %v2056 = vsel %vm321, %v2054, -inf
    %2057 = vmax.xlane.f32.xlu0 %v2056
    %v2058 = vpop.xlane.xlu0 %2057
    %v2059 = vsel %vm321, %v2055, -inf
    %2060 = vmax.xlane.f32.xlu0 %v2059
    %v2061 = vpop.xlane.xlu0 %2060
    %v2062 = vsub.f32 %v2054, %v2058
    %v2063 = vsub.f32 %v2055, %v2061
    %v2064 = vmul.f32 %v2062, 1.442695
    %v2065 = vpow.pop %v2064
    %v2066 = vmul.f32 %v2063, 1.442695
    %v2067 = vpow.pop %v2066
    %v2068 = vsel %vm321, %v2065, 0.0
    %2069 = vadd.xlane.f32.xlu0 %v2068
    %v2070 = vpop.xlane.xlu0 %2069
    %v2071 = vsel %vm321, %v2067, 0.0
    %2072 = vadd.xlane.f32.xlu0 %v2071
    %v2073 = vpop.xlane.xlu0 %2072
    %v2074 = vrcp.pop %v2070
    %v2075 = vrcp.pop %v2073
    %v2076 = vmul.f32 %v2065, %v2074
    %v2077 = vmul.f32 %v2067, %v2075
    %2078 = vrot.lane.b32.xlu0 %v1547, 48
    %v2079 = vpop.permute.xlu0 %2078
    %2080 = vrot.lane.b32.xlu0 %v1552, 48
    %v2081 = vpop.permute.xlu0 %2080
    %v2085 = vsel %vm321, %v2076, 0
    %v2088 = vsel %vm321, %v2077, 0
    %2090 = vmatprep.subr.mxu0 0.0
    %2091 = vmatpush1.msra.mxu0 %v2079
    %2092 = vmatprep.subr.mxu0 0.0
    %2093 = vmatpush1.msra.mxu0 %v2081
    %2094 = vmatprep.subr.mxu0 0.0
    %2095 = vmatpush1.msra.mxu0 0.0
    %2096 = vmatprep.subr.mxu0 0.0
    %2097 = vmatpush1.msra.mxu0 0.0
    %2098 = vmatprep.subr.mxu0 0.0
    %2099 = vmatpush1.msra.mxu0 0.0
    %2100 = vmatprep.subr.mxu0 0.0
    %2101 = vmatpush1.msra.mxu0 0.0
    %2102 = vmatprep.subr.mxu0 0.0
    %2103 = vmatpush1.msra.mxu0 0.0
    %2104 = vmatprep.subr.mxu0 0.0
    %2105 = vmatpush1.msra.mxu0 0.0
    %2106 = vmatprep.subr.mxu0 0.0
    %2107 = vmatpush1.msra.mxu0 0.0
    %2108 = vmatprep.subr.mxu0 0.0
    %2109 = vmatpush1.msra.mxu0 0.0
    %2110 = vmatprep.subr.mxu0 0.0
    %2111 = vmatpush1.msra.mxu0 0.0
    %2112 = vmatprep.subr.mxu0 0.0
    %2113 = vmatpush1.msra.mxu0 0.0
    %2114 = vmatprep.subr.mxu0 0.0
    %2115 = vmatpush1.msra.mxu0 0.0
    %2116 = vmatprep.subr.mxu0 0.0
    %2117 = vmatpush1.msra.mxu0 0.0
    %2118 = vmatprep.subr.mxu0 0.0
    %2119 = vmatpush1.msra.mxu0 0.0
    %2120 = vmatprep.subr.mxu0 0.0
    %2121 = vmatpush1.msra.mxu0 0.0
    %2122 = vmatprep.subr.mxu0 0.0
    %2123 = vmatpush1.msra.mxu0 0.0
    %2124 = vmatprep.subr.mxu0 0.0
    %2125 = vmatpush1.msra.mxu0 0.0
    %2126 = vmatprep.subr.mxu0 0.0
    %2127 = vmatpush1.msra.mxu0 0.0
    %2128 = vmatprep.subr.mxu0 0.0
    %2129 = vmatpush1.msra.mxu0 0.0
    %2130 = vmatprep.subr.mxu0 0.0
    %2131 = vmatpush1.msra.mxu0 0.0
    %2132 = vmatprep.subr.mxu0 0.0
    %2133 = vmatpush1.msra.mxu0 0.0
    %2134 = vmatprep.subr.mxu0 0.0
    %2135 = vmatpush1.msra.mxu0 0.0
    %2136 = vmatprep.subr.mxu0 0.0
    %2137 = vmatpush1.msra.mxu0 0.0
    %2138 = vmatprep.subr.mxu0 0.0
    %2139 = vmatpush1.msra.mxu0 0.0
    %2140 = vmatprep.subr.mxu0 0.0
    %2141 = vmatpush1.msra.mxu0 0.0
    %2142 = vmatprep.subr.mxu0 0.0
    %2143 = vmatpush1.msra.mxu0 0.0
    %2144 = vmatprep.subr.mxu0 0.0
    %2145 = vmatpush1.msra.mxu0 0.0
    %2146 = vmatprep.subr.mxu0 0.0
    %2147 = vmatpush1.msra.mxu0 0.0
    %2148 = vmatprep.subr.mxu0 0.0
    %2149 = vmatpush1.msra.mxu0 0.0
    %2150 = vmatprep.subr.mxu0 0.0
    %2151 = vmatpush1.msra.mxu0 0.0
    %2152 = vmatprep.subr.mxu0 0.0
    %2153 = vmatpush1.msra.mxu0 0.0
    %2154 = vmatprep.mubr.f32.mxu0 0.0
    %2155 = vmatmul.mubr.f32.gmra.mrb[0].mxu0 %v2085
    %v2156 = vpop.f32.mrb[0].mxu0
    %v2157 = vadd.f32 0.0, %v2156
    %v2158 = vpop.f32.mrb[0].mxu0
    %2159 = vmatprep.mubr.f32.mxu0 0.0
    %2160 = vmatmul.mubr.f32.gmra.mrb[0].mxu0 %v2088
    %v2161 = vpop.f32.mrb[0].mxu0
    %v2162 = vadd.f32 0.0, %v2161
    %v2163 = vpop.f32.mrb[0].mxu0
    %2164 = vdwg.mxu0
    %2165 = vrot.lane.b32.xlu0 %v1547, 104
    %v2166 = vpop.permute.xlu0 %2165
    %2167 = vrot.lane.b32.xlu0 %v1552, 104
    %v2168 = vpop.permute.xlu0 %2167
    %2169 = vrot.lane.b32.xlu0 %v1547, 72
    %v2170 = vpop.permute.xlu0 %2169
    %2171 = vrot.lane.b32.xlu0 %v1552, 72
    %v2172 = vpop.permute.xlu0 %2171
    %v2173 = vsel %vm233, %v2166, 0
    %v2175 = vsel %vm233, %v2168, 0
    %v2177 = vsel %vm233, %v2170, 0
    %v2179 = vsel %vm233, %v2172, 0
    %2181 = vmatprep.subr.mxu0 0.0
    %2182 = vmatpush1.xpose.msra.mxu0 %v2177
    %2183 = vmatprep.subr.mxu0 0.0
    %2184 = vmatpush1.xpose.msra.mxu0 %v2179
    %2185 = vmatprep.subr.mxu0 0.0
    %2186 = vmatpush1.xpose.msra.mxu0 0.0
    %2187 = vmatprep.subr.mxu0 0.0
    %2188 = vmatpush1.xpose.msra.mxu0 0.0
    %2189 = vmatprep.subr.mxu0 0.0
    %2190 = vmatpush1.xpose.msra.mxu0 0.0
    %2191 = vmatprep.subr.mxu0 0.0
    %2192 = vmatpush1.xpose.msra.mxu0 0.0
    %2193 = vmatprep.subr.mxu0 0.0
    %2194 = vmatpush1.xpose.msra.mxu0 0.0
    %2195 = vmatprep.subr.mxu0 0.0
    %2196 = vmatpush1.xpose.msra.mxu0 0.0
    %2197 = vmatprep.subr.mxu0 0.0
    %2198 = vmatpush1.xpose.msra.mxu0 0.0
    %2199 = vmatprep.subr.mxu0 0.0
    %2200 = vmatpush1.xpose.msra.mxu0 0.0
    %2201 = vmatprep.subr.mxu0 0.0
    %2202 = vmatpush1.xpose.msra.mxu0 0.0
    %2203 = vmatprep.subr.mxu0 0.0
    %2204 = vmatpush1.xpose.msra.mxu0 0.0
    %2205 = vmatprep.subr.mxu0 0.0
    %2206 = vmatpush1.xpose.msra.mxu0 0.0
    %2207 = vmatprep.subr.mxu0 0.0
    %2208 = vmatpush1.xpose.msra.mxu0 0.0
    %2209 = vmatprep.subr.mxu0 0.0
    %2210 = vmatpush1.xpose.msra.mxu0 0.0
    %2211 = vmatprep.subr.mxu0 0.0
    %2212 = vmatpush1.xpose.msra.mxu0 0.0
    %2213 = vmatprep.subr.mxu0 0.0
    %2214 = vmatpush1.xpose.msra.mxu0 0.0
    %2215 = vmatprep.subr.mxu0 0.0
    %2216 = vmatpush1.xpose.msra.mxu0 0.0
    %2217 = vmatprep.subr.mxu0 0.0
    %2218 = vmatpush1.xpose.msra.mxu0 0.0
    %2219 = vmatprep.subr.mxu0 0.0
    %2220 = vmatpush1.xpose.msra.mxu0 0.0
    %2221 = vmatprep.subr.mxu0 0.0
    %2222 = vmatpush1.xpose.msra.mxu0 0.0
    %2223 = vmatprep.subr.mxu0 0.0
    %2224 = vmatpush1.xpose.msra.mxu0 0.0
    %2225 = vmatprep.subr.mxu0 0.0
    %2226 = vmatpush1.xpose.msra.mxu0 0.0
    %2227 = vmatprep.subr.mxu0 0.0
    %2228 = vmatpush1.xpose.msra.mxu0 0.0
    %2229 = vmatprep.subr.mxu0 0.0
    %2230 = vmatpush1.xpose.msra.mxu0 0.0
    %2231 = vmatprep.subr.mxu0 0.0
    %2232 = vmatpush1.xpose.msra.mxu0 0.0
    %2233 = vmatprep.subr.mxu0 0.0
    %2234 = vmatpush1.xpose.msra.mxu0 0.0
    %2235 = vmatprep.subr.mxu0 0.0
    %2236 = vmatpush1.xpose.msra.mxu0 0.0
    %2237 = vmatprep.subr.mxu0 0.0
    %2238 = vmatpush1.xpose.msra.mxu0 0.0
    %2239 = vmatprep.subr.mxu0 0.0
    %2240 = vmatpush1.xpose.msra.mxu0 0.0
    %2241 = vmatprep.subr.mxu0 0.0
    %2242 = vmatpush1.xpose.msra.mxu0 0.0
    %2243 = vmatprep.subr.mxu0 0.0
    %2244 = vmatpush1.xpose.msra.mxu0 0.0
    %2245 = vmatprep.mubr.f32.mxu0 0.0
    %2246 = vmatmul.mubr.f32.gmra.mrb[0].mxu0 %v2173
    %v2247 = vpop.f32.mrb[0].mxu0
    %v2248 = vadd.f32 0.0, %v2247
    %v2249 = vpop.f32.mrb[0].mxu0
    %2250 = vmatprep.mubr.f32.mxu0 0.0
    %2251 = vmatmul.mubr.f32.gmra.mrb[0].mxu0 %v2175
    %v2252 = vpop.f32.mrb[0].mxu0
    %v2253 = vadd.f32 0.0, %v2252
    %v2254 = vpop.f32.mrb[0].mxu0
    %2255 = vdwg.mxu0
    %v2256 = vmul.f32 %v2248, 0.35355338
    %v2257 = vmul.f32 %v2253, 0.35355338
    %v2258 = vadd.f32 %v2256, %v82
    %v2259 = vadd.f32 %v2257, %v83
    %v2260 = vsel %vm321, %v2258, -inf
    %2261 = vmax.xlane.f32.xlu0 %v2260
    %v2262 = vpop.xlane.xlu0 %2261
    %v2263 = vsel %vm321, %v2259, -inf
    %2264 = vmax.xlane.f32.xlu0 %v2263
    %v2265 = vpop.xlane.xlu0 %2264
    %v2266 = vsub.f32 %v2258, %v2262
    %v2267 = vsub.f32 %v2259, %v2265
    %v2268 = vmul.f32 %v2266, 1.442695
    %v2269 = vpow.pop %v2268
    %v2270 = vmul.f32 %v2267, 1.442695
    %v2271 = vpow.pop %v2270
    %v2272 = vsel %vm321, %v2269, 0.0
    %2273 = vadd.xlane.f32.xlu0 %v2272
    %v2274 = vpop.xlane.xlu0 %2273
    %v2275 = vsel %vm321, %v2271, 0.0
    %2276 = vadd.xlane.f32.xlu0 %v2275
    %v2277 = vpop.xlane.xlu0 %2276
    %v2278 = vrcp.pop %v2274
    %v2279 = vrcp.pop %v2277
    %v2280 = vmul.f32 %v2269, %v2278
    %v2281 = vmul.f32 %v2271, %v2279
    %2282 = vrot.lane.b32.xlu0 %v1547, 40
    %v2283 = vpop.permute.xlu0 %2282
    %2284 = vrot.lane.b32.xlu0 %v1552, 40
    %v2285 = vpop.permute.xlu0 %2284
    %v2289 = vsel %vm321, %v2280, 0
    %v2292 = vsel %vm321, %v2281, 0
    %2294 = vmatprep.subr.mxu0 0.0
    %2295 = vmatpush1.msra.mxu0 %v2283
    %2296 = vmatprep.subr.mxu0 0.0
    %2297 = vmatpush1.msra.mxu0 %v2285
    %2298 = vmatprep.subr.mxu0 0.0
    %2299 = vmatpush1.msra.mxu0 0.0
    %2300 = vmatprep.subr.mxu0 0.0
    %2301 = vmatpush1.msra.mxu0 0.0
    %2302 = vmatprep.subr.mxu0 0.0
    %2303 = vmatpush1.msra.mxu0 0.0
    %2304 = vmatprep.subr.mxu0 0.0
    %2305 = vmatpush1.msra.mxu0 0.0
    %2306 = vmatprep.subr.mxu0 0.0
    %2307 = vmatpush1.msra.mxu0 0.0
    %2308 = vmatprep.subr.mxu0 0.0
    %2309 = vmatpush1.msra.mxu0 0.0
    %2310 = vmatprep.subr.mxu0 0.0
    %2311 = vmatpush1.msra.mxu0 0.0
    %2312 = vmatprep.subr.mxu0 0.0
    %2313 = vmatpush1.msra.mxu0 0.0
    %2314 = vmatprep.subr.mxu0 0.0
    %2315 = vmatpush1.msra.mxu0 0.0
    %2316 = vmatprep.subr.mxu0 0.0
    %2317 = vmatpush1.msra.mxu0 0.0
    %2318 = vmatprep.subr.mxu0 0.0
    %2319 = vmatpush1.msra.mxu0 0.0
    %2320 = vmatprep.subr.mxu0 0.0
    %2321 = vmatpush1.msra.mxu0 0.0
    %2322 = vmatprep.subr.mxu0 0.0
    %2323 = vmatpush1.msra.mxu0 0.0
    %2324 = vmatprep.subr.mxu0 0.0
    %2325 = vmatpush1.msra.mxu0 0.0
    %2326 = vmatprep.subr.mxu0 0.0
    %2327 = vmatpush1.msra.mxu0 0.0
    %2328 = vmatprep.subr.mxu0 0.0
    %2329 = vmatpush1.msra.mxu0 0.0
    %2330 = vmatprep.subr.mxu0 0.0
    %2331 = vmatpush1.msra.mxu0 0.0
    %2332 = vmatprep.subr.mxu0 0.0
    %2333 = vmatpush1.msra.mxu0 0.0
    %2334 = vmatprep.subr.mxu0 0.0
    %2335 = vmatpush1.msra.mxu0 0.0
    %2336 = vmatprep.subr.mxu0 0.0
    %2337 = vmatpush1.msra.mxu0 0.0
    %2338 = vmatprep.subr.mxu0 0.0
    %2339 = vmatpush1.msra.mxu0 0.0
    %2340 = vmatprep.subr.mxu0 0.0
    %2341 = vmatpush1.msra.mxu0 0.0
    %2342 = vmatprep.subr.mxu0 0.0
    %2343 = vmatpush1.msra.mxu0 0.0
    %2344 = vmatprep.subr.mxu0 0.0
    %2345 = vmatpush1.msra.mxu0 0.0
    %2346 = vmatprep.subr.mxu0 0.0
    %2347 = vmatpush1.msra.mxu0 0.0
    %2348 = vmatprep.subr.mxu0 0.0
    %2349 = vmatpush1.msra.mxu0 0.0
    %2350 = vmatprep.subr.mxu0 0.0
    %2351 = vmatpush1.msra.mxu0 0.0
    %2352 = vmatprep.subr.mxu0 0.0
    %2353 = vmatpush1.msra.mxu0 0.0
    %2354 = vmatprep.subr.mxu0 0.0
    %2355 = vmatpush1.msra.mxu0 0.0
    %2356 = vmatprep.subr.mxu0 0.0
    %2357 = vmatpush1.msra.mxu0 0.0
    %2358 = vmatprep.mubr.f32.mxu0 0.0
    %2359 = vmatmul.mubr.f32.gmra.mrb[0].mxu0 %v2289
    %v2360 = vpop.f32.mrb[0].mxu0
    %v2361 = vadd.f32 0.0, %v2360
    %v2362 = vpop.f32.mrb[0].mxu0
    %2363 = vmatprep.mubr.f32.mxu0 0.0
    %2364 = vmatmul.mubr.f32.gmra.mrb[0].mxu0 %v2292
    %v2365 = vpop.f32.mrb[0].mxu0
    %v2366 = vadd.f32 0.0, %v2365
    %v2367 = vpop.f32.mrb[0].mxu0
    %2368 = vdwg.mxu0
    %2371 = vrot.lane.b32.xlu0 %v1953, 8
    %v2372 = vpop.permute.xlu0 %2371
    %2373 = vrot.lane.b32.xlu0 %v1958, 8
    %v2374 = vpop.permute.xlu0 %2373
    %2379 = vrot.lane.b32.xlu0 %v2157, 16
    %v2380 = vpop.permute.xlu0 %2379
    %2381 = vrot.lane.b32.xlu0 %v2162, 16
    %v2382 = vpop.permute.xlu0 %2381
    %2387 = vrot.lane.b32.xlu0 %v2361, 24
    %v2388 = vpop.permute.xlu0 %2387
    %2389 = vrot.lane.b32.xlu0 %v2366, 24
    %v2390 = vpop.permute.xlu0 %2389
    %v2393 = vsel %vm233, %v1749, %v2372
    %v2394 = vsel %vm233, %v1754, %v2374
    %v2395 = vsel %vm321, %v2393, %v2380
    %v2396 = vsel %vm321, %v2394, %v2382
    %v2397 = vsel %vm1071, %v2395, %v2388
    %v2398 = vsel %vm1071, %v2396, %v2390
    %s2399 = scalar_lea.vmem %s4, 32
    %v2400 = vld [vmem:[%s2399] sm:$0xff]
    %v2401 = vld [vmem:[%s2399 + $0x8] sm:$0xff]
    %v2402 = vld [vmem:[%s2399 + $0x10] sm:$0xff]
    %v2403 = vld [vmem:[%s2399 + $0x18] sm:$0xff]
    %v2405 = vsel %vm86, %v2397, 0
    %v2408 = vsel %vm86, %v2398, 0
    %2410 = vmatprep.subr.mxu0 0.0
    %2411 = vmatpush1.msra.mxu0 %v2400
    %2412 = vmatprep.subr.mxu0 0.0
    %2413 = vmatpush1.msra.mxu0 %v2401
    %2414 = vmatprep.subr.mxu0 0.0
    %2415 = vmatpush1.msra.mxu0 %v2402
    %2416 = vmatprep.subr.mxu0 0.0
    %2417 = vmatpush1.msra.mxu0 %v2403
    %2418 = vmatprep.subr.mxu0 0.0
    %2419 = vmatpush1.msra.mxu0 0.0
    %2420 = vmatprep.subr.mxu0 0.0
    %2421 = vmatpush1.msra.mxu0 0.0
    %2422 = vmatprep.subr.mxu0 0.0
    %2423 = vmatpush1.msra.mxu0 0.0
    %2424 = vmatprep.subr.mxu0 0.0
    %2425 = vmatpush1.msra.mxu0 0.0
    %2426 = vmatprep.subr.mxu0 0.0
    %2427 = vmatpush1.msra.mxu0 0.0
    %2428 = vmatprep.subr.mxu0 0.0
    %2429 = vmatpush1.msra.mxu0 0.0
    %2430 = vmatprep.subr.mxu0 0.0
    %2431 = vmatpush1.msra.mxu0 0.0
    %2432 = vmatprep.subr.mxu0 0.0
    %2433 = vmatpush1.msra.mxu0 0.0
    %2434 = vmatprep.subr.mxu0 0.0
    %2435 = vmatpush1.msra.mxu0 0.0
    %2436 = vmatprep.subr.mxu0 0.0
    %2437 = vmatpush1.msra.mxu0 0.0
    %2438 = vmatprep.subr.mxu0 0.0
    %2439 = vmatpush1.msra.mxu0 0.0
    %2440 = vmatprep.subr.mxu0 0.0
    %2441 = vmatpush1.msra.mxu0 0.0
    %2442 = vmatprep.subr.mxu0 0.0
    %2443 = vmatpush1.msra.mxu0 0.0
    %2444 = vmatprep.subr.mxu0 0.0
    %2445 = vmatpush1.msra.mxu0 0.0
    %2446 = vmatprep.subr.mxu0 0.0
    %2447 = vmatpush1.msra.mxu0 0.0
    %2448 = vmatprep.subr.mxu0 0.0
    %2449 = vmatpush1.msra.mxu0 0.0
    %2450 = vmatprep.subr.mxu0 0.0
    %2451 = vmatpush1.msra.mxu0 0.0
    %2452 = vmatprep.subr.mxu0 0.0
    %2453 = vmatpush1.msra.mxu0 0.0
    %2454 = vmatprep.subr.mxu0 0.0
    %2455 = vmatpush1.msra.mxu0 0.0
    %2456 = vmatprep.subr.mxu0 0.0
    %2457 = vmatpush1.msra.mxu0 0.0
    %2458 = vmatprep.subr.mxu0 0.0
    %2459 = vmatpush1.msra.mxu0 0.0
    %2460 = vmatprep.subr.mxu0 0.0
    %2461 = vmatpush1.msra.mxu0 0.0
    %2462 = vmatprep.subr.mxu0 0.0
    %2463 = vmatpush1.msra.mxu0 0.0
    %2464 = vmatprep.subr.mxu0 0.0
    %2465 = vmatpush1.msra.mxu0 0.0
    %2466 = vmatprep.subr.mxu0 0.0
    %2467 = vmatpush1.msra.mxu0 0.0
    %2468 = vmatprep.subr.mxu0 0.0
    %2469 = vmatpush1.msra.mxu0 0.0
    %2470 = vmatprep.subr.mxu0 0.0
    %2471 = vmatpush1.msra.mxu0 0.0
    %2472 = vmatprep.subr.mxu0 0.0
    %2473 = vmatpush1.msra.mxu0 0.0
    %2474 = vmatprep.mubr.f32.mxu0 0.0
    %2475 = vmatmul.mubr.f32.gmra.mrb[0].mxu0 %v2405
    %v2476 = vpop.f32.mrb[0].mxu0
    %v2477 = vadd.f32 0.0, %v2476
    %v2478 = vpop.f32.mrb[0].mxu0
    %2479 = vmatprep.mubr.f32.mxu0 0.0
    %2480 = vmatmul.mubr.f32.gmra.mrb[0].mxu0 %v2408
    %v2481 = vpop.f32.mrb[0].mxu0
    %v2482 = vadd.f32 0.0, %v2481
    %v2483 = vpop.f32.mrb[0].mxu0
    %2484 = vdwg.mxu0
    %v2485 = vadd.f32 %v1411, %v2477
    %v2486 = vadd.f32 %v1412, %v2482
    %s2487 = scalar_lea.vmem %s5, 1
    %v2488 = vld [vmem:[%s2487] sm:$0x1]
    %v2490 = vlaneseq
    %v2491 = vshrl.u32 %v2490, 7
    %v2492 = vsub.s32 0, %v2491
    %v2493 = vrot.slane %v2488, %v2492
    %v2495 = vadd.f32 %v2485, %v2493
    %v2496 = vadd.f32 %v2486, %v2493
    %s2497 = sld [smem:[#allocation8 + $0x6]]
    %s2498 = sld [smem:[#allocation8 + $0x7]]
    %v2499 = vsel %vm86, %v2495, 0.0
    %2500 = vadd.xlane.f32.xlu0 %v2499
    %v2501 = vpop.xlane.xlu0 %2500
    %v2502 = vsel %vm86, %v2496, 0.0
    %2503 = vadd.xlane.f32.xlu0 %v2502
    %v2504 = vpop.xlane.xlu0 %2503
    %v2505 = vmul.f32 %v2501, %v93
    %v2506 = vmul.f32 %v2504, %v93
    %v2507 = vsub.f32 %v2495, %v2505
    %v2508 = vsub.f32 %v2496, %v2506
    %v2509 = vmul.f32 %v2507, %v2507
    %v2510 = vmul.f32 %v2508, %v2508
    %v2511 = vsel %vm86, %v2509, 0.0
    %2512 = vadd.xlane.f32.xlu0 %v2511
    %v2513 = vpop.xlane.xlu0 %2512
    %v2514 = vsel %vm86, %v2510, 0.0
    %2515 = vadd.xlane.f32.xlu0 %v2514
    %v2516 = vpop.xlane.xlu0 %2515
    %v2517 = vmul.f32 %v2513, %v106
    %v2518 = vmul.f32 %v2516, %v106
    %v2519 = vrsqrt.pop %v2517
    %v2520 = vmul.f32 %v2517, %v2519
    %vm2521 = vcmp.eq.f32.partialorder %v2517, inf
    %v2522 = vsel %vm2521, %v2517, %v2520
    %vm2523 = vcmp.eq.f32.partialorder %v2517, 0.0
    %v2524 = vand.u32 %v2517, 2147483648
    %v2525 = vsel %vm2523, %v2524, %v2522
    %v2526 = vrsqrt.pop %v2518
    %v2527 = vmul.f32 %v2518, %v2526
    %vm2528 = vcmp.eq.f32.partialorder %v2518, inf
    %v2529 = vsel %vm2528, %v2518, %v2527
    %vm2530 = vcmp.eq.f32.partialorder %v2518, 0.0
    %v2531 = vand.u32 %v2518, 2147483648
    %v2532 = vsel %vm2530, %v2531, %v2529
    %v2533 = vadd.f32 %v2525, 1e-06
    %v2534 = vadd.f32 %v2532, 1e-06
    %v2535 = vrcp.pop %v2533
    %v2536 = vrcp.pop %v2534
    %v2537 = vstv %s2497
    %v2538 = vmul.f32 %v2537, %v2507
    %v2539 = vmul.f32 %v2537, %v2508
    %v2540 = vmul.f32 %v2538, %v2535
    %v2541 = vmul.f32 %v2539, %v2536
    %v2542 = vstv %s2498
    %v2543 = vadd.f32 %v2540, %v2542
    %v2544 = vadd.f32 %v2541, %v2542
    %s2545 = scalar_lea.vmem %s6, 32
    %v2546 = vld [vmem:[%s2545] sm:$0xff]
    %v2547 = vld [vmem:[%s2545 + $0x8] sm:$0xff]
    %v2548 = vld [vmem:[%s2545 + $0x10] sm:$0xff]
    %v2549 = vld [vmem:[%s2545 + $0x18] sm:$0xff]
    %s2550 = scalar_lea.vmem %s7, 1
    %v2551 = vld [vmem:[%s2550] sm:$0x1]
    %v2553 = vlaneseq
    %v2554 = vshrl.u32 %v2553, 7
    %v2555 = vsub.s32 0, %v2554
    %v2556 = vrot.slane %v2551, %v2555
    %v2559 = vsel %vm86, %v2543, 0
    %v2562 = vsel %vm86, %v2544, 0
    %2564 = vmatprep.subr.mxu0 0.0
    %2565 = vmatpush1.msra.mxu0 %v2546
    %2566 = vmatprep.subr.mxu0 0.0
    %2567 = vmatpush1.msra.mxu0 %v2547
    %2568 = vmatprep.subr.mxu0 0.0
    %2569 = vmatpush1.msra.mxu0 %v2548
    %2570 = vmatprep.subr.mxu0 0.0
    %2571 = vmatpush1.msra.mxu0 %v2549
    %2572 = vmatprep.subr.mxu0 0.0
    %2573 = vmatpush1.msra.mxu0 0.0
    %2574 = vmatprep.subr.mxu0 0.0
    %2575 = vmatpush1.msra.mxu0 0.0
    %2576 = vmatprep.subr.mxu0 0.0
    %2577 = vmatpush1.msra.mxu0 0.0
    %2578 = vmatprep.subr.mxu0 0.0
    %2579 = vmatpush1.msra.mxu0 0.0
    %2580 = vmatprep.subr.mxu0 0.0
    %2581 = vmatpush1.msra.mxu0 0.0
    %2582 = vmatprep.subr.mxu0 0.0
    %2583 = vmatpush1.msra.mxu0 0.0
    %2584 = vmatprep.subr.mxu0 0.0
    %2585 = vmatpush1.msra.mxu0 0.0
    %2586 = vmatprep.subr.mxu0 0.0
    %2587 = vmatpush1.msra.mxu0 0.0
    %2588 = vmatprep.subr.mxu0 0.0
    %2589 = vmatpush1.msra.mxu0 0.0
    %2590 = vmatprep.subr.mxu0 0.0
    %2591 = vmatpush1.msra.mxu0 0.0
    %2592 = vmatprep.subr.mxu0 0.0
    %2593 = vmatpush1.msra.mxu0 0.0
    %2594 = vmatprep.subr.mxu0 0.0
    %2595 = vmatpush1.msra.mxu0 0.0
    %2596 = vmatprep.subr.mxu0 0.0
    %2597 = vmatpush1.msra.mxu0 0.0
    %2598 = vmatprep.subr.mxu0 0.0
    %2599 = vmatpush1.msra.mxu0 0.0
    %2600 = vmatprep.subr.mxu0 0.0
    %2601 = vmatpush1.msra.mxu0 0.0
    %2602 = vmatprep.subr.mxu0 0.0
    %2603 = vmatpush1.msra.mxu0 0.0
    %2604 = vmatprep.subr.mxu0 0.0
    %2605 = vmatpush1.msra.mxu0 0.0
    %2606 = vmatprep.subr.mxu0 0.0
    %2607 = vmatpush1.msra.mxu0 0.0
    %2608 = vmatprep.subr.mxu0 0.0
    %2609 = vmatpush1.msra.mxu0 0.0
    %2610 = vmatprep.subr.mxu0 0.0
    %2611 = vmatpush1.msra.mxu0 0.0
    %2612 = vmatprep.subr.mxu0 0.0
    %2613 = vmatpush1.msra.mxu0 0.0
    %2614 = vmatprep.subr.mxu0 0.0
    %2615 = vmatpush1.msra.mxu0 0.0
    %2616 = vmatprep.subr.mxu0 0.0
    %2617 = vmatpush1.msra.mxu0 0.0
    %2618 = vmatprep.subr.mxu0 0.0
    %2619 = vmatpush1.msra.mxu0 0.0
    %2620 = vmatprep.subr.mxu0 0.0
    %2621 = vmatpush1.msra.mxu0 0.0
    %2622 = vmatprep.subr.mxu0 0.0
    %2623 = vmatpush1.msra.mxu0 0.0
    %2624 = vmatprep.subr.mxu0 0.0
    %2625 = vmatpush1.msra.mxu0 0.0
    %2626 = vmatprep.subr.mxu0 0.0
    %2627 = vmatpush1.msra.mxu0 0.0
    %2628 = vmatprep.mubr.f32.mxu0 0.0
    %2629 = vmatmul.mubr.f32.gmra.mrb[0].mxu0 %v2559
    %v2630 = vpop.f32.mrb[0].mxu0
    %v2631 = vadd.f32 %v2556, %v2630
    %v2632 = vpop.f32.mrb[0].mxu0
    %2633 = vmatprep.mubr.f32.mxu0 0.0
    %2634 = vmatmul.mubr.f32.gmra.mrb[0].mxu0 %v2562
    %v2635 = vpop.f32.mrb[0].mxu0
    %v2636 = vadd.f32 %v2556, %v2635
    %v2637 = vpop.f32.mrb[0].mxu0
    %2638 = vdwg.mxu0
    %v2639 = vmax.f32 %v2631, 0.0
    %v2640 = vmax.f32 %v2636, 0.0
    %s2641 = scalar_lea.vmem %s8, 64
    %v2642 = vld [vmem:[%s2641] sm:$0xff]
    %v2643 = vld [vmem:[%s2641 + $0x8] sm:$0xff]
    %v2644 = vld [vmem:[%s2641 + $0x10] sm:$0xff]
    %v2645 = vld [vmem:[%s2641 + $0x18] sm:$0xff]
    %v2646 = vld [vmem:[%s2641 + $0x20] sm:$0xff]
    %v2647 = vld [vmem:[%s2641 + $0x28] sm:$0xff]
    %v2648 = vld [vmem:[%s2641 + $0x30] sm:$0xff]
    %v2649 = vld [vmem:[%s2641 + $0x38] sm:$0xff]
    %v2651 = vsel %vm1320, %v2639, 0
    %v2654 = vsel %vm1320, %v2640, 0
    %2656 = vmatprep.subr.mxu0 0.0
    %2657 = vmatpush1.msra.mxu0 %v2642
    %2658 = vmatprep.subr.mxu0 0.0
    %2659 = vmatpush1.msra.mxu0 %v2643
    %2660 = vmatprep.subr.mxu0 0.0
    %2661 = vmatpush1.msra.mxu0 %v2644
    %2662 = vmatprep.subr.mxu0 0.0
    %2663 = vmatpush1.msra.mxu0 %v2645
    %2664 = vmatprep.subr.mxu0 0.0
    %2665 = vmatpush1.msra.mxu0 %v2646
    %2666 = vmatprep.subr.mxu0 0.0
    %2667 = vmatpush1.msra.mxu0 %v2647
    %2668 = vmatprep.subr.mxu0 0.0
    %2669 = vmatpush1.msra.mxu0 %v2648
    %2670 = vmatprep.subr.mxu0 0.0
    %2671 = vmatpush1.msra.mxu0 %v2649
    %2672 = vmatprep.subr.mxu0 0.0
    %2673 = vmatpush1.msra.mxu0 0.0
    %2674 = vmatprep.subr.mxu0 0.0
    %2675 = vmatpush1.msra.mxu0 0.0
    %2676 = vmatprep.subr.mxu0 0.0
    %2677 = vmatpush1.msra.mxu0 0.0
    %2678 = vmatprep.subr.mxu0 0.0
    %2679 = vmatpush1.msra.mxu0 0.0
    %2680 = vmatprep.subr.mxu0 0.0
    %2681 = vmatpush1.msra.mxu0 0.0
    %2682 = vmatprep.subr.mxu0 0.0
    %2683 = vmatpush1.msra.mxu0 0.0
    %2684 = vmatprep.subr.mxu0 0.0
    %2685 = vmatpush1.msra.mxu0 0.0
    %2686 = vmatprep.subr.mxu0 0.0
    %2687 = vmatpush1.msra.mxu0 0.0
    %2688 = vmatprep.subr.mxu0 0.0
    %2689 = vmatpush1.msra.mxu0 0.0
    %2690 = vmatprep.subr.mxu0 0.0
    %2691 = vmatpush1.msra.mxu0 0.0
    %2692 = vmatprep.subr.mxu0 0.0
    %2693 = vmatpush1.msra.mxu0 0.0
    %2694 = vmatprep.subr.mxu0 0.0
    %2695 = vmatpush1.msra.mxu0 0.0
    %2696 = vmatprep.subr.mxu0 0.0
    %2697 = vmatpush1.msra.mxu0 0.0
    %2698 = vmatprep.subr.mxu0 0.0
    %2699 = vmatpush1.msra.mxu0 0.0
    %2700 = vmatprep.subr.mxu0 0.0
    %2701 = vmatpush1.msra.mxu0 0.0
    %2702 = vmatprep.subr.mxu0 0.0
    %2703 = vmatpush1.msra.mxu0 0.0
    %2704 = vmatprep.subr.mxu0 0.0
    %2705 = vmatpush1.msra.mxu0 0.0
    %2706 = vmatprep.subr.mxu0 0.0
    %2707 = vmatpush1.msra.mxu0 0.0
    %2708 = vmatprep.subr.mxu0 0.0
    %2709 = vmatpush1.msra.mxu0 0.0
    %2710 = vmatprep.subr.mxu0 0.0
    %2711 = vmatpush1.msra.mxu0 0.0
    %2712 = vmatprep.subr.mxu0 0.0
    %2713 = vmatpush1.msra.mxu0 0.0
    %2714 = vmatprep.subr.mxu0 0.0
    %2715 = vmatpush1.msra.mxu0 0.0
    %2716 = vmatprep.subr.mxu0 0.0
    %2717 = vmatpush1.msra.mxu0 0.0
    %2718 = vmatprep.subr.mxu0 0.0
    %2719 = vmatpush1.msra.mxu0 0.0
    %2720 = vmatprep.mubr.f32.mxu0 0.0
    %2721 = vmatmul.mubr.f32.gmra.mrb[0].mxu0 %v2651
    %v2722 = vpop.f32.mrb[0].mxu0
    %v2723 = vadd.f32 0.0, %v2722
    %v2724 = vpop.f32.mrb[0].mxu0
    %2725 = vmatprep.mubr.f32.mxu0 0.0
    %2726 = vmatmul.mubr.f32.gmra.mrb[0].mxu0 %v2654
    %v2727 = vpop.f32.mrb[0].mxu0
    %v2728 = vadd.f32 0.0, %v2727
    %v2729 = vpop.f32.mrb[0].mxu0
    %2730 = vdwg.mxu0
    %v2731 = vadd.f32 %v2495, %v2723
    %v2732 = vadd.f32 %v2496, %v2728
    %s2733 = scalar_lea.vmem %s9, 1
    %v2734 = vld [vmem:[%s2733] sm:$0x1]
    %v2736 = vlaneseq
    %v2737 = vshrl.u32 %v2736, 7
    %v2738 = vsub.s32 0, %v2737
    %v2739 = vrot.slane %v2734, %v2738
    %v2741 = vadd.f32 %v2731, %v2739
    %v2742 = vadd.f32 %v2732, %v2739
    %s2743 = sld [smem:[#allocation8 + $0x8]]
    %s2744 = sld [smem:[#allocation8 + $0x9]]
    %v2745 = vsel %vm86, %v2741, 0.0
    %2746 = vadd.xlane.f32.xlu0 %v2745
    %v2747 = vpop.xlane.xlu0 %2746
    %v2748 = vsel %vm86, %v2742, 0.0
    %2749 = vadd.xlane.f32.xlu0 %v2748
    %v2750 = vpop.xlane.xlu0 %2749
    %v2751 = vmul.f32 %v2747, %v93
    %v2752 = vmul.f32 %v2750, %v93
    %v2753 = vsub.f32 %v2741, %v2751
    %v2754 = vsub.f32 %v2742, %v2752
    %v2755 = vmul.f32 %v2753, %v2753
    %v2756 = vmul.f32 %v2754, %v2754
    %v2757 = vsel %vm86, %v2755, 0.0
    %2758 = vadd.xlane.f32.xlu0 %v2757
    %v2759 = vpop.xlane.xlu0 %2758
    %v2760 = vsel %vm86, %v2756, 0.0
    %2761 = vadd.xlane.f32.xlu0 %v2760
    %v2762 = vpop.xlane.xlu0 %2761
    %v2763 = vmul.f32 %v2759, %v106
    %v2764 = vmul.f32 %v2762, %v106
    %v2765 = vrsqrt.pop %v2763
    %v2766 = vmul.f32 %v2763, %v2765
    %vm2767 = vcmp.eq.f32.partialorder %v2763, inf
    %v2768 = vsel %vm2767, %v2763, %v2766
    %vm2769 = vcmp.eq.f32.partialorder %v2763, 0.0
    %v2770 = vand.u32 %v2763, 2147483648
    %v2771 = vsel %vm2769, %v2770, %v2768
    %v2772 = vrsqrt.pop %v2764
    %v2773 = vmul.f32 %v2764, %v2772
    %vm2774 = vcmp.eq.f32.partialorder %v2764, inf
    %v2775 = vsel %vm2774, %v2764, %v2773
    %vm2776 = vcmp.eq.f32.partialorder %v2764, 0.0
    %v2777 = vand.u32 %v2764, 2147483648
    %v2778 = vsel %vm2776, %v2777, %v2775
    %v2779 = vadd.f32 %v2771, 1e-06
    %v2780 = vadd.f32 %v2778, 1e-06
    %v2781 = vrcp.pop %v2779
    %v2782 = vrcp.pop %v2780
    %v2783 = vstv %s2743
    %v2784 = vmul.f32 %v2783, %v2753
    %v2785 = vmul.f32 %v2783, %v2754
    %v2786 = vmul.f32 %v2784, %v2781
    %v2787 = vmul.f32 %v2785, %v2782
    %v2788 = vstv %s2744
    %v2789 = vadd.f32 %v2786, %v2788
    %v2790 = vadd.f32 %v2787, %v2788
    %2791 = vst.msk [vmem:[#allocation9] sm:$0xff] %vm86, %v2789
    %2792 = vst.msk [vmem:[#allocation9 + $0x8] sm:$0xff] %vm86, %v2790
    // Predicated region
    $region58: #{tpu_custom_call.1} parent=1 // pred_check
      _
    $region59: #{tpu_custom_call.1} parent=1 // pred_check_branch
      %2794 = sbr.rel (0) target = $region61
    $region60: #{tpu_custom_call.1} parent=1 // pred_region
      %s2796 = ssub.s32 256, 256
      %2797 = vsyncadd [#allocation4], %s2796
      %s2798 = sshll.u32 [#allocation9], 4
      %s2799 = int_to_ptr.vmem [resolvable:$true] %s2798
      %2804 = dma.vmem_to_hbm [thread:$0]  %s2799, 256, %s11, [#allocation4], 128, 128, 8
    $region61: #{tpu_custom_call.1} parent=1 // pred_fallthru
      _
    // Predicated region
    $region62: #{tpu_custom_call.1} parent=1 // pred_check
      _
    $region63: #{tpu_custom_call.1} parent=1 // pred_check_branch
      %2806 = sbr.rel (0) target = $region65
    $region64: #{tpu_custom_call.1} parent=1 // pred_region
      %2807 = dma.done [#allocation4], 256
    $region65: #{tpu_custom_call.1} parent=1 // pred_fallthru
      _
    %2808 = vsyncpa [#allocation3], 1
    %2809 = vsyncpa [#allocation7], 1
    %2810 = vsyncpa [#allocation4], 1
    %2811 = vsyncpa [#allocation5], 1

</llo_original>
